<compile_context>
chip_gen: v5e
topology: v5e:2x2
jax: 0.10.0
libtpu: 0.0.40
codegen_flags: <defaults>
</compile_context>

<pallas_src>
import functools
import math

import jax
import jax.numpy as jnp
from jax import lax
from jax.experimental import pallas as pl
from jax.experimental.pallas import tpu as pltpu


def _round_up(n, m):
    return ((n + m - 1) // m) * m


_TAPS = tuple((dy, dx) for dy in range(3) for dx in range(3))


# ------------------------------- fused kernel --------------------------------


def _conv3x3_accumulate(x, w_ref, m_ref, width):
    """3x3 zero-padded conv on a (Cin, P) slab flattened row-major with row
    stride `width`.  Returns the (Cout, P) f32 accumulation of 9 bf16 dots on
    rolled + masked values (no taps scratch, no partial-tile stores)."""
    p = x.shape[1]
    acc = None
    for t, (dy, dx) in enumerate(_TAPS):
        off = (dy - 1) * width + (dx - 1)
        shifted = x if off == 0 else pltpu.roll(x, shift=(-off) % p, axis=1)
        tap = (shifted * m_ref[pl.ds(t, 1), :]).astype(jnp.bfloat16)
        d = jnp.dot(w_ref[t], tap, preferred_element_type=jnp.float32)
        acc = d if acc is None else acc + d
    return acc


def _dpt_kernel(x_ref, w1_ref, b1_ref, m1_ref, rx_ref,
                w2a_ref, b2a_ref, m2_ref, w2b_ref, b2b_ref, o_ref,
                *, bblk, w_in, w_out, p2, h_taps):
    """Per-grid-step body.  Activations are (channels, flat_pixels) slabs with
    the flattened spatial axis in the lane dim."""
    # Hoisted grid-invariant loads.
    rx = rx_ref[...]            # (W, Wout)   bf16 width-interp matrix
    b1 = b1_ref[...]            # (Cmid, 1)   f32
    b2a = b2a_ref[...]          # (Ch, 1)     f32
    w2b = w2b_ref[...]          # (Coutp, Ch) bf16
    b2b = b2b_ref[...]          # (Coutp, 1)  f32

    cmid = b1.shape[0]
    p2p = o_ref.shape[2]

    for bb in range(bblk):
        x = x_ref[bb]                                        # (Cin, P1p) f32

        # conv1: 3x3, pad=1  ->  (Cmid, P1p) f32
        h1 = _conv3x3_accumulate(x, w1_ref, m1_ref, w_in) + b1

        # Separable bilinear resize (align_corners=True):
        #  - height: static 2-tap FMA on W-wide lane slices of h1 (f32, VPU)
        #  - width : (Cmid, W) @ (W, Wout) bf16 matmul per output row (MXU)
        pieces = []
        for lo, hi, frac in h_taps:
            row = h1[:, lo * w_in:(lo + 1) * w_in]           # (Cmid, W)
            if hi != lo and frac != 0.0:
                row = (1.0 - frac) * row + frac * h1[:, hi * w_in:(hi + 1) * w_in]
            pieces.append(jnp.dot(row.astype(jnp.bfloat16), rx,
                                  preferred_element_type=jnp.float32))
        if p2p > p2:
            pieces.append(jnp.zeros((cmid, p2p - p2), jnp.float32))
        h2 = jnp.concatenate(pieces, axis=1)                 # (Cmid, P2p) f32

        # conv2a: 3x3, pad=1 -> ReLU -> bf16 operand for the 1x1 conv
        h3 = _conv3x3_accumulate(h2, w2a_ref, m2_ref, w_out) + b2a
        h3 = jnp.maximum(h3, 0.0).astype(jnp.bfloat16)       # (Ch, P2p)

        # conv2b: 1x1; Cout padded to 8 rows -> full-sublane lane-dense store.
        o_ref[bb] = (jnp.dot(w2b, h3, preferred_element_type=jnp.float32)
                     + b2b)


def _vmem_limit_bytes(bblk, cin, cmid, ch, coutp, p1p, p2p, w_in, w_out):
    """Generous explicit VMEM budget from the actual block / live-value sizes."""
    f32, bf16 = 4, 2
    blocks = (bblk * cin * p1p * f32 + 9 * cmid * cin * bf16 + cmid * f32
              + 9 * p1p * f32 + w_in * w_out * bf16 + 9 * ch * cmid * bf16
              + ch * f32 + 9 * p2p * f32 + coutp * ch * bf16 + coutp * f32
              + bblk * coutp * p2p * f32)
    live = bblk * (2 * cin * p1p + 2 * cmid * p1p + 3 * cmid * p2p
                   + 2 * ch * p2p + coutp * p2p) * f32
    est = 2 * blocks + live
    return int(min(64 * 1024 * 1024, max(32 * 1024 * 1024, 2 * est)))


def dpt_fused_pallas(x_flat, w1, b1, m1, rx, w2a, b2a, m2, w2b, b2b,
                     *, h_in, w_in, h_out, w_out, bblk):
    B, Cin, P1p = x_flat.shape
    Cmid = w1.shape[1]
    Ch = w2a.shape[1]
    Coutp = w2b.shape[0]
    P2 = h_out * w_out
    P2p = m2.shape[1]

    h_taps = tuple(_interp_taps(h_out, h_in))
    kernel = functools.partial(_dpt_kernel, bblk=bblk, w_in=w_in, w_out=w_out,
                               p2=P2, h_taps=h_taps)

    grid_spec = pltpu.PrefetchScalarGridSpec(
        num_scalar_prefetch=0,
        grid=(B // bblk,),
        in_specs=[
            pl.BlockSpec((bblk, Cin, P1p), lambda b: (b, 0, 0)),
            pl.BlockSpec((9, Cmid, Cin), lambda b: (0, 0, 0)),
            pl.BlockSpec((Cmid, 1), lambda b: (0, 0)),
            pl.BlockSpec((9, P1p), lambda b: (0, 0)),
            pl.BlockSpec((w_in, w_out), lambda b: (0, 0)),
            pl.BlockSpec((9, Ch, Cmid), lambda b: (0, 0, 0)),
            pl.BlockSpec((Ch, 1), lambda b: (0, 0)),
            pl.BlockSpec((9, P2p), lambda b: (0, 0)),
            pl.BlockSpec((Coutp, Ch), lambda b: (0, 0)),
            pl.BlockSpec((Coutp, 1), lambda b: (0, 0)),
        ],
        out_specs=pl.BlockSpec((bblk, Coutp, P2p), lambda b: (b, 0, 0)),
    )
    return pl.pallas_call(
        kernel,
        out_shape=jax.ShapeDtypeStruct((B, Coutp, P2p), jnp.float32),
        grid_spec=grid_spec,
        compiler_params=pltpu.CompilerParams(
            dimension_semantics=("parallel",),
            vmem_limit_bytes=_vmem_limit_bytes(
                bblk, Cin, Cmid, Ch, Coutp, P1p, P2p, w_in, w_out)),
    )(x_flat, w1, b1, m1, rx, w2a, b2a, m2, w2b, b2b)


# ------------------------------- glue helpers --------------------------------


def _interp_taps(out_size, in_size):
    """Static (lo, hi, frac) taps reproducing F.interpolate(mode='bilinear',
    align_corners=True) along one axis."""
    if in_size <= 1 or out_size <= 1:
        return [(0, 0, 0.0) for _ in range(out_size)]
    scale = (in_size - 1) / (out_size - 1)
    taps = []
    for o in range(out_size):
        src = o * scale
        lo = max(0, min(int(math.floor(src)), in_size - 1))
        hi = min(lo + 1, in_size - 1)
        frac = max(0.0, min(float(src - lo), 1.0))
        taps.append((lo, hi, frac))
    return taps


def interp_matrix(out_size, in_size):
    """Row matrix reproducing F.interpolate(mode='bilinear',
    align_corners=True) along one axis: y = M @ x."""
    if in_size == 1 or out_size == 1:
        m = jnp.zeros((out_size, in_size), jnp.float32)
        return m.at[:, 0].set(1.0)
    scale = (in_size - 1) / (out_size - 1)
    src = jnp.arange(out_size, dtype=jnp.float32) * scale
    lo = jnp.clip(jnp.floor(src).astype(jnp.int32), 0, in_size - 1)
    hi = jnp.clip(lo + 1, 0, in_size - 1)
    frac = src - lo.astype(jnp.float32)
    m = jnp.zeros((out_size, in_size), jnp.float32)
    rows = jnp.arange(out_size)
    m = m.at[rows, lo].add(1.0 - frac)
    m = m.at[rows, hi].add(frac)
    return m


def conv_masks(height, width, padded_pixels):
    """(9, padded_pixels) 0/1 masks for the 3x3 taps of a (height, width)
    image flattened row-major and zero-padded to padded_pixels."""
    idx = jnp.arange(padded_pixels)
    r = idx // width
    c = idx % width
    inside = idx < height * width
    masks = []
    for dy in range(3):
        for dx in range(3):
            ok = inside
            if dy == 0:
                ok = ok & (r >= 1)
            elif dy == 2:
                ok = ok & (r <= height - 2)
            if dx == 0:
                ok = ok & (c >= 1)
            elif dx == 2:
                ok = ok & (c <= width - 2)
            masks.append(ok)
    return jnp.stack(masks).astype(jnp.float32)


def conv3x3_to_taps(w_oihw):
    """(Cout, Cin, 3, 3) -> (9, Cout, Cin) with tap index t = dy*3 + dx."""
    cout, cin = w_oihw.shape[0], w_oihw.shape[1]
    return jnp.transpose(w_oihw, (2, 3, 0, 1)).reshape(9, cout, cin)


# ------------------------------- forward pass ---------------------------------


def dpt_regression_processor_forward(x_nchw, target_output_shape, params):
    """Equivalent of DPTRegressionProcessor.forward
    (checkpoint_gradient=False, nonlinearity='relu'); I/O is NCHW."""
    B, Cin, H, W = x_nchw.shape
    Hout, Wout = target_output_shape
    P1, P2 = H * W, Hout * Wout
    P1p, P2p = _round_up(P1, 128), _round_up(P2, 128)
    Cout = params["cout"]

    # NCHW -> (B, Cin, P1p): pure reshape + zero pad, no transpose.
    x_flat = x_nchw.reshape(B, Cin, P1)
    if P1p != P1:
        x_flat = jnp.pad(x_flat, ((0, 0), (0, 0), (0, P1p - P1)))

    m1 = conv_masks(H, W, P1p)
    m2 = conv_masks(Hout, Wout, P2p)
    rx = interp_matrix(Wout, W).T.astype(jnp.bfloat16)        # (W, Wout)

    # Batch blocking: amortize per-grid-step overhead on single-TC chips while
    # keeping the grid length even for v7x's two TensorCores.
    bblk = 2 if (B % 4 == 0) else 1

    out_flat = dpt_fused_pallas(
        x_flat, params["w1_k"], params["b1_k"], m1, rx,
        params["w2a_k"], params["b2a_k"], m2,
        params["w2b_k"], params["b2b_k"],
        h_in=H, w_in=W, h_out=Hout, w_out=Wout, bblk=bblk)    # (B, Coutp, P2p)
    return out_flat[:, :Cout, :P2].reshape(B, Cout, Hout, Wout)


# ----------------------------- pure-JAX reference -----------------------------


def reference_forward(x_nchw, target_output_shape, p):
    def conv(x, w, b, pad):
        y = lax.conv_general_dilated(
            x, w, window_strides=(1, 1), padding=((pad, pad), (pad, pad)),
            dimension_numbers=("NCHW", "OIHW", "NCHW"),
            precision=lax.Precision.HIGHEST)
        return y + b[None, :, None, None]

    H, W = x_nchw.shape[2], x_nchw.shape[3]
    Hout, Wout = target_output_shape
    x = conv(x_nchw, p["w1"], p["b1"], 1)
    ry = interp_matrix(Hout, H)
    rx = interp_matrix(Wout, W)
    x = jnp.einsum("oH,bcHW->bcoW", ry, x, precision=lax.Precision.HIGHEST)
    x = jnp.einsum("pW,bcoW->bcop", rx, x, precision=lax.Precision.HIGHEST)
    x = conv(x, p["w2a"], p["b2a"], 1)
    x = jnp.maximum(x, 0.0)
    x = conv(x, p["w2b"], p["b2b"], 0)
    return x


# ------------------------------------ main ------------------------------------


if __name__ == "__main__":
    # input_feature_dim=8 -> hidden_dims=[4, 4], output_dim=2
    B, Cin, H, W = 2, 8, 16, 16
    Cmid, Ch, Cout = Cin // 2, Cin // 2, 2
    target_output_shape = (20, 24)

    key = jax.random.PRNGKey(0)
    ks = jax.random.split(key, 8)
    x = jax.random.normal(ks[0], (B, Cin, H, W), jnp.float32)

    # Deterministic synthetic parameters (PyTorch OIHW shapes).
    w1 = 0.1 * jax.random.normal(ks[1], (Cmid, Cin, 3, 3), jnp.float32)
    b1 = 0.1 * jax.random.normal(ks[2], (Cmid,), jnp.float32)
    w2a = 0.1 * jax.random.normal(ks[3], (Ch, Cmid, 3, 3), jnp.float32)
    b2a = 0.1 * jax.random.normal(ks[4], (Ch,), jnp.float32)
    w2b = 0.1 * jax.random.normal(ks[5], (Cout, Ch, 1, 1), jnp.float32)
    b2b = 0.1 * jax.random.normal(ks[6], (Cout,), jnp.float32)

    # Kernel-layout params: bf16 MXU operands, f32 biases, Cout padded to 8.
    Coutp = max(8, _round_up(Cout, 8))
    w2b_mat = w2b[:, :, 0, 0]
    w2b_pad = (jnp.zeros((Coutp, Ch), jnp.float32)
               .at[:Cout].set(w2b_mat).astype(jnp.bfloat16))
    b2b_pad = jnp.zeros((Coutp, 1), jnp.float32).at[:Cout, 0].set(b2b)

    params = {
        "w1_k": conv3x3_to_taps(w1).astype(jnp.bfloat16),
        "b1_k": b1.reshape(Cmid, 1),
        "w2a_k": conv3x3_to_taps(w2a).astype(jnp.bfloat16),
        "b2a_k": b2a.reshape(Ch, 1),
        "w2b_k": w2b_pad,
        "b2b_k": b2b_pad,
        "cout": Cout,
        # reference-layout params
        "w1": w1, "b1": b1, "w2a": w2a, "b2a": b2a, "w2b": w2b, "b2b": b2b,
    }

    fwd = jax.jit(functools.partial(dpt_regression_processor_forward,
                                    target_output_shape=target_output_shape,
                                    params=params))
    out = jax.block_until_ready(fwd(x))

    ref = jax.block_until_ready(
        reference_forward(x, target_output_shape, params))

    assert out.shape == (B, Cout, *target_output_shape), out.shape
    assert bool(jnp.all(jnp.isfinite(out)))
    if not bool(jnp.allclose(out, ref, rtol=1e-2, atol=1e-2)):
        max_err = float(jnp.max(jnp.abs(out - ref)))
        raise AssertionError(
            f"Pallas output mismatch vs JAX reference (max abs err {max_err:.2e})")

    print("KERNEL_OK")
</pallas_src>

<mosaic_0001>
module attributes {stable_mosaic.version = 11 : i64} {
  func.func @_dpt_kernel(%arg0: i32, %arg1: memref<1x8x256xf32, #tpu.memory_space<vmem>>, %arg2: memref<9x4x8xbf16, #tpu.memory_space<vmem>>, %arg3: memref<4x1xf32, #tpu.memory_space<vmem>>, %arg4: memref<9x256xf32, #tpu.memory_space<vmem>>, %arg5: memref<16x24xbf16, #tpu.memory_space<vmem>>, %arg6: memref<9x4x4xbf16, #tpu.memory_space<vmem>>, %arg7: memref<4x1xf32, #tpu.memory_space<vmem>>, %arg8: memref<9x512xf32, #tpu.memory_space<vmem>>, %arg9: memref<8x4xbf16, #tpu.memory_space<vmem>>, %arg10: memref<8x1xf32, #tpu.memory_space<vmem>>, %arg11: memref<1x8x512xf32, #tpu.memory_space<vmem>>) attributes {dimension_semantics = [#tpu.dimension_semantics<parallel>], iteration_bounds = array<i64: 2>, scalar_prefetch = 0 : i64, scratch_operands = 0 : i64, tpu.core_type = #tpu.core_type<tc>, window_params = [{transform_indices = @transform_0, window_bounds = array<i64: 1, 8, 256>}, {pipeline_mode = #tpu.pipeline_mode<synchronous>, transform_indices = @transform_1, window_bounds = array<i64: 9, 4, 8>}, {pipeline_mode = #tpu.pipeline_mode<synchronous>, transform_indices = @transform_2, window_bounds = array<i64: 4, 1>}, {pipeline_mode = #tpu.pipeline_mode<synchronous>, transform_indices = @transform_3, window_bounds = array<i64: 9, 256>}, {pipeline_mode = #tpu.pipeline_mode<synchronous>, transform_indices = @transform_4, window_bounds = array<i64: 16, 24>}, {pipeline_mode = #tpu.pipeline_mode<synchronous>, transform_indices = @transform_5, window_bounds = array<i64: 9, 4, 4>}, {pipeline_mode = #tpu.pipeline_mode<synchronous>, transform_indices = @transform_6, window_bounds = array<i64: 4, 1>}, {pipeline_mode = #tpu.pipeline_mode<synchronous>, transform_indices = @transform_7, window_bounds = array<i64: 9, 512>}, {pipeline_mode = #tpu.pipeline_mode<synchronous>, transform_indices = @transform_8, window_bounds = array<i64: 8, 4>}, {pipeline_mode = #tpu.pipeline_mode<synchronous>, transform_indices = @transform_9, window_bounds = array<i64: 8, 1>}, {transform_indices = @transform_10, window_bounds = array<i64: 1, 8, 512>}]} {
    %c0 = arith.constant 0 : index
    %c0_0 = arith.constant 0 : index
    %0 = vector.load %arg5[%c0, %c0_0] : memref<16x24xbf16, #tpu.memory_space<vmem>>, vector<16x24xbf16>
    %c0_1 = arith.constant 0 : index
    %c0_2 = arith.constant 0 : index
    %1 = vector.load %arg3[%c0_1, %c0_2] : memref<4x1xf32, #tpu.memory_space<vmem>>, vector<4x1xf32>
    %c0_3 = arith.constant 0 : index
    %c0_4 = arith.constant 0 : index
    %2 = vector.load %arg7[%c0_3, %c0_4] : memref<4x1xf32, #tpu.memory_space<vmem>>, vector<4x1xf32>
    %c0_5 = arith.constant 0 : index
    %c0_6 = arith.constant 0 : index
    %3 = vector.load %arg9[%c0_5, %c0_6] : memref<8x4xbf16, #tpu.memory_space<vmem>>, vector<8x4xbf16>
    %c0_7 = arith.constant 0 : index
    %c0_8 = arith.constant 0 : index
    %4 = vector.load %arg10[%c0_7, %c0_8] : memref<8x1xf32, #tpu.memory_space<vmem>>, vector<8x1xf32>
    %c0_9 = arith.constant 0 : index
    %c0_10 = arith.constant 0 : index
    %c0_11 = arith.constant 0 : index
    %5 = vector.load %arg1[%c0_9, %c0_10, %c0_11] : memref<1x8x256xf32, #tpu.memory_space<vmem>>, vector<1x8x256xf32>
    %6 = vector.shape_cast %5 : vector<1x8x256xf32> to vector<8x256xf32>
    %c17_i32 = arith.constant 17 : i32
    %7 = tpu.dynamic_rotate %6 by %c17_i32 dim 1 : vector<8x256xf32>, i32 -> vector<8x256xf32>
    %c0_12 = arith.constant 0 : index
    %c0_13 = arith.constant 0 : index
    %8 = vector.load %arg4[%c0_12, %c0_13] : memref<9x256xf32, #tpu.memory_space<vmem>>, vector<1x256xf32>
    %9 = vector.broadcast %8 : vector<1x256xf32> to vector<8x256xf32>
    %10 = arith.mulf %7, %9 : vector<8x256xf32>
    %11 = arith.truncf %10 : vector<8x256xf32> to vector<8x256xbf16>
    %c0_14 = arith.constant 0 : index
    %c0_15 = arith.constant 0 : index
    %c0_16 = arith.constant 0 : index
    %12 = vector.load %arg2[%c0_14, %c0_15, %c0_16] : memref<9x4x8xbf16, #tpu.memory_space<vmem>>, vector<1x4x8xbf16>
    %13 = vector.shape_cast %12 : vector<1x4x8xbf16> to vector<4x8xbf16>
    %cst = arith.constant dense<0.000000e+00> : vector<4x256xf32>
    %14 = tpu.matmul %13, %11, %cst {dimension_numbers = #tpu.dot_dimension_numbers<[1], [0], [0], [1], [0, 0, 1, 1], [], []>} : vector<4x8xbf16>, vector<8x256xbf16>, vector<4x256xf32> -> vector<4x256xf32>
    %c16_i32 = arith.constant 16 : i32
    %15 = tpu.dynamic_rotate %6 by %c16_i32 dim 1 : vector<8x256xf32>, i32 -> vector<8x256xf32>
    %c1 = arith.constant 1 : index
    %c0_17 = arith.constant 0 : index
    %16 = vector.load %arg4[%c1, %c0_17] : memref<9x256xf32, #tpu.memory_space<vmem>>, vector<1x256xf32>
    %17 = vector.broadcast %16 : vector<1x256xf32> to vector<8x256xf32>
    %18 = arith.mulf %15, %17 : vector<8x256xf32>
    %19 = arith.truncf %18 : vector<8x256xf32> to vector<8x256xbf16>
    %c1_18 = arith.constant 1 : index
    %c0_19 = arith.constant 0 : index
    %c0_20 = arith.constant 0 : index
    %20 = vector.load %arg2[%c1_18, %c0_19, %c0_20] : memref<9x4x8xbf16, #tpu.memory_space<vmem>>, vector<1x4x8xbf16>
    %21 = vector.shape_cast %20 : vector<1x4x8xbf16> to vector<4x8xbf16>
    %cst_21 = arith.constant dense<0.000000e+00> : vector<4x256xf32>
    %22 = tpu.matmul %21, %19, %cst_21 {dimension_numbers = #tpu.dot_dimension_numbers<[1], [0], [0], [1], [0, 0, 1, 1], [], []>} : vector<4x8xbf16>, vector<8x256xbf16>, vector<4x256xf32> -> vector<4x256xf32>
    %23 = arith.addf %14, %22 : vector<4x256xf32>
    %c15_i32 = arith.constant 15 : i32
    %24 = tpu.dynamic_rotate %6 by %c15_i32 dim 1 : vector<8x256xf32>, i32 -> vector<8x256xf32>
    %c2 = arith.constant 2 : index
    %c0_22 = arith.constant 0 : index
    %25 = vector.load %arg4[%c2, %c0_22] : memref<9x256xf32, #tpu.memory_space<vmem>>, vector<1x256xf32>
    %26 = vector.broadcast %25 : vector<1x256xf32> to vector<8x256xf32>
    %27 = arith.mulf %24, %26 : vector<8x256xf32>
    %28 = arith.truncf %27 : vector<8x256xf32> to vector<8x256xbf16>
    %c2_23 = arith.constant 2 : index
    %c0_24 = arith.constant 0 : index
    %c0_25 = arith.constant 0 : index
    %29 = vector.load %arg2[%c2_23, %c0_24, %c0_25] : memref<9x4x8xbf16, #tpu.memory_space<vmem>>, vector<1x4x8xbf16>
    %30 = vector.shape_cast %29 : vector<1x4x8xbf16> to vector<4x8xbf16>
    %cst_26 = arith.constant dense<0.000000e+00> : vector<4x256xf32>
    %31 = tpu.matmul %30, %28, %cst_26 {dimension_numbers = #tpu.dot_dimension_numbers<[1], [0], [0], [1], [0, 0, 1, 1], [], []>} : vector<4x8xbf16>, vector<8x256xbf16>, vector<4x256xf32> -> vector<4x256xf32>
    %32 = arith.addf %23, %31 : vector<4x256xf32>
    %c1_i32 = arith.constant 1 : i32
    %33 = tpu.dynamic_rotate %6 by %c1_i32 dim 1 : vector<8x256xf32>, i32 -> vector<8x256xf32>
    %c3 = arith.constant 3 : index
    %c0_27 = arith.constant 0 : index
    %34 = vector.load %arg4[%c3, %c0_27] : memref<9x256xf32, #tpu.memory_space<vmem>>, vector<1x256xf32>
    %35 = vector.broadcast %34 : vector<1x256xf32> to vector<8x256xf32>
    %36 = arith.mulf %33, %35 : vector<8x256xf32>
    %37 = arith.truncf %36 : vector<8x256xf32> to vector<8x256xbf16>
    %c3_28 = arith.constant 3 : index
    %c0_29 = arith.constant 0 : index
    %c0_30 = arith.constant 0 : index
    %38 = vector.load %arg2[%c3_28, %c0_29, %c0_30] : memref<9x4x8xbf16, #tpu.memory_space<vmem>>, vector<1x4x8xbf16>
    %39 = vector.shape_cast %38 : vector<1x4x8xbf16> to vector<4x8xbf16>
    %cst_31 = arith.constant dense<0.000000e+00> : vector<4x256xf32>
    %40 = tpu.matmul %39, %37, %cst_31 {dimension_numbers = #tpu.dot_dimension_numbers<[1], [0], [0], [1], [0, 0, 1, 1], [], []>} : vector<4x8xbf16>, vector<8x256xbf16>, vector<4x256xf32> -> vector<4x256xf32>
    %41 = arith.addf %32, %40 : vector<4x256xf32>
    %c4 = arith.constant 4 : index
    %c0_32 = arith.constant 0 : index
    %42 = vector.load %arg4[%c4, %c0_32] : memref<9x256xf32, #tpu.memory_space<vmem>>, vector<1x256xf32>
    %43 = vector.broadcast %42 : vector<1x256xf32> to vector<8x256xf32>
    %44 = arith.mulf %6, %43 : vector<8x256xf32>
    %45 = arith.truncf %44 : vector<8x256xf32> to vector<8x256xbf16>
    %c4_33 = arith.constant 4 : index
    %c0_34 = arith.constant 0 : index
    %c0_35 = arith.constant 0 : index
    %46 = vector.load %arg2[%c4_33, %c0_34, %c0_35] : memref<9x4x8xbf16, #tpu.memory_space<vmem>>, vector<1x4x8xbf16>
    %47 = vector.shape_cast %46 : vector<1x4x8xbf16> to vector<4x8xbf16>
    %cst_36 = arith.constant dense<0.000000e+00> : vector<4x256xf32>
    %48 = tpu.matmul %47, %45, %cst_36 {dimension_numbers = #tpu.dot_dimension_numbers<[1], [0], [0], [1], [0, 0, 1, 1], [], []>} : vector<4x8xbf16>, vector<8x256xbf16>, vector<4x256xf32> -> vector<4x256xf32>
    %49 = arith.addf %41, %48 : vector<4x256xf32>
    %c255_i32 = arith.constant 255 : i32
    %50 = tpu.dynamic_rotate %6 by %c255_i32 dim 1 : vector<8x256xf32>, i32 -> vector<8x256xf32>
    %c5 = arith.constant 5 : index
    %c0_37 = arith.constant 0 : index
    %51 = vector.load %arg4[%c5, %c0_37] : memref<9x256xf32, #tpu.memory_space<vmem>>, vector<1x256xf32>
    %52 = vector.broadcast %51 : vector<1x256xf32> to vector<8x256xf32>
    %53 = arith.mulf %50, %52 : vector<8x256xf32>
    %54 = arith.truncf %53 : vector<8x256xf32> to vector<8x256xbf16>
    %c5_38 = arith.constant 5 : index
    %c0_39 = arith.constant 0 : index
    %c0_40 = arith.constant 0 : index
    %55 = vector.load %arg2[%c5_38, %c0_39, %c0_40] : memref<9x4x8xbf16, #tpu.memory_space<vmem>>, vector<1x4x8xbf16>
    %56 = vector.shape_cast %55 : vector<1x4x8xbf16> to vector<4x8xbf16>
    %cst_41 = arith.constant dense<0.000000e+00> : vector<4x256xf32>
    %57 = tpu.matmul %56, %54, %cst_41 {dimension_numbers = #tpu.dot_dimension_numbers<[1], [0], [0], [1], [0, 0, 1, 1], [], []>} : vector<4x8xbf16>, vector<8x256xbf16>, vector<4x256xf32> -> vector<4x256xf32>
    %58 = arith.addf %49, %57 : vector<4x256xf32>
    %c241_i32 = arith.constant 241 : i32
    %59 = tpu.dynamic_rotate %6 by %c241_i32 dim 1 : vector<8x256xf32>, i32 -> vector<8x256xf32>
    %c6 = arith.constant 6 : index
    %c0_42 = arith.constant 0 : index
    %60 = vector.load %arg4[%c6, %c0_42] : memref<9x256xf32, #tpu.memory_space<vmem>>, vector<1x256xf32>
    %61 = vector.broadcast %60 : vector<1x256xf32> to vector<8x256xf32>
    %62 = arith.mulf %59, %61 : vector<8x256xf32>
    %63 = arith.truncf %62 : vector<8x256xf32> to vector<8x256xbf16>
    %c6_43 = arith.constant 6 : index
    %c0_44 = arith.constant 0 : index
    %c0_45 = arith.constant 0 : index
    %64 = vector.load %arg2[%c6_43, %c0_44, %c0_45] : memref<9x4x8xbf16, #tpu.memory_space<vmem>>, vector<1x4x8xbf16>
    %65 = vector.shape_cast %64 : vector<1x4x8xbf16> to vector<4x8xbf16>
    %cst_46 = arith.constant dense<0.000000e+00> : vector<4x256xf32>
    %66 = tpu.matmul %65, %63, %cst_46 {dimension_numbers = #tpu.dot_dimension_numbers<[1], [0], [0], [1], [0, 0, 1, 1], [], []>} : vector<4x8xbf16>, vector<8x256xbf16>, vector<4x256xf32> -> vector<4x256xf32>
    %67 = arith.addf %58, %66 : vector<4x256xf32>
    %c240_i32 = arith.constant 240 : i32
    %68 = tpu.dynamic_rotate %6 by %c240_i32 dim 1 : vector<8x256xf32>, i32 -> vector<8x256xf32>
    %c7 = arith.constant 7 : index
    %c0_47 = arith.constant 0 : index
    %69 = vector.load %arg4[%c7, %c0_47] : memref<9x256xf32, #tpu.memory_space<vmem>>, vector<1x256xf32>
    %70 = vector.broadcast %69 : vector<1x256xf32> to vector<8x256xf32>
    %71 = arith.mulf %68, %70 : vector<8x256xf32>
    %72 = arith.truncf %71 : vector<8x256xf32> to vector<8x256xbf16>
    %c7_48 = arith.constant 7 : index
    %c0_49 = arith.constant 0 : index
    %c0_50 = arith.constant 0 : index
    %73 = vector.load %arg2[%c7_48, %c0_49, %c0_50] : memref<9x4x8xbf16, #tpu.memory_space<vmem>>, vector<1x4x8xbf16>
    %74 = vector.shape_cast %73 : vector<1x4x8xbf16> to vector<4x8xbf16>
    %cst_51 = arith.constant dense<0.000000e+00> : vector<4x256xf32>
    %75 = tpu.matmul %74, %72, %cst_51 {dimension_numbers = #tpu.dot_dimension_numbers<[1], [0], [0], [1], [0, 0, 1, 1], [], []>} : vector<4x8xbf16>, vector<8x256xbf16>, vector<4x256xf32> -> vector<4x256xf32>
    %76 = arith.addf %67, %75 : vector<4x256xf32>
    %c239_i32 = arith.constant 239 : i32
    %77 = tpu.dynamic_rotate %6 by %c239_i32 dim 1 : vector<8x256xf32>, i32 -> vector<8x256xf32>
    %c8 = arith.constant 8 : index
    %c0_52 = arith.constant 0 : index
    %78 = vector.load %arg4[%c8, %c0_52] : memref<9x256xf32, #tpu.memory_space<vmem>>, vector<1x256xf32>
    %79 = vector.broadcast %78 : vector<1x256xf32> to vector<8x256xf32>
    %80 = arith.mulf %77, %79 : vector<8x256xf32>
    %81 = arith.truncf %80 : vector<8x256xf32> to vector<8x256xbf16>
    %c8_53 = arith.constant 8 : index
    %c0_54 = arith.constant 0 : index
    %c0_55 = arith.constant 0 : index
    %82 = vector.load %arg2[%c8_53, %c0_54, %c0_55] : memref<9x4x8xbf16, #tpu.memory_space<vmem>>, vector<1x4x8xbf16>
    %83 = vector.shape_cast %82 : vector<1x4x8xbf16> to vector<4x8xbf16>
    %cst_56 = arith.constant dense<0.000000e+00> : vector<4x256xf32>
    %84 = tpu.matmul %83, %81, %cst_56 {dimension_numbers = #tpu.dot_dimension_numbers<[1], [0], [0], [1], [0, 0, 1, 1], [], []>} : vector<4x8xbf16>, vector<8x256xbf16>, vector<4x256xf32> -> vector<4x256xf32>
    %85 = arith.addf %76, %84 : vector<4x256xf32>
    %86 = vector.broadcast %1 : vector<4x1xf32> to vector<4x256xf32>
    %87 = arith.addf %85, %86 : vector<4x256xf32>
    %88 = vector.extract_strided_slice %87 {offsets = [0, 0], sizes = [4, 16], strides = [1, 1]} : vector<4x256xf32> to vector<4x16xf32>
    %89 = arith.truncf %88 : vector<4x16xf32> to vector<4x16xbf16>
    %cst_57 = arith.constant dense<0.000000e+00> : vector<4x24xf32>
    %90 = tpu.matmul %89, %0, %cst_57 {dimension_numbers = #tpu.dot_dimension_numbers<[1], [0], [0], [1], [0, 0, 1, 1], [], []>} : vector<4x16xbf16>, vector<16x24xbf16>, vector<4x24xf32> -> vector<4x24xf32>
    %91 = vector.extract_strided_slice %87 {offsets = [0, 0], sizes = [4, 16], strides = [1, 1]} : vector<4x256xf32> to vector<4x16xf32>
    %cst_58 = arith.constant 0.210526317 : f32
    %92 = vector.broadcast %cst_58 : f32 to vector<4x16xf32>
    %93 = arith.mulf %92, %91 : vector<4x16xf32>
    %94 = vector.extract_strided_slice %87 {offsets = [0, 16], sizes = [4, 16], strides = [1, 1]} : vector<4x256xf32> to vector<4x16xf32>
    %cst_59 = arith.constant 0.789473712 : f32
    %95 = vector.broadcast %cst_59 : f32 to vector<4x16xf32>
    %96 = arith.mulf %95, %94 : vector<4x16xf32>
    %97 = arith.addf %93, %96 : vector<4x16xf32>
    %98 = arith.truncf %97 : vector<4x16xf32> to vector<4x16xbf16>
    %cst_60 = arith.constant dense<0.000000e+00> : vector<4x24xf32>
    %99 = tpu.matmul %98, %0, %cst_60 {dimension_numbers = #tpu.dot_dimension_numbers<[1], [0], [0], [1], [0, 0, 1, 1], [], []>} : vector<4x16xbf16>, vector<16x24xbf16>, vector<4x24xf32> -> vector<4x24xf32>
    %100 = vector.extract_strided_slice %87 {offsets = [0, 16], sizes = [4, 16], strides = [1, 1]} : vector<4x256xf32> to vector<4x16xf32>
    %cst_61 = arith.constant 0.421052635 : f32
    %101 = vector.broadcast %cst_61 : f32 to vector<4x16xf32>
    %102 = arith.mulf %101, %100 : vector<4x16xf32>
    %103 = vector.extract_strided_slice %87 {offsets = [0, 32], sizes = [4, 16], strides = [1, 1]} : vector<4x256xf32> to vector<4x16xf32>
    %cst_62 = arith.constant 0.578947365 : f32
    %104 = vector.broadcast %cst_62 : f32 to vector<4x16xf32>
    %105 = arith.mulf %104, %103 : vector<4x16xf32>
    %106 = arith.addf %102, %105 : vector<4x16xf32>
    %107 = arith.truncf %106 : vector<4x16xf32> to vector<4x16xbf16>
    %cst_63 = arith.constant dense<0.000000e+00> : vector<4x24xf32>
    %108 = tpu.matmul %107, %0, %cst_63 {dimension_numbers = #tpu.dot_dimension_numbers<[1], [0], [0], [1], [0, 0, 1, 1], [], []>} : vector<4x16xbf16>, vector<16x24xbf16>, vector<4x24xf32> -> vector<4x24xf32>
    %109 = vector.extract_strided_slice %87 {offsets = [0, 32], sizes = [4, 16], strides = [1, 1]} : vector<4x256xf32> to vector<4x16xf32>
    %cst_64 = arith.constant 0.631578922 : f32
    %110 = vector.broadcast %cst_64 : f32 to vector<4x16xf32>
    %111 = arith.mulf %110, %109 : vector<4x16xf32>
    %112 = vector.extract_strided_slice %87 {offsets = [0, 48], sizes = [4, 16], strides = [1, 1]} : vector<4x256xf32> to vector<4x16xf32>
    %cst_65 = arith.constant 0.368421048 : f32
    %113 = vector.broadcast %cst_65 : f32 to vector<4x16xf32>
    %114 = arith.mulf %113, %112 : vector<4x16xf32>
    %115 = arith.addf %111, %114 : vector<4x16xf32>
    %116 = arith.truncf %115 : vector<4x16xf32> to vector<4x16xbf16>
    %cst_66 = arith.constant dense<0.000000e+00> : vector<4x24xf32>
    %117 = tpu.matmul %116, %0, %cst_66 {dimension_numbers = #tpu.dot_dimension_numbers<[1], [0], [0], [1], [0, 0, 1, 1], [], []>} : vector<4x16xbf16>, vector<16x24xbf16>, vector<4x24xf32> -> vector<4x24xf32>
    %118 = vector.extract_strided_slice %87 {offsets = [0, 48], sizes = [4, 16], strides = [1, 1]} : vector<4x256xf32> to vector<4x16xf32>
    %cst_67 = arith.constant 0.842105269 : f32
    %119 = vector.broadcast %cst_67 : f32 to vector<4x16xf32>
    %120 = arith.mulf %119, %118 : vector<4x16xf32>
    %121 = vector.extract_strided_slice %87 {offsets = [0, 64], sizes = [4, 16], strides = [1, 1]} : vector<4x256xf32> to vector<4x16xf32>
    %cst_68 = arith.constant 0.157894731 : f32
    %122 = vector.broadcast %cst_68 : f32 to vector<4x16xf32>
    %123 = arith.mulf %122, %121 : vector<4x16xf32>
    %124 = arith.addf %120, %123 : vector<4x16xf32>
    %125 = arith.truncf %124 : vector<4x16xf32> to vector<4x16xbf16>
    %cst_69 = arith.constant dense<0.000000e+00> : vector<4x24xf32>
    %126 = tpu.matmul %125, %0, %cst_69 {dimension_numbers = #tpu.dot_dimension_numbers<[1], [0], [0], [1], [0, 0, 1, 1], [], []>} : vector<4x16xbf16>, vector<16x24xbf16>, vector<4x24xf32> -> vector<4x24xf32>
    %127 = vector.extract_strided_slice %87 {offsets = [0, 48], sizes = [4, 16], strides = [1, 1]} : vector<4x256xf32> to vector<4x16xf32>
    %cst_70 = arith.constant 0.0526315793 : f32
    %128 = vector.broadcast %cst_70 : f32 to vector<4x16xf32>
    %129 = arith.mulf %128, %127 : vector<4x16xf32>
    %130 = vector.extract_strided_slice %87 {offsets = [0, 64], sizes = [4, 16], strides = [1, 1]} : vector<4x256xf32> to vector<4x16xf32>
    %cst_71 = arith.constant 0.947368443 : f32
    %131 = vector.broadcast %cst_71 : f32 to vector<4x16xf32>
    %132 = arith.mulf %131, %130 : vector<4x16xf32>
    %133 = arith.addf %129, %132 : vector<4x16xf32>
    %134 = arith.truncf %133 : vector<4x16xf32> to vector<4x16xbf16>
    %cst_72 = arith.constant dense<0.000000e+00> : vector<4x24xf32>
    %135 = tpu.matmul %134, %0, %cst_72 {dimension_numbers = #tpu.dot_dimension_numbers<[1], [0], [0], [1], [0, 0, 1, 1], [], []>} : vector<4x16xbf16>, vector<16x24xbf16>, vector<4x24xf32> -> vector<4x24xf32>
    %136 = vector.extract_strided_slice %87 {offsets = [0, 64], sizes = [4, 16], strides = [1, 1]} : vector<4x256xf32> to vector<4x16xf32>
    %cst_73 = arith.constant 0.263157904 : f32
    %137 = vector.broadcast %cst_73 : f32 to vector<4x16xf32>
    %138 = arith.mulf %137, %136 : vector<4x16xf32>
    %139 = vector.extract_strided_slice %87 {offsets = [0, 80], sizes = [4, 16], strides = [1, 1]} : vector<4x256xf32> to vector<4x16xf32>
    %cst_74 = arith.constant 0.736842095 : f32
    %140 = vector.broadcast %cst_74 : f32 to vector<4x16xf32>
    %141 = arith.mulf %140, %139 : vector<4x16xf32>
    %142 = arith.addf %138, %141 : vector<4x16xf32>
    %143 = arith.truncf %142 : vector<4x16xf32> to vector<4x16xbf16>
    %cst_75 = arith.constant dense<0.000000e+00> : vector<4x24xf32>
    %144 = tpu.matmul %143, %0, %cst_75 {dimension_numbers = #tpu.dot_dimension_numbers<[1], [0], [0], [1], [0, 0, 1, 1], [], []>} : vector<4x16xbf16>, vector<16x24xbf16>, vector<4x24xf32> -> vector<4x24xf32>
    %145 = vector.extract_strided_slice %87 {offsets = [0, 80], sizes = [4, 16], strides = [1, 1]} : vector<4x256xf32> to vector<4x16xf32>
    %cst_76 = arith.constant 0.473684222 : f32
    %146 = vector.broadcast %cst_76 : f32 to vector<4x16xf32>
    %147 = arith.mulf %146, %145 : vector<4x16xf32>
    %148 = vector.extract_strided_slice %87 {offsets = [0, 96], sizes = [4, 16], strides = [1, 1]} : vector<4x256xf32> to vector<4x16xf32>
    %cst_77 = arith.constant 0.526315808 : f32
    %149 = vector.broadcast %cst_77 : f32 to vector<4x16xf32>
    %150 = arith.mulf %149, %148 : vector<4x16xf32>
    %151 = arith.addf %147, %150 : vector<4x16xf32>
    %152 = arith.truncf %151 : vector<4x16xf32> to vector<4x16xbf16>
    %cst_78 = arith.constant dense<0.000000e+00> : vector<4x24xf32>
    %153 = tpu.matmul %152, %0, %cst_78 {dimension_numbers = #tpu.dot_dimension_numbers<[1], [0], [0], [1], [0, 0, 1, 1], [], []>} : vector<4x16xbf16>, vector<16x24xbf16>, vector<4x24xf32> -> vector<4x24xf32>
    %154 = vector.extract_strided_slice %87 {offsets = [0, 96], sizes = [4, 16], strides = [1, 1]} : vector<4x256xf32> to vector<4x16xf32>
    %cst_79 = arith.constant 0.684210539 : f32
    %155 = vector.broadcast %cst_79 : f32 to vector<4x16xf32>
    %156 = arith.mulf %155, %154 : vector<4x16xf32>
    %157 = vector.extract_strided_slice %87 {offsets = [0, 112], sizes = [4, 16], strides = [1, 1]} : vector<4x256xf32> to vector<4x16xf32>
    %cst_80 = arith.constant 0.315789461 : f32
    %158 = vector.broadcast %cst_80 : f32 to vector<4x16xf32>
    %159 = arith.mulf %158, %157 : vector<4x16xf32>
    %160 = arith.addf %156, %159 : vector<4x16xf32>
    %161 = arith.truncf %160 : vector<4x16xf32> to vector<4x16xbf16>
    %cst_81 = arith.constant dense<0.000000e+00> : vector<4x24xf32>
    %162 = tpu.matmul %161, %0, %cst_81 {dimension_numbers = #tpu.dot_dimension_numbers<[1], [0], [0], [1], [0, 0, 1, 1], [], []>} : vector<4x16xbf16>, vector<16x24xbf16>, vector<4x24xf32> -> vector<4x24xf32>
    %163 = vector.extract_strided_slice %87 {offsets = [0, 112], sizes = [4, 16], strides = [1, 1]} : vector<4x256xf32> to vector<4x16xf32>
    %cst_82 = arith.constant 0.894736826 : f32
    %164 = vector.broadcast %cst_82 : f32 to vector<4x16xf32>
    %165 = arith.mulf %164, %163 : vector<4x16xf32>
    %166 = vector.extract_strided_slice %87 {offsets = [0, 128], sizes = [4, 16], strides = [1, 1]} : vector<4x256xf32> to vector<4x16xf32>
    %cst_83 = arith.constant 0.105263159 : f32
    %167 = vector.broadcast %cst_83 : f32 to vector<4x16xf32>
    %168 = arith.mulf %167, %166 : vector<4x16xf32>
    %169 = arith.addf %165, %168 : vector<4x16xf32>
    %170 = arith.truncf %169 : vector<4x16xf32> to vector<4x16xbf16>
    %cst_84 = arith.constant dense<0.000000e+00> : vector<4x24xf32>
    %171 = tpu.matmul %170, %0, %cst_84 {dimension_numbers = #tpu.dot_dimension_numbers<[1], [0], [0], [1], [0, 0, 1, 1], [], []>} : vector<4x16xbf16>, vector<16x24xbf16>, vector<4x24xf32> -> vector<4x24xf32>
    %172 = vector.extract_strided_slice %87 {offsets = [0, 112], sizes = [4, 16], strides = [1, 1]} : vector<4x256xf32> to vector<4x16xf32>
    %cst_85 = arith.constant 0.105263159 : f32
    %173 = vector.broadcast %cst_85 : f32 to vector<4x16xf32>
    %174 = arith.mulf %173, %172 : vector<4x16xf32>
    %175 = vector.extract_strided_slice %87 {offsets = [0, 128], sizes = [4, 16], strides = [1, 1]} : vector<4x256xf32> to vector<4x16xf32>
    %cst_86 = arith.constant 0.894736826 : f32
    %176 = vector.broadcast %cst_86 : f32 to vector<4x16xf32>
    %177 = arith.mulf %176, %175 : vector<4x16xf32>
    %178 = arith.addf %174, %177 : vector<4x16xf32>
    %179 = arith.truncf %178 : vector<4x16xf32> to vector<4x16xbf16>
    %cst_87 = arith.constant dense<0.000000e+00> : vector<4x24xf32>
    %180 = tpu.matmul %179, %0, %cst_87 {dimension_numbers = #tpu.dot_dimension_numbers<[1], [0], [0], [1], [0, 0, 1, 1], [], []>} : vector<4x16xbf16>, vector<16x24xbf16>, vector<4x24xf32> -> vector<4x24xf32>
    %181 = vector.extract_strided_slice %87 {offsets = [0, 128], sizes = [4, 16], strides = [1, 1]} : vector<4x256xf32> to vector<4x16xf32>
    %cst_88 = arith.constant 0.315789461 : f32
    %182 = vector.broadcast %cst_88 : f32 to vector<4x16xf32>
    %183 = arith.mulf %182, %181 : vector<4x16xf32>
    %184 = vector.extract_strided_slice %87 {offsets = [0, 144], sizes = [4, 16], strides = [1, 1]} : vector<4x256xf32> to vector<4x16xf32>
    %cst_89 = arith.constant 0.684210539 : f32
    %185 = vector.broadcast %cst_89 : f32 to vector<4x16xf32>
    %186 = arith.mulf %185, %184 : vector<4x16xf32>
    %187 = arith.addf %183, %186 : vector<4x16xf32>
    %188 = arith.truncf %187 : vector<4x16xf32> to vector<4x16xbf16>
    %cst_90 = arith.constant dense<0.000000e+00> : vector<4x24xf32>
    %189 = tpu.matmul %188, %0, %cst_90 {dimension_numbers = #tpu.dot_dimension_numbers<[1], [0], [0], [1], [0, 0, 1, 1], [], []>} : vector<4x16xbf16>, vector<16x24xbf16>, vector<4x24xf32> -> vector<4x24xf32>
    %190 = vector.extract_strided_slice %87 {offsets = [0, 144], sizes = [4, 16], strides = [1, 1]} : vector<4x256xf32> to vector<4x16xf32>
    %cst_91 = arith.constant 0.526315808 : f32
    %191 = vector.broadcast %cst_91 : f32 to vector<4x16xf32>
    %192 = arith.mulf %191, %190 : vector<4x16xf32>
    %193 = vector.extract_strided_slice %87 {offsets = [0, 160], sizes = [4, 16], strides = [1, 1]} : vector<4x256xf32> to vector<4x16xf32>
    %cst_92 = arith.constant 0.473684222 : f32
    %194 = vector.broadcast %cst_92 : f32 to vector<4x16xf32>
    %195 = arith.mulf %194, %193 : vector<4x16xf32>
    %196 = arith.addf %192, %195 : vector<4x16xf32>
    %197 = arith.truncf %196 : vector<4x16xf32> to vector<4x16xbf16>
    %cst_93 = arith.constant dense<0.000000e+00> : vector<4x24xf32>
    %198 = tpu.matmul %197, %0, %cst_93 {dimension_numbers = #tpu.dot_dimension_numbers<[1], [0], [0], [1], [0, 0, 1, 1], [], []>} : vector<4x16xbf16>, vector<16x24xbf16>, vector<4x24xf32> -> vector<4x24xf32>
    %199 = vector.extract_strided_slice %87 {offsets = [0, 160], sizes = [4, 16], strides = [1, 1]} : vector<4x256xf32> to vector<4x16xf32>
    %cst_94 = arith.constant 0.736842095 : f32
    %200 = vector.broadcast %cst_94 : f32 to vector<4x16xf32>
    %201 = arith.mulf %200, %199 : vector<4x16xf32>
    %202 = vector.extract_strided_slice %87 {offsets = [0, 176], sizes = [4, 16], strides = [1, 1]} : vector<4x256xf32> to vector<4x16xf32>
    %cst_95 = arith.constant 0.263157904 : f32
    %203 = vector.broadcast %cst_95 : f32 to vector<4x16xf32>
    %204 = arith.mulf %203, %202 : vector<4x16xf32>
    %205 = arith.addf %201, %204 : vector<4x16xf32>
    %206 = arith.truncf %205 : vector<4x16xf32> to vector<4x16xbf16>
    %cst_96 = arith.constant dense<0.000000e+00> : vector<4x24xf32>
    %207 = tpu.matmul %206, %0, %cst_96 {dimension_numbers = #tpu.dot_dimension_numbers<[1], [0], [0], [1], [0, 0, 1, 1], [], []>} : vector<4x16xbf16>, vector<16x24xbf16>, vector<4x24xf32> -> vector<4x24xf32>
    %208 = vector.extract_strided_slice %87 {offsets = [0, 176], sizes = [4, 16], strides = [1, 1]} : vector<4x256xf32> to vector<4x16xf32>
    %cst_97 = arith.constant 0.947368443 : f32
    %209 = vector.broadcast %cst_97 : f32 to vector<4x16xf32>
    %210 = arith.mulf %209, %208 : vector<4x16xf32>
    %211 = vector.extract_strided_slice %87 {offsets = [0, 192], sizes = [4, 16], strides = [1, 1]} : vector<4x256xf32> to vector<4x16xf32>
    %cst_98 = arith.constant 0.0526315793 : f32
    %212 = vector.broadcast %cst_98 : f32 to vector<4x16xf32>
    %213 = arith.mulf %212, %211 : vector<4x16xf32>
    %214 = arith.addf %210, %213 : vector<4x16xf32>
    %215 = arith.truncf %214 : vector<4x16xf32> to vector<4x16xbf16>
    %cst_99 = arith.constant dense<0.000000e+00> : vector<4x24xf32>
    %216 = tpu.matmul %215, %0, %cst_99 {dimension_numbers = #tpu.dot_dimension_numbers<[1], [0], [0], [1], [0, 0, 1, 1], [], []>} : vector<4x16xbf16>, vector<16x24xbf16>, vector<4x24xf32> -> vector<4x24xf32>
    %217 = vector.extract_strided_slice %87 {offsets = [0, 176], sizes = [4, 16], strides = [1, 1]} : vector<4x256xf32> to vector<4x16xf32>
    %cst_100 = arith.constant 0.157894731 : f32
    %218 = vector.broadcast %cst_100 : f32 to vector<4x16xf32>
    %219 = arith.mulf %218, %217 : vector<4x16xf32>
    %220 = vector.extract_strided_slice %87 {offsets = [0, 192], sizes = [4, 16], strides = [1, 1]} : vector<4x256xf32> to vector<4x16xf32>
    %cst_101 = arith.constant 0.842105269 : f32
    %221 = vector.broadcast %cst_101 : f32 to vector<4x16xf32>
    %222 = arith.mulf %221, %220 : vector<4x16xf32>
    %223 = arith.addf %219, %222 : vector<4x16xf32>
    %224 = arith.truncf %223 : vector<4x16xf32> to vector<4x16xbf16>
    %cst_102 = arith.constant dense<0.000000e+00> : vector<4x24xf32>
    %225 = tpu.matmul %224, %0, %cst_102 {dimension_numbers = #tpu.dot_dimension_numbers<[1], [0], [0], [1], [0, 0, 1, 1], [], []>} : vector<4x16xbf16>, vector<16x24xbf16>, vector<4x24xf32> -> vector<4x24xf32>
    %226 = vector.extract_strided_slice %87 {offsets = [0, 192], sizes = [4, 16], strides = [1, 1]} : vector<4x256xf32> to vector<4x16xf32>
    %cst_103 = arith.constant 0.368421048 : f32
    %227 = vector.broadcast %cst_103 : f32 to vector<4x16xf32>
    %228 = arith.mulf %227, %226 : vector<4x16xf32>
    %229 = vector.extract_strided_slice %87 {offsets = [0, 208], sizes = [4, 16], strides = [1, 1]} : vector<4x256xf32> to vector<4x16xf32>
    %cst_104 = arith.constant 0.631578922 : f32
    %230 = vector.broadcast %cst_104 : f32 to vector<4x16xf32>
    %231 = arith.mulf %230, %229 : vector<4x16xf32>
    %232 = arith.addf %228, %231 : vector<4x16xf32>
    %233 = arith.truncf %232 : vector<4x16xf32> to vector<4x16xbf16>
    %cst_105 = arith.constant dense<0.000000e+00> : vector<4x24xf32>
    %234 = tpu.matmul %233, %0, %cst_105 {dimension_numbers = #tpu.dot_dimension_numbers<[1], [0], [0], [1], [0, 0, 1, 1], [], []>} : vector<4x16xbf16>, vector<16x24xbf16>, vector<4x24xf32> -> vector<4x24xf32>
    %235 = vector.extract_strided_slice %87 {offsets = [0, 208], sizes = [4, 16], strides = [1, 1]} : vector<4x256xf32> to vector<4x16xf32>
    %cst_106 = arith.constant 0.578947365 : f32
    %236 = vector.broadcast %cst_106 : f32 to vector<4x16xf32>
    %237 = arith.mulf %236, %235 : vector<4x16xf32>
    %238 = vector.extract_strided_slice %87 {offsets = [0, 224], sizes = [4, 16], strides = [1, 1]} : vector<4x256xf32> to vector<4x16xf32>
    %cst_107 = arith.constant 0.421052635 : f32
    %239 = vector.broadcast %cst_107 : f32 to vector<4x16xf32>
    %240 = arith.mulf %239, %238 : vector<4x16xf32>
    %241 = arith.addf %237, %240 : vector<4x16xf32>
    %242 = arith.truncf %241 : vector<4x16xf32> to vector<4x16xbf16>
    %cst_108 = arith.constant dense<0.000000e+00> : vector<4x24xf32>
    %243 = tpu.matmul %242, %0, %cst_108 {dimension_numbers = #tpu.dot_dimension_numbers<[1], [0], [0], [1], [0, 0, 1, 1], [], []>} : vector<4x16xbf16>, vector<16x24xbf16>, vector<4x24xf32> -> vector<4x24xf32>
    %244 = vector.extract_strided_slice %87 {offsets = [0, 224], sizes = [4, 16], strides = [1, 1]} : vector<4x256xf32> to vector<4x16xf32>
    %cst_109 = arith.constant 0.789473712 : f32
    %245 = vector.broadcast %cst_109 : f32 to vector<4x16xf32>
    %246 = arith.mulf %245, %244 : vector<4x16xf32>
    %247 = vector.extract_strided_slice %87 {offsets = [0, 240], sizes = [4, 16], strides = [1, 1]} : vector<4x256xf32> to vector<4x16xf32>
    %cst_110 = arith.constant 0.210526317 : f32
    %248 = vector.broadcast %cst_110 : f32 to vector<4x16xf32>
    %249 = arith.mulf %248, %247 : vector<4x16xf32>
    %250 = arith.addf %246, %249 : vector<4x16xf32>
    %251 = arith.truncf %250 : vector<4x16xf32> to vector<4x16xbf16>
    %cst_111 = arith.constant dense<0.000000e+00> : vector<4x24xf32>
    %252 = tpu.matmul %251, %0, %cst_111 {dimension_numbers = #tpu.dot_dimension_numbers<[1], [0], [0], [1], [0, 0, 1, 1], [], []>} : vector<4x16xbf16>, vector<16x24xbf16>, vector<4x24xf32> -> vector<4x24xf32>
    %253 = vector.extract_strided_slice %87 {offsets = [0, 240], sizes = [4, 16], strides = [1, 1]} : vector<4x256xf32> to vector<4x16xf32>
    %254 = arith.truncf %253 : vector<4x16xf32> to vector<4x16xbf16>
    %cst_112 = arith.constant dense<0.000000e+00> : vector<4x24xf32>
    %255 = tpu.matmul %254, %0, %cst_112 {dimension_numbers = #tpu.dot_dimension_numbers<[1], [0], [0], [1], [0, 0, 1, 1], [], []>} : vector<4x16xbf16>, vector<16x24xbf16>, vector<4x24xf32> -> vector<4x24xf32>
    %cst_113 = arith.constant 0.000000e+00 : f32
    %256 = vector.broadcast %cst_113 : f32 to vector<4x32xf32>
    %257 = tpu.concatenate %90, %99, %108, %117, %126, %135, %144, %153, %162, %171, %180, %189, %198, %207, %216, %225 in 1 : vector<4x24xf32>, vector<4x24xf32>, vector<4x24xf32>, vector<4x24xf32>, vector<4x24xf32>, vector<4x24xf32>, vector<4x24xf32>, vector<4x24xf32>, vector<4x24xf32>, vector<4x24xf32>, vector<4x24xf32>, vector<4x24xf32>, vector<4x24xf32>, vector<4x24xf32>, vector<4x24xf32>, vector<4x24xf32> -> vector<4x384xf32>
    %258 = tpu.concatenate %234, %243, %252, %255, %256 in 1 : vector<4x24xf32>, vector<4x24xf32>, vector<4x24xf32>, vector<4x24xf32>, vector<4x32xf32> -> vector<4x128xf32>
    %259 = tpu.concatenate %257, %258 in 1 : vector<4x384xf32>, vector<4x128xf32> -> vector<4x512xf32>
    %c25_i32 = arith.constant 25 : i32
    %260 = tpu.dynamic_rotate %259 by %c25_i32 dim 1 : vector<4x512xf32>, i32 -> vector<4x512xf32>
    %c0_114 = arith.constant 0 : index
    %c0_115 = arith.constant 0 : index
    %261 = vector.load %arg8[%c0_114, %c0_115] : memref<9x512xf32, #tpu.memory_space<vmem>>, vector<1x512xf32>
    %262 = vector.broadcast %261 : vector<1x512xf32> to vector<4x512xf32>
    %263 = arith.mulf %260, %262 : vector<4x512xf32>
    %264 = arith.truncf %263 : vector<4x512xf32> to vector<4x512xbf16>
    %c0_116 = arith.constant 0 : index
    %c0_117 = arith.constant 0 : index
    %c0_118 = arith.constant 0 : index
    %265 = vector.load %arg6[%c0_116, %c0_117, %c0_118] : memref<9x4x4xbf16, #tpu.memory_space<vmem>>, vector<1x4x4xbf16>
    %266 = vector.shape_cast %265 : vector<1x4x4xbf16> to vector<4x4xbf16>
    %cst_119 = arith.constant dense<0.000000e+00> : vector<4x512xf32>
    %267 = tpu.matmul %266, %264, %cst_119 {dimension_numbers = #tpu.dot_dimension_numbers<[1], [0], [0], [1], [0, 0, 1, 1], [], []>} : vector<4x4xbf16>, vector<4x512xbf16>, vector<4x512xf32> -> vector<4x512xf32>
    %c24_i32 = arith.constant 24 : i32
    %268 = tpu.dynamic_rotate %259 by %c24_i32 dim 1 : vector<4x512xf32>, i32 -> vector<4x512xf32>
    %c1_120 = arith.constant 1 : index
    %c0_121 = arith.constant 0 : index
    %269 = vector.load %arg8[%c1_120, %c0_121] : memref<9x512xf32, #tpu.memory_space<vmem>>, vector<1x512xf32>
    %270 = vector.broadcast %269 : vector<1x512xf32> to vector<4x512xf32>
    %271 = arith.mulf %268, %270 : vector<4x512xf32>
    %272 = arith.truncf %271 : vector<4x512xf32> to vector<4x512xbf16>
    %c1_122 = arith.constant 1 : index
    %c0_123 = arith.constant 0 : index
    %c0_124 = arith.constant 0 : index
    %273 = vector.load %arg6[%c1_122, %c0_123, %c0_124] : memref<9x4x4xbf16, #tpu.memory_space<vmem>>, vector<1x4x4xbf16>
    %274 = vector.shape_cast %273 : vector<1x4x4xbf16> to vector<4x4xbf16>
    %cst_125 = arith.constant dense<0.000000e+00> : vector<4x512xf32>
    %275 = tpu.matmul %274, %272, %cst_125 {dimension_numbers = #tpu.dot_dimension_numbers<[1], [0], [0], [1], [0, 0, 1, 1], [], []>} : vector<4x4xbf16>, vector<4x512xbf16>, vector<4x512xf32> -> vector<4x512xf32>
    %276 = arith.addf %267, %275 : vector<4x512xf32>
    %c23_i32 = arith.constant 23 : i32
    %277 = tpu.dynamic_rotate %259 by %c23_i32 dim 1 : vector<4x512xf32>, i32 -> vector<4x512xf32>
    %c2_126 = arith.constant 2 : index
    %c0_127 = arith.constant 0 : index
    %278 = vector.load %arg8[%c2_126, %c0_127] : memref<9x512xf32, #tpu.memory_space<vmem>>, vector<1x512xf32>
    %279 = vector.broadcast %278 : vector<1x512xf32> to vector<4x512xf32>
    %280 = arith.mulf %277, %279 : vector<4x512xf32>
    %281 = arith.truncf %280 : vector<4x512xf32> to vector<4x512xbf16>
    %c2_128 = arith.constant 2 : index
    %c0_129 = arith.constant 0 : index
    %c0_130 = arith.constant 0 : index
    %282 = vector.load %arg6[%c2_128, %c0_129, %c0_130] : memref<9x4x4xbf16, #tpu.memory_space<vmem>>, vector<1x4x4xbf16>
    %283 = vector.shape_cast %282 : vector<1x4x4xbf16> to vector<4x4xbf16>
    %cst_131 = arith.constant dense<0.000000e+00> : vector<4x512xf32>
    %284 = tpu.matmul %283, %281, %cst_131 {dimension_numbers = #tpu.dot_dimension_numbers<[1], [0], [0], [1], [0, 0, 1, 1], [], []>} : vector<4x4xbf16>, vector<4x512xbf16>, vector<4x512xf32> -> vector<4x512xf32>
    %285 = arith.addf %276, %284 : vector<4x512xf32>
    %c1_i32_132 = arith.constant 1 : i32
    %286 = tpu.dynamic_rotate %259 by %c1_i32_132 dim 1 : vector<4x512xf32>, i32 -> vector<4x512xf32>
    %c3_133 = arith.constant 3 : index
    %c0_134 = arith.constant 0 : index
    %287 = vector.load %arg8[%c3_133, %c0_134] : memref<9x512xf32, #tpu.memory_space<vmem>>, vector<1x512xf32>
    %288 = vector.broadcast %287 : vector<1x512xf32> to vector<4x512xf32>
    %289 = arith.mulf %286, %288 : vector<4x512xf32>
    %290 = arith.truncf %289 : vector<4x512xf32> to vector<4x512xbf16>
    %c3_135 = arith.constant 3 : index
    %c0_136 = arith.constant 0 : index
    %c0_137 = arith.constant 0 : index
    %291 = vector.load %arg6[%c3_135, %c0_136, %c0_137] : memref<9x4x4xbf16, #tpu.memory_space<vmem>>, vector<1x4x4xbf16>
    %292 = vector.shape_cast %291 : vector<1x4x4xbf16> to vector<4x4xbf16>
    %cst_138 = arith.constant dense<0.000000e+00> : vector<4x512xf32>
    %293 = tpu.matmul %292, %290, %cst_138 {dimension_numbers = #tpu.dot_dimension_numbers<[1], [0], [0], [1], [0, 0, 1, 1], [], []>} : vector<4x4xbf16>, vector<4x512xbf16>, vector<4x512xf32> -> vector<4x512xf32>
    %294 = arith.addf %285, %293 : vector<4x512xf32>
    %c4_139 = arith.constant 4 : index
    %c0_140 = arith.constant 0 : index
    %295 = vector.load %arg8[%c4_139, %c0_140] : memref<9x512xf32, #tpu.memory_space<vmem>>, vector<1x512xf32>
    %296 = vector.broadcast %295 : vector<1x512xf32> to vector<4x512xf32>
    %297 = arith.mulf %259, %296 : vector<4x512xf32>
    %298 = arith.truncf %297 : vector<4x512xf32> to vector<4x512xbf16>
    %c4_141 = arith.constant 4 : index
    %c0_142 = arith.constant 0 : index
    %c0_143 = arith.constant 0 : index
    %299 = vector.load %arg6[%c4_141, %c0_142, %c0_143] : memref<9x4x4xbf16, #tpu.memory_space<vmem>>, vector<1x4x4xbf16>
    %300 = vector.shape_cast %299 : vector<1x4x4xbf16> to vector<4x4xbf16>
    %cst_144 = arith.constant dense<0.000000e+00> : vector<4x512xf32>
    %301 = tpu.matmul %300, %298, %cst_144 {dimension_numbers = #tpu.dot_dimension_numbers<[1], [0], [0], [1], [0, 0, 1, 1], [], []>} : vector<4x4xbf16>, vector<4x512xbf16>, vector<4x512xf32> -> vector<4x512xf32>
    %302 = arith.addf %294, %301 : vector<4x512xf32>
    %c511_i32 = arith.constant 511 : i32
    %303 = tpu.dynamic_rotate %259 by %c511_i32 dim 1 : vector<4x512xf32>, i32 -> vector<4x512xf32>
    %c5_145 = arith.constant 5 : index
    %c0_146 = arith.constant 0 : index
    %304 = vector.load %arg8[%c5_145, %c0_146] : memref<9x512xf32, #tpu.memory_space<vmem>>, vector<1x512xf32>
    %305 = vector.broadcast %304 : vector<1x512xf32> to vector<4x512xf32>
    %306 = arith.mulf %303, %305 : vector<4x512xf32>
    %307 = arith.truncf %306 : vector<4x512xf32> to vector<4x512xbf16>
    %c5_147 = arith.constant 5 : index
    %c0_148 = arith.constant 0 : index
    %c0_149 = arith.constant 0 : index
    %308 = vector.load %arg6[%c5_147, %c0_148, %c0_149] : memref<9x4x4xbf16, #tpu.memory_space<vmem>>, vector<1x4x4xbf16>
    %309 = vector.shape_cast %308 : vector<1x4x4xbf16> to vector<4x4xbf16>
    %cst_150 = arith.constant dense<0.000000e+00> : vector<4x512xf32>
    %310 = tpu.matmul %309, %307, %cst_150 {dimension_numbers = #tpu.dot_dimension_numbers<[1], [0], [0], [1], [0, 0, 1, 1], [], []>} : vector<4x4xbf16>, vector<4x512xbf16>, vector<4x512xf32> -> vector<4x512xf32>
    %311 = arith.addf %302, %310 : vector<4x512xf32>
    %c489_i32 = arith.constant 489 : i32
    %312 = tpu.dynamic_rotate %259 by %c489_i32 dim 1 : vector<4x512xf32>, i32 -> vector<4x512xf32>
    %c6_151 = arith.constant 6 : index
    %c0_152 = arith.constant 0 : index
    %313 = vector.load %arg8[%c6_151, %c0_152] : memref<9x512xf32, #tpu.memory_space<vmem>>, vector<1x512xf32>
    %314 = vector.broadcast %313 : vector<1x512xf32> to vector<4x512xf32>
    %315 = arith.mulf %312, %314 : vector<4x512xf32>
    %316 = arith.truncf %315 : vector<4x512xf32> to vector<4x512xbf16>
    %c6_153 = arith.constant 6 : index
    %c0_154 = arith.constant 0 : index
    %c0_155 = arith.constant 0 : index
    %317 = vector.load %arg6[%c6_153, %c0_154, %c0_155] : memref<9x4x4xbf16, #tpu.memory_space<vmem>>, vector<1x4x4xbf16>
    %318 = vector.shape_cast %317 : vector<1x4x4xbf16> to vector<4x4xbf16>
    %cst_156 = arith.constant dense<0.000000e+00> : vector<4x512xf32>
    %319 = tpu.matmul %318, %316, %cst_156 {dimension_numbers = #tpu.dot_dimension_numbers<[1], [0], [0], [1], [0, 0, 1, 1], [], []>} : vector<4x4xbf16>, vector<4x512xbf16>, vector<4x512xf32> -> vector<4x512xf32>
    %320 = arith.addf %311, %319 : vector<4x512xf32>
    %c488_i32 = arith.constant 488 : i32
    %321 = tpu.dynamic_rotate %259 by %c488_i32 dim 1 : vector<4x512xf32>, i32 -> vector<4x512xf32>
    %c7_157 = arith.constant 7 : index
    %c0_158 = arith.constant 0 : index
    %322 = vector.load %arg8[%c7_157, %c0_158] : memref<9x512xf32, #tpu.memory_space<vmem>>, vector<1x512xf32>
    %323 = vector.broadcast %322 : vector<1x512xf32> to vector<4x512xf32>
    %324 = arith.mulf %321, %323 : vector<4x512xf32>
    %325 = arith.truncf %324 : vector<4x512xf32> to vector<4x512xbf16>
    %c7_159 = arith.constant 7 : index
    %c0_160 = arith.constant 0 : index
    %c0_161 = arith.constant 0 : index
    %326 = vector.load %arg6[%c7_159, %c0_160, %c0_161] : memref<9x4x4xbf16, #tpu.memory_space<vmem>>, vector<1x4x4xbf16>
    %327 = vector.shape_cast %326 : vector<1x4x4xbf16> to vector<4x4xbf16>
    %cst_162 = arith.constant dense<0.000000e+00> : vector<4x512xf32>
    %328 = tpu.matmul %327, %325, %cst_162 {dimension_numbers = #tpu.dot_dimension_numbers<[1], [0], [0], [1], [0, 0, 1, 1], [], []>} : vector<4x4xbf16>, vector<4x512xbf16>, vector<4x512xf32> -> vector<4x512xf32>
    %329 = arith.addf %320, %328 : vector<4x512xf32>
    %c487_i32 = arith.constant 487 : i32
    %330 = tpu.dynamic_rotate %259 by %c487_i32 dim 1 : vector<4x512xf32>, i32 -> vector<4x512xf32>
    %c8_163 = arith.constant 8 : index
    %c0_164 = arith.constant 0 : index
    %331 = vector.load %arg8[%c8_163, %c0_164] : memref<9x512xf32, #tpu.memory_space<vmem>>, vector<1x512xf32>
    %332 = vector.broadcast %331 : vector<1x512xf32> to vector<4x512xf32>
    %333 = arith.mulf %330, %332 : vector<4x512xf32>
    %334 = arith.truncf %333 : vector<4x512xf32> to vector<4x512xbf16>
    %c8_165 = arith.constant 8 : index
    %c0_166 = arith.constant 0 : index
    %c0_167 = arith.constant 0 : index
    %335 = vector.load %arg6[%c8_165, %c0_166, %c0_167] : memref<9x4x4xbf16, #tpu.memory_space<vmem>>, vector<1x4x4xbf16>
    %336 = vector.shape_cast %335 : vector<1x4x4xbf16> to vector<4x4xbf16>
    %cst_168 = arith.constant dense<0.000000e+00> : vector<4x512xf32>
    %337 = tpu.matmul %336, %334, %cst_168 {dimension_numbers = #tpu.dot_dimension_numbers<[1], [0], [0], [1], [0, 0, 1, 1], [], []>} : vector<4x4xbf16>, vector<4x512xbf16>, vector<4x512xf32> -> vector<4x512xf32>
    %338 = arith.addf %329, %337 : vector<4x512xf32>
    %339 = vector.broadcast %2 : vector<4x1xf32> to vector<4x512xf32>
    %340 = arith.addf %338, %339 : vector<4x512xf32>
    %cst_169 = arith.constant 0.000000e+00 : f32
    %341 = vector.broadcast %cst_169 : f32 to vector<4x512xf32>
    %342 = arith.maximumf %340, %341 : vector<4x512xf32>
    %343 = arith.truncf %342 : vector<4x512xf32> to vector<4x512xbf16>
    %cst_170 = arith.constant dense<0.000000e+00> : vector<8x512xf32>
    %344 = tpu.matmul %3, %343, %cst_170 {dimension_numbers = #tpu.dot_dimension_numbers<[1], [0], [0], [1], [0, 0, 1, 1], [], []>} : vector<8x4xbf16>, vector<4x512xbf16>, vector<8x512xf32> -> vector<8x512xf32>
    %345 = vector.broadcast %4 : vector<8x1xf32> to vector<8x512xf32>
    %346 = arith.addf %344, %345 : vector<8x512xf32>
    %c0_171 = arith.constant 0 : index
    %c0_172 = arith.constant 0 : index
    %c0_173 = arith.constant 0 : index
    %347 = vector.load %arg11[%c0_171, %c0_172, %c0_173] : memref<1x8x512xf32, #tpu.memory_space<vmem>>, vector<1x8x512xf32>
    %348 = vector.shape_cast %347 : vector<1x8x512xf32> to vector<8x512xf32>
    %349 = vector.shape_cast %346 : vector<8x512xf32> to vector<1x8x512xf32>
    tpu.vector_store %arg11[%c0_171, %c0_172, %c0_173], %349 {strides = array<i32>} : memref<1x8x512xf32, #tpu.memory_space<vmem>>, vector<1x8x512xf32>,
    return
  }
  func.func @transform_0(%arg0: i32) -> (i32, i32, i32) {
    %c0_i32 = arith.constant 0 : i32
    %c0_i32_0 = arith.constant 0 : i32
    %c0_i32_1 = arith.constant 0 : i32
    return %arg0, %c0_i32, %c0_i32_0 : i32, i32, i32
  }
  func.func @transform_1(%arg0: i32) -> (i32, i32, i32) {
    %c0_i32 = arith.constant 0 : i32
    %c0_i32_0 = arith.constant 0 : i32
    %c0_i32_1 = arith.constant 0 : i32
    %c0_i32_2 = arith.constant 0 : i32
    return %c0_i32, %c0_i32_0, %c0_i32_1 : i32, i32, i32
  }
  func.func @transform_2(%arg0: i32) -> (i32, i32) {
    %c0_i32 = arith.constant 0 : i32
    %c0_i32_0 = arith.constant 0 : i32
    %c0_i32_1 = arith.constant 0 : i32
    return %c0_i32, %c0_i32_0 : i32, i32
  }
  func.func @transform_3(%arg0: i32) -> (i32, i32) {
    %c0_i32 = arith.constant 0 : i32
    %c0_i32_0 = arith.constant 0 : i32
    %c0_i32_1 = arith.constant 0 : i32
    return %c0_i32, %c0_i32_0 : i32, i32
  }
  func.func @transform_4(%arg0: i32) -> (i32, i32) {
    %c0_i32 = arith.constant 0 : i32
    %c0_i32_0 = arith.constant 0 : i32
    %c0_i32_1 = arith.constant 0 : i32
    return %c0_i32, %c0_i32_0 : i32, i32
  }
  func.func @transform_5(%arg0: i32) -> (i32, i32, i32) {
    %c0_i32 = arith.constant 0 : i32
    %c0_i32_0 = arith.constant 0 : i32
    %c0_i32_1 = arith.constant 0 : i32
    %c0_i32_2 = arith.constant 0 : i32
    return %c0_i32, %c0_i32_0, %c0_i32_1 : i32, i32, i32
  }
  func.func @transform_6(%arg0: i32) -> (i32, i32) {
    %c0_i32 = arith.constant 0 : i32
    %c0_i32_0 = arith.constant 0 : i32
    %c0_i32_1 = arith.constant 0 : i32
    return %c0_i32, %c0_i32_0 : i32, i32
  }
  func.func @transform_7(%arg0: i32) -> (i32, i32) {
    %c0_i32 = arith.constant 0 : i32
    %c0_i32_0 = arith.constant 0 : i32
    %c0_i32_1 = arith.constant 0 : i32
    return %c0_i32, %c0_i32_0 : i32, i32
  }
  func.func @transform_8(%arg0: i32) -> (i32, i32) {
    %c0_i32 = arith.constant 0 : i32
    %c0_i32_0 = arith.constant 0 : i32
    %c0_i32_1 = arith.constant 0 : i32
    return %c0_i32, %c0_i32_0 : i32, i32
  }
  func.func @transform_9(%arg0: i32) -> (i32, i32) {
    %c0_i32 = arith.constant 0 : i32
    %c0_i32_0 = arith.constant 0 : i32
    %c0_i32_1 = arith.constant 0 : i32
    return %c0_i32, %c0_i32_0 : i32, i32
  }
  func.func @transform_10(%arg0: i32) -> (i32, i32, i32) {
    %c0_i32 = arith.constant 0 : i32
    %c0_i32_0 = arith.constant 0 : i32
    %c0_i32_1 = arith.constant 0 : i32
    return %arg0, %c0_i32, %c0_i32_0 : i32, i32, i32
  }
}

</mosaic_0001>

<llo_original>
// kernel: dpt_regression_processor_forward.1
$region0: #{dpt_regression_processor_forward.1}
  #allocation0 [shape = 'u32[]', space=smem, size = 0x4, offset = 0x4, fixed_abs, tag = 'smem constant byte address 0x4 - core index']
  #allocation1 [shape = 'u32[72,128]{1,0:T(1,128)}', space=vmem, size = 0x9000, scoped, tag = 'internal scratch']
  %s0 = inlined_call_operand.vmem [shape: f32[2,8,256], index: 0, kind: input, shape index: {}]
  %s1 = inlined_call_operand.vmem [shape: bf16[9,4,8], index: 1, kind: input, shape index: {}]
  %s2 = inlined_call_operand.vmem [shape: f32[4,1], index: 2, kind: input, shape index: {}]
  %s3 = inlined_call_operand.vmem [shape: f32[9,256], index: 3, kind: input, shape index: {}]
  %s4 = inlined_call_operand.vmem [shape: bf16[16,24], index: 4, kind: input, shape index: {}]
  %s5 = inlined_call_operand.vmem [shape: bf16[9,4,4], index: 5, kind: input, shape index: {}]
  %s6 = inlined_call_operand.vmem [shape: f32[4,1], index: 6, kind: input, shape index: {}]
  %s7 = inlined_call_operand.vmem [shape: f32[9,512], index: 7, kind: input, shape index: {}]
  %s8 = inlined_call_operand.vmem [shape: bf16[8,4], index: 8, kind: input, shape index: {}]
  %s9 = inlined_call_operand.vmem [shape: f32[8,1], index: 9, kind: input, shape index: {}]
  %s10 = inlined_call_operand.vmem [shape: f32[2,8,512], index: 10, kind: output, shape index: {}]
  %s11 = sld [smem:[#allocation0]]
  $region73: #{dpt_regression_processor_forward.1} parent=0
    _
  %s13 = ssub.s32 1, %s11
  %s14 = scalar_select 0, %s13, %s11
  loop: start=0, step=1, limit=4
  $region2: #{dpt_regression_processor_forward.1} parent=0 // loop_pre_header
    _
  $region3: #{dpt_regression_processor_forward.1} parent=0 // loop_header
    %s16 = sphi 0, %s20
    %p17 = scmp.ge.s32.totalorder %s16, 4
    %s26 = sphi 0, %s28
    %s29 = sphi 0, %s26
    %s30 = sphi 0, %s29
    %s46 = sphi 0, %s30
    %s50 = sphi 0, %s50
    %s52 = sphi 0, %s50
    %s53 = sphi 0, %s52
    %s67 = sphi 0, %s53
    %s71 = sphi 0, %s71
    %s73 = sphi 0, %s71
    %s74 = sphi 0, %s73
    %s88 = sphi 0, %s74
    %s92 = sphi 0, %s92
    %s94 = sphi 0, %s92
    %s95 = sphi 0, %s94
    %s109 = sphi 0, %s95
    %s113 = sphi 0, %s113
    %s115 = sphi 0, %s113
    %s116 = sphi 0, %s115
    %s130 = sphi 0, %s116
    %s134 = sphi 0, %s134
    %s136 = sphi 0, %s134
    %s137 = sphi 0, %s136
    %s151 = sphi 0, %s137
    %s155 = sphi 0, %s155
    %s157 = sphi 0, %s155
    %s158 = sphi 0, %s157
    %s172 = sphi 0, %s158
    %s176 = sphi 0, %s176
    %s178 = sphi 0, %s176
    %s179 = sphi 0, %s178
    %s193 = sphi 0, %s179
    %s197 = sphi 0, %s197
    %s199 = sphi 0, %s197
    %s200 = sphi 0, %s199
    %s214 = sphi 0, %s200
    %s218 = sphi 0, %s218
    %s220 = sphi 0, %s218
    %s221 = sphi 0, %s220
    %s235 = sphi 0, %s221
    %s241 = sphi 0, %s243
    %s244 = sphi 0, %s241
    %s245 = sphi 0, %s244
    %s261 = sphi 0, %s245
  $region4: #{dpt_regression_processor_forward.1} parent=0 // loop_header_branch
    %19 = sbr.rel (%p17) target = $region8
  $region5: #{dpt_regression_processor_forward.1} parent=0 // loop_body
    %s21 = ssub.s32 %s16, 1
    %s22 = ssub.s32 %s16, 2
    %s23 = sadd.s32 %s16, 1
    %s24 = ssub.s32 %s16, %s23
    %p25 = scmp.eq.s32.totalorder %s24, 0
    %s27 = sadd.s32 %s26, 1
    %s28 = scalar_select %p25, %s26, %s27
    %p31 = pneg %p25
    %p32 = scmp.eq.s32.totalorder %s16, 1
    %p33 = por %p31, %p32
    %p34 = scmp.ne.s32.totalorder %s26, %s29
    %p35 = scmp.eq.s32.totalorder %s16, 0
    %p36 = por %p34, %p35
    %p37 = scmp.ne.s32.totalorder %s26, %s29
    %p38 = scmp.eq.s32.totalorder %s21, 1
    %p39 = por %p37, %p38
    %p40 = scmp.ne.s32.totalorder %s29, %s30
    %p41 = scmp.eq.s32.totalorder %s21, 0
    %p42 = por %p40, %p41
    %p43 = scmp.ne.s32.totalorder %s29, %s30
    %p44 = scmp.eq.s32.totalorder %s22, 1
    %p45 = por %p43, %p44
    %p47 = scmp.ne.s32.totalorder %s30, %s46
    %p48 = scmp.eq.s32.totalorder %s22, 0
    %p49 = por %p47, %p48
    %s51 = sadd.s32 %s50, 1
    %p54 = scmp.eq.s32.totalorder %s16, 1
    %p55 = scmp.ne.s32.totalorder %s50, %s52
    %p56 = scmp.eq.s32.totalorder %s16, 0
    %p57 = por %p55, %p56
    %p58 = scmp.ne.s32.totalorder %s50, %s52
    %p59 = scmp.eq.s32.totalorder %s21, 1
    %p60 = por %p58, %p59
    %p61 = scmp.ne.s32.totalorder %s52, %s53
    %p62 = scmp.eq.s32.totalorder %s21, 0
    %p63 = por %p61, %p62
    %p64 = scmp.ne.s32.totalorder %s52, %s53
    %p65 = scmp.eq.s32.totalorder %s22, 1
    %p66 = por %p64, %p65
    %p68 = scmp.ne.s32.totalorder %s53, %s67
    %p69 = scmp.eq.s32.totalorder %s22, 0
    %p70 = por %p68, %p69
    %s72 = sadd.s32 %s71, 1
    %p75 = scmp.eq.s32.totalorder %s16, 1
    %p76 = scmp.ne.s32.totalorder %s71, %s73
    %p77 = scmp.eq.s32.totalorder %s16, 0
    %p78 = por %p76, %p77
    %p79 = scmp.ne.s32.totalorder %s71, %s73
    %p80 = scmp.eq.s32.totalorder %s21, 1
    %p81 = por %p79, %p80
    %p82 = scmp.ne.s32.totalorder %s73, %s74
    %p83 = scmp.eq.s32.totalorder %s21, 0
    %p84 = por %p82, %p83
    %p85 = scmp.ne.s32.totalorder %s73, %s74
    %p86 = scmp.eq.s32.totalorder %s22, 1
    %p87 = por %p85, %p86
    %p89 = scmp.ne.s32.totalorder %s74, %s88
    %p90 = scmp.eq.s32.totalorder %s22, 0
    %p91 = por %p89, %p90
    %s93 = sadd.s32 %s92, 1
    %p96 = scmp.eq.s32.totalorder %s16, 1
    %p97 = scmp.ne.s32.totalorder %s92, %s94
    %p98 = scmp.eq.s32.totalorder %s16, 0
    %p99 = por %p97, %p98
    %p100 = scmp.ne.s32.totalorder %s92, %s94
    %p101 = scmp.eq.s32.totalorder %s21, 1
    %p102 = por %p100, %p101
    %p103 = scmp.ne.s32.totalorder %s94, %s95
    %p104 = scmp.eq.s32.totalorder %s21, 0
    %p105 = por %p103, %p104
    %p106 = scmp.ne.s32.totalorder %s94, %s95
    %p107 = scmp.eq.s32.totalorder %s22, 1
    %p108 = por %p106, %p107
    %p110 = scmp.ne.s32.totalorder %s95, %s109
    %p111 = scmp.eq.s32.totalorder %s22, 0
    %p112 = por %p110, %p111
    %s114 = sadd.s32 %s113, 1
    %p117 = scmp.eq.s32.totalorder %s16, 1
    %p118 = scmp.ne.s32.totalorder %s113, %s115
    %p119 = scmp.eq.s32.totalorder %s16, 0
    %p120 = por %p118, %p119
    %p121 = scmp.ne.s32.totalorder %s113, %s115
    %p122 = scmp.eq.s32.totalorder %s21, 1
    %p123 = por %p121, %p122
    %p124 = scmp.ne.s32.totalorder %s115, %s116
    %p125 = scmp.eq.s32.totalorder %s21, 0
    %p126 = por %p124, %p125
    %p127 = scmp.ne.s32.totalorder %s115, %s116
    %p128 = scmp.eq.s32.totalorder %s22, 1
    %p129 = por %p127, %p128
    %p131 = scmp.ne.s32.totalorder %s116, %s130
    %p132 = scmp.eq.s32.totalorder %s22, 0
    %p133 = por %p131, %p132
    %s135 = sadd.s32 %s134, 1
    %p138 = scmp.eq.s32.totalorder %s16, 1
    %p139 = scmp.ne.s32.totalorder %s134, %s136
    %p140 = scmp.eq.s32.totalorder %s16, 0
    %p141 = por %p139, %p140
    %p142 = scmp.ne.s32.totalorder %s134, %s136
    %p143 = scmp.eq.s32.totalorder %s21, 1
    %p144 = por %p142, %p143
    %p145 = scmp.ne.s32.totalorder %s136, %s137
    %p146 = scmp.eq.s32.totalorder %s21, 0
    %p147 = por %p145, %p146
    %p148 = scmp.ne.s32.totalorder %s136, %s137
    %p149 = scmp.eq.s32.totalorder %s22, 1
    %p150 = por %p148, %p149
    %p152 = scmp.ne.s32.totalorder %s137, %s151
    %p153 = scmp.eq.s32.totalorder %s22, 0
    %p154 = por %p152, %p153
    %s156 = sadd.s32 %s155, 1
    %p159 = scmp.eq.s32.totalorder %s16, 1
    %p160 = scmp.ne.s32.totalorder %s155, %s157
    %p161 = scmp.eq.s32.totalorder %s16, 0
    %p162 = por %p160, %p161
    %p163 = scmp.ne.s32.totalorder %s155, %s157
    %p164 = scmp.eq.s32.totalorder %s21, 1
    %p165 = por %p163, %p164
    %p166 = scmp.ne.s32.totalorder %s157, %s158
    %p167 = scmp.eq.s32.totalorder %s21, 0
    %p168 = por %p166, %p167
    %p169 = scmp.ne.s32.totalorder %s157, %s158
    %p170 = scmp.eq.s32.totalorder %s22, 1
    %p171 = por %p169, %p170
    %p173 = scmp.ne.s32.totalorder %s158, %s172
    %p174 = scmp.eq.s32.totalorder %s22, 0
    %p175 = por %p173, %p174
    %s177 = sadd.s32 %s176, 1
    %p180 = scmp.eq.s32.totalorder %s16, 1
    %p181 = scmp.ne.s32.totalorder %s176, %s178
    %p182 = scmp.eq.s32.totalorder %s16, 0
    %p183 = por %p181, %p182
    %p184 = scmp.ne.s32.totalorder %s176, %s178
    %p185 = scmp.eq.s32.totalorder %s21, 1
    %p186 = por %p184, %p185
    %p187 = scmp.ne.s32.totalorder %s178, %s179
    %p188 = scmp.eq.s32.totalorder %s21, 0
    %p189 = por %p187, %p188
    %p190 = scmp.ne.s32.totalorder %s178, %s179
    %p191 = scmp.eq.s32.totalorder %s22, 1
    %p192 = por %p190, %p191
    %p194 = scmp.ne.s32.totalorder %s179, %s193
    %p195 = scmp.eq.s32.totalorder %s22, 0
    %p196 = por %p194, %p195
    %s198 = sadd.s32 %s197, 1
    %p201 = scmp.eq.s32.totalorder %s16, 1
    %p202 = scmp.ne.s32.totalorder %s197, %s199
    %p203 = scmp.eq.s32.totalorder %s16, 0
    %p204 = por %p202, %p203
    %p205 = scmp.ne.s32.totalorder %s197, %s199
    %p206 = scmp.eq.s32.totalorder %s21, 1
    %p207 = por %p205, %p206
    %p208 = scmp.ne.s32.totalorder %s199, %s200
    %p209 = scmp.eq.s32.totalorder %s21, 0
    %p210 = por %p208, %p209
    %p211 = scmp.ne.s32.totalorder %s199, %s200
    %p212 = scmp.eq.s32.totalorder %s22, 1
    %p213 = por %p211, %p212
    %p215 = scmp.ne.s32.totalorder %s200, %s214
    %p216 = scmp.eq.s32.totalorder %s22, 0
    %p217 = por %p215, %p216
    %s219 = sadd.s32 %s218, 1
    %p222 = scmp.eq.s32.totalorder %s16, 1
    %p223 = scmp.ne.s32.totalorder %s218, %s220
    %p224 = scmp.eq.s32.totalorder %s16, 0
    %p225 = por %p223, %p224
    %p226 = scmp.ne.s32.totalorder %s218, %s220
    %p227 = scmp.eq.s32.totalorder %s21, 1
    %p228 = por %p226, %p227
    %p229 = scmp.ne.s32.totalorder %s220, %s221
    %p230 = scmp.eq.s32.totalorder %s21, 0
    %p231 = por %p229, %p230
    %p232 = scmp.ne.s32.totalorder %s220, %s221
    %p233 = scmp.eq.s32.totalorder %s22, 1
    %p234 = por %p232, %p233
    %p236 = scmp.ne.s32.totalorder %s221, %s235
    %p237 = scmp.eq.s32.totalorder %s22, 0
    %p238 = por %p236, %p237
    %s239 = ssub.s32 %s16, %s23
    %p240 = scmp.eq.s32.totalorder %s239, 0
    %s242 = sadd.s32 %s241, 1
    %s243 = scalar_select %p240, %s241, %s242
    %p246 = pneg %p240
    %p247 = scmp.eq.s32.totalorder %s16, 1
    %p248 = por %p246, %p247
    %p249 = scmp.ne.s32.totalorder %s241, %s244
    %p250 = scmp.eq.s32.totalorder %s16, 0
    %p251 = por %p249, %p250
    %p252 = scmp.ne.s32.totalorder %s241, %s244
    %p253 = scmp.eq.s32.totalorder %s21, 1
    %p254 = por %p252, %p253
    %p255 = scmp.ne.s32.totalorder %s244, %s245
    %p256 = scmp.eq.s32.totalorder %s21, 0
    %p257 = por %p255, %p256
    %p258 = scmp.ne.s32.totalorder %s244, %s245
    %p259 = scmp.eq.s32.totalorder %s22, 1
    %p260 = por %p258, %p259
    %p262 = scmp.ne.s32.totalorder %s245, %s261
    %p263 = scmp.eq.s32.totalorder %s22, 0
    %p264 = por %p262, %p263
    %p265 = scmp.le.s32.totalorder 1, %s16
    %p266 = scmp.lt.s32.totalorder %s16, 3
    %p267 = pnand %p265, %p266
    %p268 = pneg %p267
    // Predicated region
    $region9: #{dpt_regression_processor_forward.1} parent=5 // pred_check
      _
    $region10: #{dpt_regression_processor_forward.1} parent=5 // pred_check_branch
      %270 = sbr.rel (%p267) target = $region12
    $region11: #{dpt_regression_processor_forward.1} parent=5 // pred_region
      %s271 = ssub.s32 %s16, 1
      // Predicated region
      $region13: #{dpt_regression_processor_forward.1} parent=11 // pred_check
        %p272 = pneg %p63
      $region14: #{dpt_regression_processor_forward.1} parent=11 // pred_check_branch
        %274 = sbr.rel (%p272) target = $region16
      $region15: #{dpt_regression_processor_forward.1} parent=11 // pred_region
        _
      $region16: #{dpt_regression_processor_forward.1} parent=11 // pred_fallthru
        _
      // Predicated region
      $region17: #{dpt_regression_processor_forward.1} parent=11 // pred_check
        %p275 = pneg %p84
      $region18: #{dpt_regression_processor_forward.1} parent=11 // pred_check_branch
        %277 = sbr.rel (%p275) target = $region20
      $region19: #{dpt_regression_processor_forward.1} parent=11 // pred_region
        _
      $region20: #{dpt_regression_processor_forward.1} parent=11 // pred_fallthru
        _
      // Predicated region
      $region21: #{dpt_regression_processor_forward.1} parent=11 // pred_check
        %p278 = pneg %p105
      $region22: #{dpt_regression_processor_forward.1} parent=11 // pred_check_branch
        %280 = sbr.rel (%p278) target = $region24
      $region23: #{dpt_regression_processor_forward.1} parent=11 // pred_region
        _
      $region24: #{dpt_regression_processor_forward.1} parent=11 // pred_fallthru
        _
      // Predicated region
      $region25: #{dpt_regression_processor_forward.1} parent=11 // pred_check
        %p281 = pneg %p126
      $region26: #{dpt_regression_processor_forward.1} parent=11 // pred_check_branch
        %283 = sbr.rel (%p281) target = $region28
      $region27: #{dpt_regression_processor_forward.1} parent=11 // pred_region
        _
      $region28: #{dpt_regression_processor_forward.1} parent=11 // pred_fallthru
        _
      // Predicated region
      $region29: #{dpt_regression_processor_forward.1} parent=11 // pred_check
        %p284 = pneg %p147
      $region30: #{dpt_regression_processor_forward.1} parent=11 // pred_check_branch
        %286 = sbr.rel (%p284) target = $region32
      $region31: #{dpt_regression_processor_forward.1} parent=11 // pred_region
        _
      $region32: #{dpt_regression_processor_forward.1} parent=11 // pred_fallthru
        _
      // Predicated region
      $region33: #{dpt_regression_processor_forward.1} parent=11 // pred_check
        %p287 = pneg %p168
      $region34: #{dpt_regression_processor_forward.1} parent=11 // pred_check_branch
        %289 = sbr.rel (%p287) target = $region36
      $region35: #{dpt_regression_processor_forward.1} parent=11 // pred_region
        _
      $region36: #{dpt_regression_processor_forward.1} parent=11 // pred_fallthru
        _
      // Predicated region
      $region37: #{dpt_regression_processor_forward.1} parent=11 // pred_check
        %p290 = pneg %p189
      $region38: #{dpt_regression_processor_forward.1} parent=11 // pred_check_branch
        %292 = sbr.rel (%p290) target = $region40
      $region39: #{dpt_regression_processor_forward.1} parent=11 // pred_region
        _
      $region40: #{dpt_regression_processor_forward.1} parent=11 // pred_fallthru
        _
      // Predicated region
      $region41: #{dpt_regression_processor_forward.1} parent=11 // pred_check
        %p293 = pneg %p210
      $region42: #{dpt_regression_processor_forward.1} parent=11 // pred_check_branch
        %295 = sbr.rel (%p293) target = $region44
      $region43: #{dpt_regression_processor_forward.1} parent=11 // pred_region
        _
      $region44: #{dpt_regression_processor_forward.1} parent=11 // pred_fallthru
        _
      // Predicated region
      $region45: #{dpt_regression_processor_forward.1} parent=11 // pred_check
        %p296 = pneg %p231
      $region46: #{dpt_regression_processor_forward.1} parent=11 // pred_check_branch
        %298 = sbr.rel (%p296) target = $region48
      $region47: #{dpt_regression_processor_forward.1} parent=11 // pred_region
        _
      $region48: #{dpt_regression_processor_forward.1} parent=11 // pred_fallthru
        _
    $region12: #{dpt_regression_processor_forward.1} parent=5 // pred_fallthru
      _
    %p299 = scmp.lt.s32.totalorder %s16, 2
    // Predicated region
    $region49: #{dpt_regression_processor_forward.1} parent=5 // pred_check
      %p300 = pneg %p299
    $region50: #{dpt_regression_processor_forward.1} parent=5 // pred_check_branch
      %302 = sbr.rel (%p300) target = $region52
    $region51: #{dpt_regression_processor_forward.1} parent=5 // pred_region
      // Predicated region
      $region53: #{dpt_regression_processor_forward.1} parent=51 // pred_check
        %p303 = pneg %p36
      $region54: #{dpt_regression_processor_forward.1} parent=51 // pred_check_branch
        %305 = sbr.rel (%p303) target = $region56
      $region55: #{dpt_regression_processor_forward.1} parent=51 // pred_region
        %p306 = scmp.lt.s32.totalorder %s16, 1
        %s307 = scalar_select %p306, %s16, 1
        %s308 = smul.addr %s307, 2
        %s309 = smul.addr %s308, 8
        %s310 = scalar_lea.vmem %s0, %s309
      $region56: #{dpt_regression_processor_forward.1} parent=51 // pred_fallthru
        _
    $region52: #{dpt_regression_processor_forward.1} parent=5 // pred_fallthru
      _
    %p311 = scmp.le.s32.totalorder 1, %s16
    %p312 = scmp.lt.s32.totalorder %s16, 3
    %p313 = pnand %p311, %p312
    %p314 = pneg %p313
    // Predicated region
    $region57: #{dpt_regression_processor_forward.1} parent=5 // pred_check
      _
    $region58: #{dpt_regression_processor_forward.1} parent=5 // pred_check_branch
      %316 = sbr.rel (%p313) target = $region60
    $region59: #{dpt_regression_processor_forward.1} parent=5 // pred_region
      %s317 = ssub.s32 %s16, 1
      %p318 = scmp.lt.s32.totalorder %s21, 1
      %s319 = scalar_select %p318, %s21, 1
      %s320 = smul.addr %s319, 2
      %s321 = smul.addr %s320, 8
      %s322 = scalar_lea.vmem %s0, %s321
      %p323 = pneg %p42
      %p324 = pneg %p39
      %p325 = pneg %p63
      %p326 = pneg %p60
      %p327 = pneg %p84
      %p328 = pneg %p81
      %p329 = pneg %p105
      %p330 = pneg %p102
      %p331 = pneg %p126
      %p332 = pneg %p123
      %p333 = pneg %p147
      %p334 = pneg %p144
      %p335 = pneg %p168
      %p336 = pneg %p165
      %p337 = pneg %p189
      %p338 = pneg %p186
      %p339 = pneg %p210
      %p340 = pneg %p207
      %p341 = pneg %p231
      %p342 = pneg %p228
      %p343 = pneg %p257
      %p344 = pneg %p254
      %p345 = scmp.lt.s32.totalorder %s21, 1
      %s346 = scalar_select %p345, %s21, 1
      %s347 = smul.addr %s346, 4
      %s348 = smul.addr %s347, 8
      %s349 = scalar_lea.vmem %s10, %s348
      %p350 = scmp.lt.s32.totalorder %s21, 1
      %s351 = scalar_select %p350, %s21, 1
      %s352 = smul.addr %s351, 2
      %s353 = smul.addr %s352, 8
      %s354 = scalar_lea.vmem %s0, %s353
      %p355 = scmp.lt.s32.totalorder %s21, 1
      %s356 = scalar_select %p355, %s21, 1
      %s357 = smul.addr %s356, 4
      %s358 = smul.addr %s357, 8
      %s359 = scalar_lea.vmem %s10, %s358
      %v361 = vld [vmem:[%s4] sm:$0xf]
      %v362 = vld [vmem:[%s4 + $0x4] sm:$0xf]
      %v363 = vld [vmem:[%s2] sm:$0xf]
      %v364 = vld [vmem:[%s6] sm:$0xf]
      %v365 = vld [vmem:[%s8] sm:$0xf]
      %v366 = vld [vmem:[%s9] sm:$0xff]
      %v367 = vld [vmem:[%s354] sm:$0xff]
      %v368 = vld [vmem:[%s354 + $0x8] sm:$0xff]
      %369 = vrot.lane.b32.xlu0 %v367, 17
      %v370 = vpop.permute.xlu0 %369
      %371 = vrot.lane.b32.xlu0 %v368, 17
      %v372 = vpop.permute.xlu0 %371
      %v373 = vlaneseq
      %v374 = vand.u32 %v373, 127
      %vm375 = vcmp.lt.s32.totalorder %v374, 17
      %v376 = vsel %vm375, %v370, %v372
      %v377 = vsel %vm375, %v372, %v370
      %v378 = vld [vmem:[%s3] ss:$8 sm:$0x3]
      %v380 = vperm.slane %v378, 0
      %v381 = vperm.slane %v378, 1
      %v384 = vmul.f32 %v377, %v380
      %v385 = vmul.f32 %v376, %v381
      %v386 = vpack.c.bf16 %v384, %v384
      %v387 = vpack.c.bf16 %v385, %v385
      %v388 = vld [vmem:[%s1] sm:$0x3]
      %389 = vrot.lane.b32.xlu0 %v367, 16
      %v390 = vpop.permute.xlu0 %389
      %391 = vrot.lane.b32.xlu0 %v368, 16
      %v392 = vpop.permute.xlu0 %391
      %vm393 = vcmp.lt.s32.totalorder %v374, 16
      %v394 = vsel %vm393, %v390, %v392
      %v395 = vsel %vm393, %v392, %v390
      %s396 = scalar_lea.vmem %s3, 1
      %v397 = vld [vmem:[%s396] ss:$8 sm:$0x3]
      %v399 = vperm.slane %v397, 0
      %v400 = vperm.slane %v397, 1
      %v403 = vmul.f32 %v395, %v399
      %v404 = vmul.f32 %v394, %v400
      %v405 = vpack.c.bf16 %v403, %v403
      %v406 = vpack.c.bf16 %v404, %v404
      %s407 = scalar_lea.vmem %s1, 2
      %v408 = vld [vmem:[%s407] sm:$0x3]
      %vm409 = vcmask 64512
      %v411 = vsel %vm409, %v408, 0
      %vm413 = vcmask 1043456
      %v415 = vsel %vm413, %v405, 0
      %v418 = vsel %vm413, %v406, 0
      %420 = vmatpush.bf16.msra.mxu0 0
      %421 = vmatpush.bf16.msra.mxu0 0
      %422 = vmatpush.bf16.msra.mxu0 0
      %423 = vmatpush.bf16.msra.mxu0 0
      %424 = vmatpush.bf16.msra.mxu0 0
      %425 = vmatpush.bf16.msra.mxu0 0
      %426 = vmatpush.bf16.msra.mxu0 0
      %427 = vmatpush.bf16.msra.mxu0 %v415
      %428 = vmatmul.bf16.gmra.mxu0 %v411
      %v429 = vpop.f32.mrf.mxu0
      %v430 = vadd.f32 0.0, %v429
      %v431 = vpop.f32.mrf.mxu0
      %432 = vdwg.mxu0
      %433 = vmatpush.bf16.msra.mxu0 0
      %434 = vmatpush.bf16.msra.mxu0 0
      %435 = vmatpush.bf16.msra.mxu0 0
      %436 = vmatpush.bf16.msra.mxu0 0
      %437 = vmatpush.bf16.msra.mxu0 0
      %438 = vmatpush.bf16.msra.mxu0 0
      %439 = vmatpush.bf16.msra.mxu0 0
      %440 = vmatpush.bf16.msra.mxu0 %v418
      %441 = vmatmul.bf16.gmra.mxu0 %v411
      %v442 = vpop.f32.mrf.mxu0
      %v443 = vadd.f32 0.0, %v442
      %v444 = vpop.f32.mrf.mxu0
      %445 = vdwg.mxu0
      %v447 = vsel %vm409, %v388, 0
      %v450 = vsel %vm413, %v386, 0
      %v453 = vsel %vm413, %v387, 0
      %455 = vmatpush.bf16.msra.mxu0 0
      %456 = vmatpush.bf16.msra.mxu0 0
      %457 = vmatpush.bf16.msra.mxu0 0
      %458 = vmatpush.bf16.msra.mxu0 0
      %459 = vmatpush.bf16.msra.mxu0 0
      %460 = vmatpush.bf16.msra.mxu0 0
      %461 = vmatpush.bf16.msra.mxu0 0
      %462 = vmatpush.bf16.msra.mxu0 %v450
      %463 = vmatmul.bf16.gmra.mxu0 %v447
      %v464 = vpop.f32.mrf.mxu0
      %v465 = vadd.f32 %v430, %v464
      %v466 = vpop.f32.mrf.mxu0
      %467 = vdwg.mxu0
      %468 = vmatpush.bf16.msra.mxu0 0
      %469 = vmatpush.bf16.msra.mxu0 0
      %470 = vmatpush.bf16.msra.mxu0 0
      %471 = vmatpush.bf16.msra.mxu0 0
      %472 = vmatpush.bf16.msra.mxu0 0
      %473 = vmatpush.bf16.msra.mxu0 0
      %474 = vmatpush.bf16.msra.mxu0 0
      %475 = vmatpush.bf16.msra.mxu0 %v453
      %476 = vmatmul.bf16.gmra.mxu0 %v447
      %v477 = vpop.f32.mrf.mxu0
      %v478 = vadd.f32 %v443, %v477
      %v479 = vpop.f32.mrf.mxu0
      %480 = vdwg.mxu0
      %481 = vrot.lane.b32.xlu0 %v367, 15
      %v482 = vpop.permute.xlu0 %481
      %483 = vrot.lane.b32.xlu0 %v368, 15
      %v484 = vpop.permute.xlu0 %483
      %vm485 = vcmp.lt.s32.totalorder %v374, 15
      %v486 = vsel %vm485, %v482, %v484
      %v487 = vsel %vm485, %v484, %v482
      %s488 = scalar_lea.vmem %s3, 2
      %v489 = vld [vmem:[%s488] ss:$8 sm:$0x3]
      %v491 = vperm.slane %v489, 0
      %v492 = vperm.slane %v489, 1
      %v495 = vmul.f32 %v487, %v491
      %v496 = vmul.f32 %v486, %v492
      %v497 = vpack.c.bf16 %v495, %v495
      %v498 = vpack.c.bf16 %v496, %v496
      %s499 = scalar_lea.vmem %s1, 4
      %v500 = vld [vmem:[%s499] sm:$0x3]
      %v502 = vsel %vm409, %v500, 0
      %v505 = vsel %vm413, %v497, 0
      %v508 = vsel %vm413, %v498, 0
      %510 = vmatpush.bf16.msra.mxu0 0
      %511 = vmatpush.bf16.msra.mxu0 0
      %512 = vmatpush.bf16.msra.mxu0 0
      %513 = vmatpush.bf16.msra.mxu0 0
      %514 = vmatpush.bf16.msra.mxu0 0
      %515 = vmatpush.bf16.msra.mxu0 0
      %516 = vmatpush.bf16.msra.mxu0 0
      %517 = vmatpush.bf16.msra.mxu0 %v505
      %518 = vmatmul.bf16.gmra.mxu0 %v502
      %v519 = vpop.f32.mrf.mxu0
      %v520 = vadd.f32 0.0, %v519
      %v521 = vpop.f32.mrf.mxu0
      %522 = vdwg.mxu0
      %523 = vmatpush.bf16.msra.mxu0 0
      %524 = vmatpush.bf16.msra.mxu0 0
      %525 = vmatpush.bf16.msra.mxu0 0
      %526 = vmatpush.bf16.msra.mxu0 0
      %527 = vmatpush.bf16.msra.mxu0 0
      %528 = vmatpush.bf16.msra.mxu0 0
      %529 = vmatpush.bf16.msra.mxu0 0
      %530 = vmatpush.bf16.msra.mxu0 %v508
      %531 = vmatmul.bf16.gmra.mxu0 %v502
      %v532 = vpop.f32.mrf.mxu0
      %v533 = vadd.f32 0.0, %v532
      %v534 = vpop.f32.mrf.mxu0
      %535 = vdwg.mxu0
      %v536 = vadd.f32 %v465, %v520
      %v537 = vadd.f32 %v478, %v533
      %538 = vrot.lane.b32.xlu0 %v367, 1
      %v539 = vpop.permute.xlu0 %538
      %540 = vrot.lane.b32.xlu0 %v368, 1
      %v541 = vpop.permute.xlu0 %540
      %vm542 = vcmp.lt.s32.totalorder %v374, 1
      %v543 = vsel %vm542, %v539, %v541
      %v544 = vsel %vm542, %v541, %v539
      %s545 = scalar_lea.vmem %s3, 3
      %v546 = vld [vmem:[%s545] ss:$8 sm:$0x3]
      %v548 = vperm.slane %v546, 0
      %v549 = vperm.slane %v546, 1
      %v552 = vmul.f32 %v544, %v548
      %v553 = vmul.f32 %v543, %v549
      %v554 = vpack.c.bf16 %v552, %v552
      %v555 = vpack.c.bf16 %v553, %v553
      %s556 = scalar_lea.vmem %s1, 6
      %v557 = vld [vmem:[%s556] sm:$0x3]
      %v559 = vsel %vm409, %v557, 0
      %v562 = vsel %vm413, %v554, 0
      %v565 = vsel %vm413, %v555, 0
      %567 = vmatpush.bf16.msra.mxu0 0
      %568 = vmatpush.bf16.msra.mxu0 0
      %569 = vmatpush.bf16.msra.mxu0 0
      %570 = vmatpush.bf16.msra.mxu0 0
      %571 = vmatpush.bf16.msra.mxu0 0
      %572 = vmatpush.bf16.msra.mxu0 0
      %573 = vmatpush.bf16.msra.mxu0 0
      %574 = vmatpush.bf16.msra.mxu0 %v562
      %575 = vmatmul.bf16.gmra.mxu0 %v559
      %v576 = vpop.f32.mrf.mxu0
      %v577 = vadd.f32 0.0, %v576
      %v578 = vpop.f32.mrf.mxu0
      %579 = vdwg.mxu0
      %580 = vmatpush.bf16.msra.mxu0 0
      %581 = vmatpush.bf16.msra.mxu0 0
      %582 = vmatpush.bf16.msra.mxu0 0
      %583 = vmatpush.bf16.msra.mxu0 0
      %584 = vmatpush.bf16.msra.mxu0 0
      %585 = vmatpush.bf16.msra.mxu0 0
      %586 = vmatpush.bf16.msra.mxu0 0
      %587 = vmatpush.bf16.msra.mxu0 %v565
      %588 = vmatmul.bf16.gmra.mxu0 %v559
      %v589 = vpop.f32.mrf.mxu0
      %v590 = vadd.f32 0.0, %v589
      %v591 = vpop.f32.mrf.mxu0
      %592 = vdwg.mxu0
      %v593 = vadd.f32 %v536, %v577
      %v594 = vadd.f32 %v537, %v590
      %s595 = scalar_lea.vmem %s3, 4
      %v596 = vld [vmem:[%s595] ss:$8 sm:$0x3]
      %v598 = vperm.slane %v596, 0
      %v599 = vperm.slane %v596, 1
      %v602 = vmul.f32 %v367, %v598
      %v603 = vmul.f32 %v368, %v599
      %v604 = vpack.c.bf16 %v602, %v602
      %v605 = vpack.c.bf16 %v603, %v603
      %s606 = scalar_lea.vmem %s1, 8
      %v607 = vld [vmem:[%s606] sm:$0x3]
      %v609 = vsel %vm409, %v607, 0
      %v612 = vsel %vm413, %v604, 0
      %v615 = vsel %vm413, %v605, 0
      %617 = vmatpush.bf16.msra.mxu0 0
      %618 = vmatpush.bf16.msra.mxu0 0
      %619 = vmatpush.bf16.msra.mxu0 0
      %620 = vmatpush.bf16.msra.mxu0 0
      %621 = vmatpush.bf16.msra.mxu0 0
      %622 = vmatpush.bf16.msra.mxu0 0
      %623 = vmatpush.bf16.msra.mxu0 0
      %624 = vmatpush.bf16.msra.mxu0 %v612
      %625 = vmatmul.bf16.gmra.mxu0 %v609
      %v626 = vpop.f32.mrf.mxu0
      %v627 = vadd.f32 0.0, %v626
      %v628 = vpop.f32.mrf.mxu0
      %629 = vdwg.mxu0
      %630 = vmatpush.bf16.msra.mxu0 0
      %631 = vmatpush.bf16.msra.mxu0 0
      %632 = vmatpush.bf16.msra.mxu0 0
      %633 = vmatpush.bf16.msra.mxu0 0
      %634 = vmatpush.bf16.msra.mxu0 0
      %635 = vmatpush.bf16.msra.mxu0 0
      %636 = vmatpush.bf16.msra.mxu0 0
      %637 = vmatpush.bf16.msra.mxu0 %v615
      %638 = vmatmul.bf16.gmra.mxu0 %v609
      %v639 = vpop.f32.mrf.mxu0
      %v640 = vadd.f32 0.0, %v639
      %v641 = vpop.f32.mrf.mxu0
      %642 = vdwg.mxu0
      %v643 = vadd.f32 %v593, %v627
      %v644 = vadd.f32 %v594, %v640
      %645 = vrot.lane.b32.xlu0 %v367, 127
      %v646 = vpop.permute.xlu0 %645
      %647 = vrot.lane.b32.xlu0 %v368, 127
      %v648 = vpop.permute.xlu0 %647
      %vm649 = vcmp.lt.s32.totalorder %v374, 127
      %v650 = vsel %vm649, %v646, %v648
      %v651 = vsel %vm649, %v648, %v646
      %s652 = scalar_lea.vmem %s3, 5
      %v653 = vld [vmem:[%s652] ss:$8 sm:$0x3]
      %v655 = vperm.slane %v653, 0
      %v656 = vperm.slane %v653, 1
      %v659 = vmul.f32 %v650, %v655
      %v660 = vmul.f32 %v651, %v656
      %v661 = vpack.c.bf16 %v659, %v659
      %v662 = vpack.c.bf16 %v660, %v660
      %s663 = scalar_lea.vmem %s1, 10
      %v664 = vld [vmem:[%s663] sm:$0x3]
      %v666 = vsel %vm409, %v664, 0
      %v669 = vsel %vm413, %v661, 0
      %v672 = vsel %vm413, %v662, 0
      %674 = vmatpush.bf16.msra.mxu0 0
      %675 = vmatpush.bf16.msra.mxu0 0
      %676 = vmatpush.bf16.msra.mxu0 0
      %677 = vmatpush.bf16.msra.mxu0 0
      %678 = vmatpush.bf16.msra.mxu0 0
      %679 = vmatpush.bf16.msra.mxu0 0
      %680 = vmatpush.bf16.msra.mxu0 0
      %681 = vmatpush.bf16.msra.mxu0 %v669
      %682 = vmatmul.bf16.gmra.mxu0 %v666
      %v683 = vpop.f32.mrf.mxu0
      %v684 = vadd.f32 0.0, %v683
      %v685 = vpop.f32.mrf.mxu0
      %686 = vdwg.mxu0
      %687 = vmatpush.bf16.msra.mxu0 0
      %688 = vmatpush.bf16.msra.mxu0 0
      %689 = vmatpush.bf16.msra.mxu0 0
      %690 = vmatpush.bf16.msra.mxu0 0
      %691 = vmatpush.bf16.msra.mxu0 0
      %692 = vmatpush.bf16.msra.mxu0 0
      %693 = vmatpush.bf16.msra.mxu0 0
      %694 = vmatpush.bf16.msra.mxu0 %v672
      %695 = vmatmul.bf16.gmra.mxu0 %v666
      %v696 = vpop.f32.mrf.mxu0
      %v697 = vadd.f32 0.0, %v696
      %v698 = vpop.f32.mrf.mxu0
      %699 = vdwg.mxu0
      %v700 = vadd.f32 %v643, %v684
      %v701 = vadd.f32 %v644, %v697
      %702 = vrot.lane.b32.xlu0 %v367, 113
      %v703 = vpop.permute.xlu0 %702
      %704 = vrot.lane.b32.xlu0 %v368, 113
      %v705 = vpop.permute.xlu0 %704
      %vm706 = vcmp.lt.s32.totalorder %v374, 113
      %v707 = vsel %vm706, %v703, %v705
      %v708 = vsel %vm706, %v705, %v703
      %s709 = scalar_lea.vmem %s3, 6
      %v710 = vld [vmem:[%s709] ss:$8 sm:$0x3]
      %v712 = vperm.slane %v710, 0
      %v713 = vperm.slane %v710, 1
      %v716 = vmul.f32 %v707, %v712
      %v717 = vmul.f32 %v708, %v713
      %v718 = vpack.c.bf16 %v716, %v716
      %v719 = vpack.c.bf16 %v717, %v717
      %s720 = scalar_lea.vmem %s1, 12
      %v721 = vld [vmem:[%s720] sm:$0x3]
      %v723 = vsel %vm409, %v721, 0
      %v726 = vsel %vm413, %v718, 0
      %v729 = vsel %vm413, %v719, 0
      %731 = vmatpush.bf16.msra.mxu0 0
      %732 = vmatpush.bf16.msra.mxu0 0
      %733 = vmatpush.bf16.msra.mxu0 0
      %734 = vmatpush.bf16.msra.mxu0 0
      %735 = vmatpush.bf16.msra.mxu0 0
      %736 = vmatpush.bf16.msra.mxu0 0
      %737 = vmatpush.bf16.msra.mxu0 0
      %738 = vmatpush.bf16.msra.mxu0 %v726
      %739 = vmatmul.bf16.gmra.mxu0 %v723
      %v740 = vpop.f32.mrf.mxu0
      %v741 = vadd.f32 0.0, %v740
      %v742 = vpop.f32.mrf.mxu0
      %743 = vdwg.mxu0
      %744 = vmatpush.bf16.msra.mxu0 0
      %745 = vmatpush.bf16.msra.mxu0 0
      %746 = vmatpush.bf16.msra.mxu0 0
      %747 = vmatpush.bf16.msra.mxu0 0
      %748 = vmatpush.bf16.msra.mxu0 0
      %749 = vmatpush.bf16.msra.mxu0 0
      %750 = vmatpush.bf16.msra.mxu0 0
      %751 = vmatpush.bf16.msra.mxu0 %v729
      %752 = vmatmul.bf16.gmra.mxu0 %v723
      %v753 = vpop.f32.mrf.mxu0
      %v754 = vadd.f32 0.0, %v753
      %v755 = vpop.f32.mrf.mxu0
      %756 = vdwg.mxu0
      %v757 = vadd.f32 %v700, %v741
      %v758 = vadd.f32 %v701, %v754
      %759 = vrot.lane.b32.xlu0 %v367, 112
      %v760 = vpop.permute.xlu0 %759
      %761 = vrot.lane.b32.xlu0 %v368, 112
      %v762 = vpop.permute.xlu0 %761
      %vm763 = vcmp.lt.s32.totalorder %v374, 112
      %v764 = vsel %vm763, %v760, %v762
      %v765 = vsel %vm763, %v762, %v760
      %s766 = scalar_lea.vmem %s3, 7
      %v767 = vld [vmem:[%s766] ss:$8 sm:$0x3]
      %v769 = vperm.slane %v767, 0
      %v770 = vperm.slane %v767, 1
      %v773 = vmul.f32 %v764, %v769
      %v774 = vmul.f32 %v765, %v770
      %v775 = vpack.c.bf16 %v773, %v773
      %v776 = vpack.c.bf16 %v774, %v774
      %s777 = scalar_lea.vmem %s1, 14
      %v778 = vld [vmem:[%s777] sm:$0x3]
      %v780 = vsel %vm409, %v778, 0
      %v783 = vsel %vm413, %v775, 0
      %v786 = vsel %vm413, %v776, 0
      %788 = vmatpush.bf16.msra.mxu0 0
      %789 = vmatpush.bf16.msra.mxu0 0
      %790 = vmatpush.bf16.msra.mxu0 0
      %791 = vmatpush.bf16.msra.mxu0 0
      %792 = vmatpush.bf16.msra.mxu0 0
      %793 = vmatpush.bf16.msra.mxu0 0
      %794 = vmatpush.bf16.msra.mxu0 0
      %795 = vmatpush.bf16.msra.mxu0 %v783
      %796 = vmatmul.bf16.gmra.mxu0 %v780
      %v797 = vpop.f32.mrf.mxu0
      %v798 = vadd.f32 0.0, %v797
      %v799 = vpop.f32.mrf.mxu0
      %800 = vdwg.mxu0
      %801 = vmatpush.bf16.msra.mxu0 0
      %802 = vmatpush.bf16.msra.mxu0 0
      %803 = vmatpush.bf16.msra.mxu0 0
      %804 = vmatpush.bf16.msra.mxu0 0
      %805 = vmatpush.bf16.msra.mxu0 0
      %806 = vmatpush.bf16.msra.mxu0 0
      %807 = vmatpush.bf16.msra.mxu0 0
      %808 = vmatpush.bf16.msra.mxu0 %v786
      %809 = vmatmul.bf16.gmra.mxu0 %v780
      %v810 = vpop.f32.mrf.mxu0
      %v811 = vadd.f32 0.0, %v810
      %v812 = vpop.f32.mrf.mxu0
      %813 = vdwg.mxu0
      %v814 = vadd.f32 %v757, %v798
      %v815 = vadd.f32 %v758, %v811
      %816 = vrot.lane.b32.xlu0 %v367, 111
      %v817 = vpop.permute.xlu0 %816
      %818 = vrot.lane.b32.xlu0 %v368, 111
      %v819 = vpop.permute.xlu0 %818
      %vm820 = vcmp.lt.s32.totalorder %v374, 111
      %v821 = vsel %vm820, %v817, %v819
      %v822 = vsel %vm820, %v819, %v817
      %s823 = scalar_lea.vmem %s3, 16
      %v824 = vld [vmem:[%s823] ss:$8 sm:$0x3]
      %v826 = vperm.slane %v824, 0
      %v827 = vperm.slane %v824, 1
      %v830 = vmul.f32 %v821, %v826
      %v831 = vmul.f32 %v822, %v827
      %v832 = vpack.c.bf16 %v830, %v830
      %v833 = vpack.c.bf16 %v831, %v831
      %s834 = scalar_lea.vmem %s1, 16
      %v835 = vld [vmem:[%s834] sm:$0x3]
      %v837 = vsel %vm409, %v835, 0
      %v840 = vsel %vm413, %v832, 0
      %v843 = vsel %vm413, %v833, 0
      %845 = vmatpush.bf16.msra.mxu0 0
      %846 = vmatpush.bf16.msra.mxu0 0
      %847 = vmatpush.bf16.msra.mxu0 0
      %848 = vmatpush.bf16.msra.mxu0 0
      %849 = vmatpush.bf16.msra.mxu0 0
      %850 = vmatpush.bf16.msra.mxu0 0
      %851 = vmatpush.bf16.msra.mxu0 0
      %852 = vmatpush.bf16.msra.mxu0 %v840
      %853 = vmatmul.bf16.gmra.mxu0 %v837
      %v854 = vpop.f32.mrf.mxu0
      %v855 = vadd.f32 0.0, %v854
      %v856 = vpop.f32.mrf.mxu0
      %857 = vdwg.mxu0
      %858 = vmatpush.bf16.msra.mxu0 0
      %859 = vmatpush.bf16.msra.mxu0 0
      %860 = vmatpush.bf16.msra.mxu0 0
      %861 = vmatpush.bf16.msra.mxu0 0
      %862 = vmatpush.bf16.msra.mxu0 0
      %863 = vmatpush.bf16.msra.mxu0 0
      %864 = vmatpush.bf16.msra.mxu0 0
      %865 = vmatpush.bf16.msra.mxu0 %v843
      %866 = vmatmul.bf16.gmra.mxu0 %v837
      %v867 = vpop.f32.mrf.mxu0
      %v868 = vadd.f32 0.0, %v867
      %v869 = vpop.f32.mrf.mxu0
      %870 = vdwg.mxu0
      %v871 = vadd.f32 %v814, %v855
      %v872 = vadd.f32 %v815, %v868
      %874 = vset.pattern.permute.xlu0 0
      %875 = vperm.xlu0 %874, %v363
      %v876 = vpop.permute.xlu0 %875
      %v878 = vadd.f32 %v871, %v876
      %v879 = vadd.f32 %v872, %v876
      %v880 = vpack.c.bf16 %v878, %v878
      %v883 = vunpack.c.l.b16 %v361
      %v884 = vunpack.c.l.b16 %v362
      %v885 = vpack.c.b16 %v884, %v883
      %vm887 = vcmask 130048
      %v889 = vsel %vm887, %v880, 0
      %891 = vmatpush.bf16.msra.mxu0 0
      %892 = vmatpush.bf16.msra.mxu0 0
      %893 = vmatpush.bf16.msra.mxu0 0
      %894 = vmatpush.bf16.msra.mxu0 0
      %895 = vmatpush.bf16.msra.mxu0 0
      %896 = vmatpush.bf16.msra.mxu0 0
      %897 = vmatpush.bf16.msra.mxu0 0
      %898 = vmatpush.bf16.msra.mxu0 %v885
      %899 = vmatmul.bf16.gmra.mxu0 %v889
      %v900 = vpop.f32.mrf.mxu0
      %v901 = vadd.f32 0.0, %v900
      %v902 = vpop.f32.mrf.mxu0
      %903 = vdwg.mxu0
      %v904 = vmul.f32 %v878, 0.21052632
      %v905 = vmul.f32 %v878, 0.7894737
      %907 = vrot.lane.b32.xlu0 %v905, 112
      %v908 = vpop.permute.xlu0 %907
      %v910 = vadd.f32 %v904, %v908
      %v911 = vpack.c.bf16 %v910, %v910
      %v913 = vsel %vm887, %v911, 0
      %915 = vmatpush.bf16.msra.mxu0 0
      %916 = vmatpush.bf16.msra.mxu0 0
      %917 = vmatpush.bf16.msra.mxu0 0
      %918 = vmatpush.bf16.msra.mxu0 0
      %919 = vmatpush.bf16.msra.mxu0 0
      %920 = vmatpush.bf16.msra.mxu0 0
      %921 = vmatpush.bf16.msra.mxu0 0
      %922 = vmatpush.bf16.msra.mxu0 %v885
      %923 = vmatmul.bf16.gmra.mxu0 %v913
      %v924 = vpop.f32.mrf.mxu0
      %v925 = vadd.f32 0.0, %v924
      %v926 = vpop.f32.mrf.mxu0
      %927 = vdwg.mxu0
      %v928 = vmul.f32 %v878, 0.42105263
      %v929 = vmul.f32 %v878, 0.57894737
      %931 = vrot.lane.b32.xlu0 %v929, 112
      %v932 = vpop.permute.xlu0 %931
      %v934 = vadd.f32 %v928, %v932
      %v935 = vpack.c.bf16 %v934, %v934
      %937 = vrot.lane.b32.xlu0 %v935, 112
      %v938 = vpop.permute.xlu0 %937
      %v940 = vsel %vm887, %v938, 0
      %942 = vmatpush.bf16.msra.mxu0 0
      %943 = vmatpush.bf16.msra.mxu0 0
      %944 = vmatpush.bf16.msra.mxu0 0
      %945 = vmatpush.bf16.msra.mxu0 0
      %946 = vmatpush.bf16.msra.mxu0 0
      %947 = vmatpush.bf16.msra.mxu0 0
      %948 = vmatpush.bf16.msra.mxu0 0
      %949 = vmatpush.bf16.msra.mxu0 %v885
      %950 = vmatmul.bf16.gmra.mxu0 %v940
      %v951 = vpop.f32.mrf.mxu0
      %v952 = vadd.f32 0.0, %v951
      %v953 = vpop.f32.mrf.mxu0
      %954 = vdwg.mxu0
      %v955 = vmul.f32 %v878, 0.6315789
      %v956 = vmul.f32 %v878, 0.36842105
      %958 = vrot.lane.b32.xlu0 %v956, 112
      %v959 = vpop.permute.xlu0 %958
      %v961 = vadd.f32 %v955, %v959
      %v962 = vpack.c.bf16 %v961, %v961
      %964 = vrot.lane.b32.xlu0 %v962, 96
      %v965 = vpop.permute.xlu0 %964
      %v967 = vsel %vm887, %v965, 0
      %969 = vmatpush.bf16.msra.mxu0 0
      %970 = vmatpush.bf16.msra.mxu0 0
      %971 = vmatpush.bf16.msra.mxu0 0
      %972 = vmatpush.bf16.msra.mxu0 0
      %973 = vmatpush.bf16.msra.mxu0 0
      %974 = vmatpush.bf16.msra.mxu0 0
      %975 = vmatpush.bf16.msra.mxu0 0
      %976 = vmatpush.bf16.msra.mxu0 %v885
      %977 = vmatmul.bf16.gmra.mxu0 %v967
      %v978 = vpop.f32.mrf.mxu0
      %v979 = vadd.f32 0.0, %v978
      %v980 = vpop.f32.mrf.mxu0
      %981 = vdwg.mxu0
      %v982 = vmul.f32 %v878, 0.84210527
      %v983 = vmul.f32 %v878, 0.15789473
      %985 = vrot.lane.b32.xlu0 %v983, 112
      %v986 = vpop.permute.xlu0 %985
      %v988 = vadd.f32 %v982, %v986
      %v989 = vpack.c.bf16 %v988, %v988
      %991 = vrot.lane.b32.xlu0 %v989, 80
      %v992 = vpop.permute.xlu0 %991
      %v994 = vsel %vm887, %v992, 0
      %996 = vmatpush.bf16.msra.mxu0 0
      %997 = vmatpush.bf16.msra.mxu0 0
      %998 = vmatpush.bf16.msra.mxu0 0
      %999 = vmatpush.bf16.msra.mxu0 0
      %1000 = vmatpush.bf16.msra.mxu0 0
      %1001 = vmatpush.bf16.msra.mxu0 0
      %1002 = vmatpush.bf16.msra.mxu0 0
      %1003 = vmatpush.bf16.msra.mxu0 %v885
      %1004 = vmatmul.bf16.gmra.mxu0 %v994
      %v1005 = vpop.f32.mrf.mxu0
      %v1006 = vadd.f32 0.0, %v1005
      %v1007 = vpop.f32.mrf.mxu0
      %1008 = vdwg.mxu0
      %v1009 = vmul.f32 %v878, 0.05263158
      %v1010 = vmul.f32 %v878, 0.94736844
      %1012 = vrot.lane.b32.xlu0 %v1010, 112
      %v1013 = vpop.permute.xlu0 %1012
      %v1015 = vadd.f32 %v1009, %v1013
      %v1016 = vpack.c.bf16 %v1015, %v1015
      %1018 = vrot.lane.b32.xlu0 %v1016, 80
      %v1019 = vpop.permute.xlu0 %1018
      %v1021 = vsel %vm887, %v1019, 0
      %1023 = vmatpush.bf16.msra.mxu0 0
      %1024 = vmatpush.bf16.msra.mxu0 0
      %1025 = vmatpush.bf16.msra.mxu0 0
      %1026 = vmatpush.bf16.msra.mxu0 0
      %1027 = vmatpush.bf16.msra.mxu0 0
      %1028 = vmatpush.bf16.msra.mxu0 0
      %1029 = vmatpush.bf16.msra.mxu0 0
      %1030 = vmatpush.bf16.msra.mxu0 %v885
      %1031 = vmatmul.bf16.gmra.mxu0 %v1021
      %v1032 = vpop.f32.mrf.mxu0
      %v1033 = vadd.f32 0.0, %v1032
      %v1034 = vpop.f32.mrf.mxu0
      %1035 = vdwg.mxu0
      %v1036 = vmul.f32 %v878, 0.2631579
      %v1037 = vmul.f32 %v878, 0.7368421
      %1039 = vrot.lane.b32.xlu0 %v1037, 112
      %v1040 = vpop.permute.xlu0 %1039
      %v1042 = vadd.f32 %v1036, %v1040
      %v1043 = vpack.c.bf16 %v1042, %v1042
      %1045 = vrot.lane.b32.xlu0 %v1043, 64
      %v1046 = vpop.permute.xlu0 %1045
      %v1048 = vsel %vm887, %v1046, 0
      %1050 = vmatpush.bf16.msra.mxu0 0
      %1051 = vmatpush.bf16.msra.mxu0 0
      %1052 = vmatpush.bf16.msra.mxu0 0
      %1053 = vmatpush.bf16.msra.mxu0 0
      %1054 = vmatpush.bf16.msra.mxu0 0
      %1055 = vmatpush.bf16.msra.mxu0 0
      %1056 = vmatpush.bf16.msra.mxu0 0
      %1057 = vmatpush.bf16.msra.mxu0 %v885
      %1058 = vmatmul.bf16.gmra.mxu0 %v1048
      %v1059 = vpop.f32.mrf.mxu0
      %v1060 = vadd.f32 0.0, %v1059
      %v1061 = vpop.f32.mrf.mxu0
      %1062 = vdwg.mxu0
      %v1063 = vmul.f32 %v878, 0.47368422
      %v1064 = vmul.f32 %v878, 0.5263158
      %1066 = vrot.lane.b32.xlu0 %v1064, 112
      %v1067 = vpop.permute.xlu0 %1066
      %v1069 = vadd.f32 %v1063, %v1067
      %v1070 = vpack.c.bf16 %v1069, %v1069
      %1072 = vrot.lane.b32.xlu0 %v1070, 48
      %v1073 = vpop.permute.xlu0 %1072
      %v1075 = vsel %vm887, %v1073, 0
      %1077 = vmatpush.bf16.msra.mxu0 0
      %1078 = vmatpush.bf16.msra.mxu0 0
      %1079 = vmatpush.bf16.msra.mxu0 0
      %1080 = vmatpush.bf16.msra.mxu0 0
      %1081 = vmatpush.bf16.msra.mxu0 0
      %1082 = vmatpush.bf16.msra.mxu0 0
      %1083 = vmatpush.bf16.msra.mxu0 0
      %1084 = vmatpush.bf16.msra.mxu0 %v885
      %1085 = vmatmul.bf16.gmra.mxu0 %v1075
      %v1086 = vpop.f32.mrf.mxu0
      %v1087 = vadd.f32 0.0, %v1086
      %v1088 = vpop.f32.mrf.mxu0
      %1089 = vdwg.mxu0
      %v1090 = vmul.f32 %v878, 0.68421054
      %v1091 = vmul.f32 %v878, 0.31578946
      %1093 = vrot.lane.b32.xlu0 %v1091, 112
      %v1094 = vpop.permute.xlu0 %1093
      %v1096 = vadd.f32 %v1090, %v1094
      %v1097 = vpack.c.bf16 %v1096, %v1096
      %1099 = vrot.lane.b32.xlu0 %v1097, 32
      %v1100 = vpop.permute.xlu0 %1099
      %v1102 = vsel %vm887, %v1100, 0
      %1104 = vmatpush.bf16.msra.mxu0 0
      %1105 = vmatpush.bf16.msra.mxu0 0
      %1106 = vmatpush.bf16.msra.mxu0 0
      %1107 = vmatpush.bf16.msra.mxu0 0
      %1108 = vmatpush.bf16.msra.mxu0 0
      %1109 = vmatpush.bf16.msra.mxu0 0
      %1110 = vmatpush.bf16.msra.mxu0 0
      %1111 = vmatpush.bf16.msra.mxu0 %v885
      %1112 = vmatmul.bf16.gmra.mxu0 %v1102
      %v1113 = vpop.f32.mrf.mxu0
      %v1114 = vadd.f32 0.0, %v1113
      %v1115 = vpop.f32.mrf.mxu0
      %1116 = vdwg.mxu0
      %v1117 = vmul.f32 %v878, 0.8947368
      %v1118 = vmul.f32 %v879, 0.10526316
      %1120 = vrot.lane.b32.xlu0 %v1118, 112
      %v1121 = vpop.permute.xlu0 %1120
      %v1123 = vadd.f32 %v1117, %v1121
      %v1124 = vpack.c.bf16 %v1123, %v1123
      %1126 = vrot.lane.b32.xlu0 %v1124, 16
      %v1127 = vpop.permute.xlu0 %1126
      %v1129 = vsel %vm887, %v1127, 0
      %1131 = vmatpush.bf16.msra.mxu0 0
      %1132 = vmatpush.bf16.msra.mxu0 0
      %1133 = vmatpush.bf16.msra.mxu0 0
      %1134 = vmatpush.bf16.msra.mxu0 0
      %1135 = vmatpush.bf16.msra.mxu0 0
      %1136 = vmatpush.bf16.msra.mxu0 0
      %1137 = vmatpush.bf16.msra.mxu0 0
      %1138 = vmatpush.bf16.msra.mxu0 %v885
      %1139 = vmatmul.bf16.gmra.mxu0 %v1129
      %v1140 = vpop.f32.mrf.mxu0
      %v1141 = vadd.f32 0.0, %v1140
      %v1142 = vpop.f32.mrf.mxu0
      %1143 = vdwg.mxu0
      %v1144 = vmul.f32 %v878, 0.10526316
      %v1145 = vmul.f32 %v879, 0.8947368
      %1147 = vrot.lane.b32.xlu0 %v1145, 112
      %v1148 = vpop.permute.xlu0 %1147
      %v1150 = vadd.f32 %v1144, %v1148
      %v1151 = vpack.c.bf16 %v1150, %v1150
      %1153 = vrot.lane.b32.xlu0 %v1151, 16
      %v1154 = vpop.permute.xlu0 %1153
      %v1156 = vsel %vm887, %v1154, 0
      %1158 = vmatpush.bf16.msra.mxu0 0
      %1159 = vmatpush.bf16.msra.mxu0 0
      %1160 = vmatpush.bf16.msra.mxu0 0
      %1161 = vmatpush.bf16.msra.mxu0 0
      %1162 = vmatpush.bf16.msra.mxu0 0
      %1163 = vmatpush.bf16.msra.mxu0 0
      %1164 = vmatpush.bf16.msra.mxu0 0
      %1165 = vmatpush.bf16.msra.mxu0 %v885
      %1166 = vmatmul.bf16.gmra.mxu0 %v1156
      %v1167 = vpop.f32.mrf.mxu0
      %v1168 = vadd.f32 0.0, %v1167
      %v1169 = vpop.f32.mrf.mxu0
      %1170 = vdwg.mxu0
      %v1171 = vmul.f32 %v879, 0.31578946
      %v1172 = vmul.f32 %v879, 0.68421054
      %1174 = vrot.lane.b32.xlu0 %v1172, 112
      %v1175 = vpop.permute.xlu0 %1174
      %v1177 = vadd.f32 %v1171, %v1175
      %v1178 = vpack.c.bf16 %v1177, %v1177
      %v1180 = vsel %vm887, %v1178, 0
      %1182 = vmatpush.bf16.msra.mxu0 0
      %1183 = vmatpush.bf16.msra.mxu0 0
      %1184 = vmatpush.bf16.msra.mxu0 0
      %1185 = vmatpush.bf16.msra.mxu0 0
      %1186 = vmatpush.bf16.msra.mxu0 0
      %1187 = vmatpush.bf16.msra.mxu0 0
      %1188 = vmatpush.bf16.msra.mxu0 0
      %1189 = vmatpush.bf16.msra.mxu0 %v885
      %1190 = vmatmul.bf16.gmra.mxu0 %v1180
      %v1191 = vpop.f32.mrf.mxu0
      %v1192 = vadd.f32 0.0, %v1191
      %v1193 = vpop.f32.mrf.mxu0
      %1194 = vdwg.mxu0
      %v1195 = vmul.f32 %v879, 0.5263158
      %v1196 = vmul.f32 %v879, 0.47368422
      %1198 = vrot.lane.b32.xlu0 %v1196, 112
      %v1199 = vpop.permute.xlu0 %1198
      %v1201 = vadd.f32 %v1195, %v1199
      %v1202 = vpack.c.bf16 %v1201, %v1201
      %1204 = vrot.lane.b32.xlu0 %v1202, 112
      %v1205 = vpop.permute.xlu0 %1204
      %v1207 = vsel %vm887, %v1205, 0
      %1209 = vmatpush.bf16.msra.mxu0 0
      %1210 = vmatpush.bf16.msra.mxu0 0
      %1211 = vmatpush.bf16.msra.mxu0 0
      %1212 = vmatpush.bf16.msra.mxu0 0
      %1213 = vmatpush.bf16.msra.mxu0 0
      %1214 = vmatpush.bf16.msra.mxu0 0
      %1215 = vmatpush.bf16.msra.mxu0 0
      %1216 = vmatpush.bf16.msra.mxu0 %v885
      %1217 = vmatmul.bf16.gmra.mxu0 %v1207
      %v1218 = vpop.f32.mrf.mxu0
      %v1219 = vadd.f32 0.0, %v1218
      %v1220 = vpop.f32.mrf.mxu0
      %1221 = vdwg.mxu0
      %v1222 = vmul.f32 %v879, 0.7368421
      %v1223 = vmul.f32 %v879, 0.2631579
      %1225 = vrot.lane.b32.xlu0 %v1223, 112
      %v1226 = vpop.permute.xlu0 %1225
      %v1228 = vadd.f32 %v1222, %v1226
      %v1229 = vpack.c.bf16 %v1228, %v1228
      %1231 = vrot.lane.b32.xlu0 %v1229, 96
      %v1232 = vpop.permute.xlu0 %1231
      %v1234 = vsel %vm887, %v1232, 0
      %1236 = vmatpush.bf16.msra.mxu0 0
      %1237 = vmatpush.bf16.msra.mxu0 0
      %1238 = vmatpush.bf16.msra.mxu0 0
      %1239 = vmatpush.bf16.msra.mxu0 0
      %1240 = vmatpush.bf16.msra.mxu0 0
      %1241 = vmatpush.bf16.msra.mxu0 0
      %1242 = vmatpush.bf16.msra.mxu0 0
      %1243 = vmatpush.bf16.msra.mxu0 %v885
      %1244 = vmatmul.bf16.gmra.mxu0 %v1234
      %v1245 = vpop.f32.mrf.mxu0
      %v1246 = vadd.f32 0.0, %v1245
      %v1247 = vpop.f32.mrf.mxu0
      %1248 = vdwg.mxu0
      %v1249 = vmul.f32 %v879, 0.94736844
      %v1250 = vmul.f32 %v879, 0.05263158
      %1252 = vrot.lane.b32.xlu0 %v1250, 112
      %v1253 = vpop.permute.xlu0 %1252
      %v1255 = vadd.f32 %v1249, %v1253
      %v1256 = vpack.c.bf16 %v1255, %v1255
      %1258 = vrot.lane.b32.xlu0 %v1256, 80
      %v1259 = vpop.permute.xlu0 %1258
      %v1261 = vsel %vm887, %v1259, 0
      %1263 = vmatpush.bf16.msra.mxu0 0
      %1264 = vmatpush.bf16.msra.mxu0 0
      %1265 = vmatpush.bf16.msra.mxu0 0
      %1266 = vmatpush.bf16.msra.mxu0 0
      %1267 = vmatpush.bf16.msra.mxu0 0
      %1268 = vmatpush.bf16.msra.mxu0 0
      %1269 = vmatpush.bf16.msra.mxu0 0
      %1270 = vmatpush.bf16.msra.mxu0 %v885
      %1271 = vmatmul.bf16.gmra.mxu0 %v1261
      %v1272 = vpop.f32.mrf.mxu0
      %v1273 = vadd.f32 0.0, %v1272
      %v1274 = vpop.f32.mrf.mxu0
      %1275 = vdwg.mxu0
      %v1276 = vmul.f32 %v879, 0.15789473
      %v1277 = vmul.f32 %v879, 0.84210527
      %1279 = vrot.lane.b32.xlu0 %v1277, 112
      %v1280 = vpop.permute.xlu0 %1279
      %v1282 = vadd.f32 %v1276, %v1280
      %v1283 = vpack.c.bf16 %v1282, %v1282
      %1285 = vrot.lane.b32.xlu0 %v1283, 80
      %v1286 = vpop.permute.xlu0 %1285
      %v1288 = vsel %vm887, %v1286, 0
      %1290 = vmatpush.bf16.msra.mxu0 0
      %1291 = vmatpush.bf16.msra.mxu0 0
      %1292 = vmatpush.bf16.msra.mxu0 0
      %1293 = vmatpush.bf16.msra.mxu0 0
      %1294 = vmatpush.bf16.msra.mxu0 0
      %1295 = vmatpush.bf16.msra.mxu0 0
      %1296 = vmatpush.bf16.msra.mxu0 0
      %1297 = vmatpush.bf16.msra.mxu0 %v885
      %1298 = vmatmul.bf16.gmra.mxu0 %v1288
      %v1299 = vpop.f32.mrf.mxu0
      %v1300 = vadd.f32 0.0, %v1299
      %v1301 = vpop.f32.mrf.mxu0
      %1302 = vdwg.mxu0
      %v1303 = vmul.f32 %v879, 0.36842105
      %v1304 = vmul.f32 %v879, 0.6315789
      %1306 = vrot.lane.b32.xlu0 %v1304, 112
      %v1307 = vpop.permute.xlu0 %1306
      %v1309 = vadd.f32 %v1303, %v1307
      %v1310 = vpack.c.bf16 %v1309, %v1309
      %1312 = vrot.lane.b32.xlu0 %v1310, 64
      %v1313 = vpop.permute.xlu0 %1312
      %v1315 = vsel %vm887, %v1313, 0
      %1317 = vmatpush.bf16.msra.mxu0 0
      %1318 = vmatpush.bf16.msra.mxu0 0
      %1319 = vmatpush.bf16.msra.mxu0 0
      %1320 = vmatpush.bf16.msra.mxu0 0
      %1321 = vmatpush.bf16.msra.mxu0 0
      %1322 = vmatpush.bf16.msra.mxu0 0
      %1323 = vmatpush.bf16.msra.mxu0 0
      %1324 = vmatpush.bf16.msra.mxu0 %v885
      %1325 = vmatmul.bf16.gmra.mxu0 %v1315
      %v1326 = vpop.f32.mrf.mxu0
      %v1327 = vadd.f32 0.0, %v1326
      %v1328 = vpop.f32.mrf.mxu0
      %1329 = vdwg.mxu0
      %v1330 = vmul.f32 %v879, 0.57894737
      %v1331 = vmul.f32 %v879, 0.42105263
      %1333 = vrot.lane.b32.xlu0 %v1331, 112
      %v1334 = vpop.permute.xlu0 %1333
      %v1336 = vadd.f32 %v1330, %v1334
      %v1337 = vpack.c.bf16 %v1336, %v1336
      %1339 = vrot.lane.b32.xlu0 %v1337, 48
      %v1340 = vpop.permute.xlu0 %1339
      %v1342 = vsel %vm887, %v1340, 0
      %1344 = vmatpush.bf16.msra.mxu0 0
      %1345 = vmatpush.bf16.msra.mxu0 0
      %1346 = vmatpush.bf16.msra.mxu0 0
      %1347 = vmatpush.bf16.msra.mxu0 0
      %1348 = vmatpush.bf16.msra.mxu0 0
      %1349 = vmatpush.bf16.msra.mxu0 0
      %1350 = vmatpush.bf16.msra.mxu0 0
      %1351 = vmatpush.bf16.msra.mxu0 %v885
      %1352 = vmatmul.bf16.gmra.mxu0 %v1342
      %v1353 = vpop.f32.mrf.mxu0
      %v1354 = vadd.f32 0.0, %v1353
      %v1355 = vpop.f32.mrf.mxu0
      %1356 = vdwg.mxu0
      %v1357 = vmul.f32 %v879, 0.7894737
      %v1358 = vmul.f32 %v879, 0.21052632
      %1360 = vrot.lane.b32.xlu0 %v1358, 112
      %v1361 = vpop.permute.xlu0 %1360
      %v1363 = vadd.f32 %v1357, %v1361
      %v1364 = vpack.c.bf16 %v1363, %v1363
      %1366 = vrot.lane.b32.xlu0 %v1364, 32
      %v1367 = vpop.permute.xlu0 %1366
      %v1369 = vsel %vm887, %v1367, 0
      %1371 = vmatpush.bf16.msra.mxu0 0
      %1372 = vmatpush.bf16.msra.mxu0 0
      %1373 = vmatpush.bf16.msra.mxu0 0
      %1374 = vmatpush.bf16.msra.mxu0 0
      %1375 = vmatpush.bf16.msra.mxu0 0
      %1376 = vmatpush.bf16.msra.mxu0 0
      %1377 = vmatpush.bf16.msra.mxu0 0
      %1378 = vmatpush.bf16.msra.mxu0 %v885
      %1379 = vmatmul.bf16.gmra.mxu0 %v1369
      %v1380 = vpop.f32.mrf.mxu0
      %v1381 = vadd.f32 0.0, %v1380
      %v1382 = vpop.f32.mrf.mxu0
      %1383 = vdwg.mxu0
      %v1384 = vpack.c.bf16 %v879, %v879
      %1386 = vrot.lane.b32.xlu0 %v1384, 16
      %v1387 = vpop.permute.xlu0 %1386
      %v1389 = vsel %vm887, %v1387, 0
      %1391 = vmatpush.bf16.msra.mxu0 0
      %1392 = vmatpush.bf16.msra.mxu0 0
      %1393 = vmatpush.bf16.msra.mxu0 0
      %1394 = vmatpush.bf16.msra.mxu0 0
      %1395 = vmatpush.bf16.msra.mxu0 0
      %1396 = vmatpush.bf16.msra.mxu0 0
      %1397 = vmatpush.bf16.msra.mxu0 0
      %1398 = vmatpush.bf16.msra.mxu0 %v885
      %1399 = vmatmul.bf16.gmra.mxu0 %v1389
      %v1400 = vpop.f32.mrf.mxu0
      %v1401 = vadd.f32 0.0, %v1400
      %v1402 = vpop.f32.mrf.mxu0
      %1403 = vdwg.mxu0
      %1405 = vrot.lane.b32.xlu0 %v925, 24
      %v1406 = vpop.permute.xlu0 %1405
      %1409 = vrot.lane.b32.xlu0 %v952, 48
      %v1410 = vpop.permute.xlu0 %1409
      %1413 = vrot.lane.b32.xlu0 %v979, 72
      %v1414 = vpop.permute.xlu0 %1413
      %1417 = vrot.lane.b32.xlu0 %v1006, 96
      %v1418 = vpop.permute.xlu0 %1417
      %1421 = vrot.lane.b32.xlu0 %v1033, 120
      %v1422 = vpop.permute.xlu0 %1421
      %1425 = vrot.lane.b32.xlu0 %v1060, 16
      %v1426 = vpop.permute.xlu0 %1425
      %1429 = vrot.lane.b32.xlu0 %v1087, 40
      %v1430 = vpop.permute.xlu0 %1429
      %1433 = vrot.lane.b32.xlu0 %v1114, 64
      %v1434 = vpop.permute.xlu0 %1433
      %1437 = vrot.lane.b32.xlu0 %v1141, 88
      %v1438 = vpop.permute.xlu0 %1437
      %1441 = vrot.lane.b32.xlu0 %v1168, 112
      %v1442 = vpop.permute.xlu0 %1441
      %1445 = vrot.lane.b32.xlu0 %v1192, 8
      %v1446 = vpop.permute.xlu0 %1445
      %1449 = vrot.lane.b32.xlu0 %v1219, 32
      %v1450 = vpop.permute.xlu0 %1449
      %1453 = vrot.lane.b32.xlu0 %v1246, 56
      %v1454 = vpop.permute.xlu0 %1453
      %1457 = vrot.lane.b32.xlu0 %v1273, 80
      %v1458 = vpop.permute.xlu0 %1457
      %1461 = vrot.lane.b32.xlu0 %v1300, 104
      %v1462 = vpop.permute.xlu0 %1461
      %vm1464 = vcmask 195584
      %v1465 = vsel %vm1464, %v901, %v1406
      %vm1466 = vcmask 392192
      %v1467 = vsel %vm1466, %v1465, %v1410
      %vm1468 = vcmask 588800
      %v1469 = vsel %vm1468, %v1467, %v1414
      %vm1470 = vcmask 785408
      %v1471 = vsel %vm1470, %v1469, %v1418
      %vm1472 = vcmask 982016
      %v1473 = vsel %vm1472, %v1471, %v1422
      %v1474 = vsel %vm887, %v1422, %v1426
      %vm1475 = vcmask 326656
      %v1476 = vsel %vm1475, %v1474, %v1430
      %vm1477 = vcmask 523264
      %v1478 = vsel %vm1477, %v1476, %v1434
      %vm1479 = vcmask 719872
      %v1480 = vsel %vm1479, %v1478, %v1438
      %vm1481 = vcmask 916480
      %v1482 = vsel %vm1481, %v1480, %v1442
      %v1483 = vsel %vm409, %v1442, %v1446
      %vm1484 = vcmask 261120
      %v1485 = vsel %vm1484, %v1483, %v1450
      %vm1486 = vcmask 457728
      %v1487 = vsel %vm1486, %v1485, %v1454
      %vm1488 = vcmask 654336
      %v1489 = vsel %vm1488, %v1487, %v1458
      %vm1490 = vcmask 850944
      %v1491 = vsel %vm1490, %v1489, %v1462
      %1493 = vrot.lane.b32.xlu0 %v1354, 24
      %v1494 = vpop.permute.xlu0 %1493
      %1497 = vrot.lane.b32.xlu0 %v1381, 48
      %v1498 = vpop.permute.xlu0 %1497
      %1501 = vrot.lane.b32.xlu0 %v1401, 72
      %v1502 = vpop.permute.xlu0 %1501
      %v1504 = vsel %vm1464, %v1327, %v1494
      %v1505 = vsel %vm1466, %v1504, %v1498
      %v1506 = vsel %vm1468, %v1505, %v1502
      %v1507 = vsel %vm1470, %v1506, 0.0
      %1508 = vrot.lane.b32.xlu0 %v1473, 25
      %v1509 = vpop.permute.xlu0 %1508
      %1510 = vrot.lane.b32.xlu0 %v1482, 25
      %v1511 = vpop.permute.xlu0 %1510
      %1512 = vrot.lane.b32.xlu0 %v1491, 25
      %v1513 = vpop.permute.xlu0 %1512
      %1514 = vrot.lane.b32.xlu0 %v1507, 25
      %v1515 = vpop.permute.xlu0 %1514
      %vm1516 = vcmp.lt.s32.totalorder %v374, 25
      %v1517 = vsel %vm1516, %v1513, %v1515
      %v1518 = vsel %vm1516, %v1511, %v1513
      %v1519 = vsel %vm1516, %v1509, %v1511
      %v1520 = vsel %vm1516, %v1515, %v1509
      %v1521 = vld [vmem:[%s7] ss:$8 sm:$0xf]
      %v1523 = vperm.slane %v1521, 0
      %v1524 = vperm.slane %v1521, 1
      %v1525 = vperm.slane %v1521, 2
      %v1526 = vperm.slane %v1521, 3
      %v1531 = vmul.f32 %v1520, %v1523
      %v1532 = vmul.f32 %v1519, %v1524
      %v1533 = vmul.f32 %v1518, %v1525
      %v1534 = vmul.f32 %v1517, %v1526
      %v1535 = vpack.c.bf16 %v1531, %v1531
      %v1536 = vpack.c.bf16 %v1532, %v1532
      %v1537 = vpack.c.bf16 %v1533, %v1533
      %v1538 = vpack.c.bf16 %v1534, %v1534
      %v1539 = vld [vmem:[%s5] sm:$0x3]
      %1540 = vrot.lane.b32.xlu0 %v1473, 24
      %v1541 = vpop.permute.xlu0 %1540
      %1542 = vrot.lane.b32.xlu0 %v1482, 24
      %v1543 = vpop.permute.xlu0 %1542
      %1544 = vrot.lane.b32.xlu0 %v1491, 24
      %v1545 = vpop.permute.xlu0 %1544
      %1546 = vrot.lane.b32.xlu0 %v1507, 24
      %v1547 = vpop.permute.xlu0 %1546
      %vm1548 = vcmp.lt.s32.totalorder %v374, 24
      %v1549 = vsel %vm1548, %v1545, %v1547
      %v1550 = vsel %vm1548, %v1543, %v1545
      %v1551 = vsel %vm1548, %v1541, %v1543
      %v1552 = vsel %vm1548, %v1547, %v1541
      %s1553 = scalar_lea.vmem %s7, 1
      %v1554 = vld [vmem:[%s1553] ss:$8 sm:$0xf]
      %v1556 = vperm.slane %v1554, 0
      %v1557 = vperm.slane %v1554, 1
      %v1558 = vperm.slane %v1554, 2
      %v1559 = vperm.slane %v1554, 3
      %v1564 = vmul.f32 %v1552, %v1556
      %v1565 = vmul.f32 %v1551, %v1557
      %v1566 = vmul.f32 %v1550, %v1558
      %v1567 = vmul.f32 %v1549, %v1559
      %v1568 = vpack.c.bf16 %v1564, %v1564
      %v1569 = vpack.c.bf16 %v1565, %v1565
      %v1570 = vpack.c.bf16 %v1566, %v1566
      %v1571 = vpack.c.bf16 %v1567, %v1567
      %s1572 = scalar_lea.vmem %s5, 2
      %v1573 = vld [vmem:[%s1572] sm:$0x3]
      %vm1574 = vcmask 31744
      %v1576 = vsel %vm1574, %v1573, 0
      %vm1578 = vcmask 1041408
      %v1580 = vsel %vm1578, %v1568, 0
      %v1583 = vsel %vm1578, %v1569, 0
      %v1586 = vsel %vm1578, %v1570, 0
      %v1589 = vsel %vm1578, %v1571, 0
      %1591 = vmatpush.bf16.msra.mxu0 0
      %1592 = vmatpush.bf16.msra.mxu0 0
      %1593 = vmatpush.bf16.msra.mxu0 0
      %1594 = vmatpush.bf16.msra.mxu0 0
      %1595 = vmatpush.bf16.msra.mxu0 0
      %1596 = vmatpush.bf16.msra.mxu0 0
      %1597 = vmatpush.bf16.msra.mxu0 0
      %1598 = vmatpush.bf16.msra.mxu0 %v1580
      %1599 = vmatmul.bf16.gmra.mxu0 %v1576
      %v1600 = vpop.f32.mrf.mxu0
      %v1601 = vadd.f32 0.0, %v1600
      %v1602 = vpop.f32.mrf.mxu0
      %1603 = vdwg.mxu0
      %1604 = vmatpush.bf16.msra.mxu0 0
      %1605 = vmatpush.bf16.msra.mxu0 0
      %1606 = vmatpush.bf16.msra.mxu0 0
      %1607 = vmatpush.bf16.msra.mxu0 0
      %1608 = vmatpush.bf16.msra.mxu0 0
      %1609 = vmatpush.bf16.msra.mxu0 0
      %1610 = vmatpush.bf16.msra.mxu0 0
      %1611 = vmatpush.bf16.msra.mxu0 %v1583
      %1612 = vmatmul.bf16.gmra.mxu0 %v1576
      %v1613 = vpop.f32.mrf.mxu0
      %v1614 = vadd.f32 0.0, %v1613
      %v1615 = vpop.f32.mrf.mxu0
      %1616 = vdwg.mxu0
      %1617 = vmatpush.bf16.msra.mxu0 0
      %1618 = vmatpush.bf16.msra.mxu0 0
      %1619 = vmatpush.bf16.msra.mxu0 0
      %1620 = vmatpush.bf16.msra.mxu0 0
      %1621 = vmatpush.bf16.msra.mxu0 0
      %1622 = vmatpush.bf16.msra.mxu0 0
      %1623 = vmatpush.bf16.msra.mxu0 0
      %1624 = vmatpush.bf16.msra.mxu0 %v1586
      %1625 = vmatmul.bf16.gmra.mxu0 %v1576
      %v1626 = vpop.f32.mrf.mxu0
      %v1627 = vadd.f32 0.0, %v1626
      %v1628 = vpop.f32.mrf.mxu0
      %1629 = vdwg.mxu0
      %1630 = vmatpush.bf16.msra.mxu0 0
      %1631 = vmatpush.bf16.msra.mxu0 0
      %1632 = vmatpush.bf16.msra.mxu0 0
      %1633 = vmatpush.bf16.msra.mxu0 0
      %1634 = vmatpush.bf16.msra.mxu0 0
      %1635 = vmatpush.bf16.msra.mxu0 0
      %1636 = vmatpush.bf16.msra.mxu0 0
      %1637 = vmatpush.bf16.msra.mxu0 %v1589
      %1638 = vmatmul.bf16.gmra.mxu0 %v1576
      %v1639 = vpop.f32.mrf.mxu0
      %v1640 = vadd.f32 0.0, %v1639
      %v1641 = vpop.f32.mrf.mxu0
      %1642 = vdwg.mxu0
      %v1644 = vsel %vm1574, %v1539, 0
      %v1647 = vsel %vm1578, %v1535, 0
      %v1650 = vsel %vm1578, %v1536, 0
      %v1653 = vsel %vm1578, %v1537, 0
      %v1656 = vsel %vm1578, %v1538, 0
      %1658 = vmatpush.bf16.msra.mxu0 0
      %1659 = vmatpush.bf16.msra.mxu0 0
      %1660 = vmatpush.bf16.msra.mxu0 0
      %1661 = vmatpush.bf16.msra.mxu0 0
      %1662 = vmatpush.bf16.msra.mxu0 0
      %1663 = vmatpush.bf16.msra.mxu0 0
      %1664 = vmatpush.bf16.msra.mxu0 0
      %1665 = vmatpush.bf16.msra.mxu0 %v1647
      %1666 = vmatmul.bf16.gmra.mxu0 %v1644
      %v1667 = vpop.f32.mrf.mxu0
      %v1668 = vadd.f32 %v1601, %v1667
      %v1669 = vpop.f32.mrf.mxu0
      %1670 = vdwg.mxu0
      %1671 = vmatpush.bf16.msra.mxu0 0
      %1672 = vmatpush.bf16.msra.mxu0 0
      %1673 = vmatpush.bf16.msra.mxu0 0
      %1674 = vmatpush.bf16.msra.mxu0 0
      %1675 = vmatpush.bf16.msra.mxu0 0
      %1676 = vmatpush.bf16.msra.mxu0 0
      %1677 = vmatpush.bf16.msra.mxu0 0
      %1678 = vmatpush.bf16.msra.mxu0 %v1650
      %1679 = vmatmul.bf16.gmra.mxu0 %v1644
      %v1680 = vpop.f32.mrf.mxu0
      %v1681 = vadd.f32 %v1614, %v1680
      %v1682 = vpop.f32.mrf.mxu0
      %1683 = vdwg.mxu0
      %1684 = vmatpush.bf16.msra.mxu0 0
      %1685 = vmatpush.bf16.msra.mxu0 0
      %1686 = vmatpush.bf16.msra.mxu0 0
      %1687 = vmatpush.bf16.msra.mxu0 0
      %1688 = vmatpush.bf16.msra.mxu0 0
      %1689 = vmatpush.bf16.msra.mxu0 0
      %1690 = vmatpush.bf16.msra.mxu0 0
      %1691 = vmatpush.bf16.msra.mxu0 %v1653
      %1692 = vmatmul.bf16.gmra.mxu0 %v1644
      %v1693 = vpop.f32.mrf.mxu0
      %v1694 = vadd.f32 %v1627, %v1693
      %v1695 = vpop.f32.mrf.mxu0
      %1696 = vdwg.mxu0
      %1697 = vmatpush.bf16.msra.mxu0 0
      %1698 = vmatpush.bf16.msra.mxu0 0
      %1699 = vmatpush.bf16.msra.mxu0 0
      %1700 = vmatpush.bf16.msra.mxu0 0
      %1701 = vmatpush.bf16.msra.mxu0 0
      %1702 = vmatpush.bf16.msra.mxu0 0
      %1703 = vmatpush.bf16.msra.mxu0 0
      %1704 = vmatpush.bf16.msra.mxu0 %v1656
      %1705 = vmatmul.bf16.gmra.mxu0 %v1644
      %v1706 = vpop.f32.mrf.mxu0
      %v1707 = vadd.f32 %v1640, %v1706
      %v1708 = vpop.f32.mrf.mxu0
      %1709 = vdwg.mxu0
      %1710 = vrot.lane.b32.xlu0 %v1473, 23
      %v1711 = vpop.permute.xlu0 %1710
      %1712 = vrot.lane.b32.xlu0 %v1482, 23
      %v1713 = vpop.permute.xlu0 %1712
      %1714 = vrot.lane.b32.xlu0 %v1491, 23
      %v1715 = vpop.permute.xlu0 %1714
      %1716 = vrot.lane.b32.xlu0 %v1507, 23
      %v1717 = vpop.permute.xlu0 %1716
      %vm1718 = vcmp.lt.s32.totalorder %v374, 23
      %v1719 = vsel %vm1718, %v1715, %v1717
      %v1720 = vsel %vm1718, %v1713, %v1715
      %v1721 = vsel %vm1718, %v1711, %v1713
      %v1722 = vsel %vm1718, %v1717, %v1711
      %s1723 = scalar_lea.vmem %s7, 2
      %v1724 = vld [vmem:[%s1723] ss:$8 sm:$0xf]
      %v1726 = vperm.slane %v1724, 0
      %v1727 = vperm.slane %v1724, 1
      %v1728 = vperm.slane %v1724, 2
      %v1729 = vperm.slane %v1724, 3
      %v1734 = vmul.f32 %v1722, %v1726
      %v1735 = vmul.f32 %v1721, %v1727
      %v1736 = vmul.f32 %v1720, %v1728
      %v1737 = vmul.f32 %v1719, %v1729
      %v1738 = vpack.c.bf16 %v1734, %v1734
      %v1739 = vpack.c.bf16 %v1735, %v1735
      %v1740 = vpack.c.bf16 %v1736, %v1736
      %v1741 = vpack.c.bf16 %v1737, %v1737
      %s1742 = scalar_lea.vmem %s5, 4
      %v1743 = vld [vmem:[%s1742] sm:$0x3]
      %v1745 = vsel %vm1574, %v1743, 0
      %v1748 = vsel %vm1578, %v1738, 0
      %v1751 = vsel %vm1578, %v1739, 0
      %v1754 = vsel %vm1578, %v1740, 0
      %v1757 = vsel %vm1578, %v1741, 0
      %1759 = vmatpush.bf16.msra.mxu0 0
      %1760 = vmatpush.bf16.msra.mxu0 0
      %1761 = vmatpush.bf16.msra.mxu0 0
      %1762 = vmatpush.bf16.msra.mxu0 0
      %1763 = vmatpush.bf16.msra.mxu0 0
      %1764 = vmatpush.bf16.msra.mxu0 0
      %1765 = vmatpush.bf16.msra.mxu0 0
      %1766 = vmatpush.bf16.msra.mxu0 %v1748
      %1767 = vmatmul.bf16.gmra.mxu0 %v1745
      %v1768 = vpop.f32.mrf.mxu0
      %v1769 = vadd.f32 0.0, %v1768
      %v1770 = vpop.f32.mrf.mxu0
      %1771 = vdwg.mxu0
      %1772 = vmatpush.bf16.msra.mxu0 0
      %1773 = vmatpush.bf16.msra.mxu0 0
      %1774 = vmatpush.bf16.msra.mxu0 0
      %1775 = vmatpush.bf16.msra.mxu0 0
      %1776 = vmatpush.bf16.msra.mxu0 0
      %1777 = vmatpush.bf16.msra.mxu0 0
      %1778 = vmatpush.bf16.msra.mxu0 0
      %1779 = vmatpush.bf16.msra.mxu0 %v1751
      %1780 = vmatmul.bf16.gmra.mxu0 %v1745
      %v1781 = vpop.f32.mrf.mxu0
      %v1782 = vadd.f32 0.0, %v1781
      %v1783 = vpop.f32.mrf.mxu0
      %1784 = vdwg.mxu0
      %1785 = vmatpush.bf16.msra.mxu0 0
      %1786 = vmatpush.bf16.msra.mxu0 0
      %1787 = vmatpush.bf16.msra.mxu0 0
      %1788 = vmatpush.bf16.msra.mxu0 0
      %1789 = vmatpush.bf16.msra.mxu0 0
      %1790 = vmatpush.bf16.msra.mxu0 0
      %1791 = vmatpush.bf16.msra.mxu0 0
      %1792 = vmatpush.bf16.msra.mxu0 %v1754
      %1793 = vmatmul.bf16.gmra.mxu0 %v1745
      %v1794 = vpop.f32.mrf.mxu0
      %v1795 = vadd.f32 0.0, %v1794
      %v1796 = vpop.f32.mrf.mxu0
      %1797 = vdwg.mxu0
      %1798 = vmatpush.bf16.msra.mxu0 0
      %1799 = vmatpush.bf16.msra.mxu0 0
      %1800 = vmatpush.bf16.msra.mxu0 0
      %1801 = vmatpush.bf16.msra.mxu0 0
      %1802 = vmatpush.bf16.msra.mxu0 0
      %1803 = vmatpush.bf16.msra.mxu0 0
      %1804 = vmatpush.bf16.msra.mxu0 0
      %1805 = vmatpush.bf16.msra.mxu0 %v1757
      %1806 = vmatmul.bf16.gmra.mxu0 %v1745
      %v1807 = vpop.f32.mrf.mxu0
      %v1808 = vadd.f32 0.0, %v1807
      %v1809 = vpop.f32.mrf.mxu0
      %1810 = vdwg.mxu0
      %v1811 = vadd.f32 %v1668, %v1769
      %v1812 = vadd.f32 %v1681, %v1782
      %v1813 = vadd.f32 %v1694, %v1795
      %v1814 = vadd.f32 %v1707, %v1808
      %1815 = vrot.lane.b32.xlu0 %v1473, 1
      %v1816 = vpop.permute.xlu0 %1815
      %1817 = vrot.lane.b32.xlu0 %v1482, 1
      %v1818 = vpop.permute.xlu0 %1817
      %1819 = vrot.lane.b32.xlu0 %v1491, 1
      %v1820 = vpop.permute.xlu0 %1819
      %1821 = vrot.lane.b32.xlu0 %v1507, 1
      %v1822 = vpop.permute.xlu0 %1821
      %v1823 = vsel %vm542, %v1820, %v1822
      %v1824 = vsel %vm542, %v1818, %v1820
      %v1825 = vsel %vm542, %v1816, %v1818
      %v1826 = vsel %vm542, %v1822, %v1816
      %s1827 = scalar_lea.vmem %s7, 3
      %v1828 = vld [vmem:[%s1827] ss:$8 sm:$0xf]
      %v1830 = vperm.slane %v1828, 0
      %v1831 = vperm.slane %v1828, 1
      %v1832 = vperm.slane %v1828, 2
      %v1833 = vperm.slane %v1828, 3
      %v1838 = vmul.f32 %v1826, %v1830
      %v1839 = vmul.f32 %v1825, %v1831
      %v1840 = vmul.f32 %v1824, %v1832
      %v1841 = vmul.f32 %v1823, %v1833
      %v1842 = vpack.c.bf16 %v1838, %v1838
      %v1843 = vpack.c.bf16 %v1839, %v1839
      %v1844 = vpack.c.bf16 %v1840, %v1840
      %v1845 = vpack.c.bf16 %v1841, %v1841
      %s1846 = scalar_lea.vmem %s5, 6
      %v1847 = vld [vmem:[%s1846] sm:$0x3]
      %v1849 = vsel %vm1574, %v1847, 0
      %v1852 = vsel %vm1578, %v1842, 0
      %v1855 = vsel %vm1578, %v1843, 0
      %v1858 = vsel %vm1578, %v1844, 0
      %v1861 = vsel %vm1578, %v1845, 0
      %1863 = vmatpush.bf16.msra.mxu0 0
      %1864 = vmatpush.bf16.msra.mxu0 0
      %1865 = vmatpush.bf16.msra.mxu0 0
      %1866 = vmatpush.bf16.msra.mxu0 0
      %1867 = vmatpush.bf16.msra.mxu0 0
      %1868 = vmatpush.bf16.msra.mxu0 0
      %1869 = vmatpush.bf16.msra.mxu0 0
      %1870 = vmatpush.bf16.msra.mxu0 %v1852
      %1871 = vmatmul.bf16.gmra.mxu0 %v1849
      %v1872 = vpop.f32.mrf.mxu0
      %v1873 = vadd.f32 0.0, %v1872
      %v1874 = vpop.f32.mrf.mxu0
      %1875 = vdwg.mxu0
      %1876 = vmatpush.bf16.msra.mxu0 0
      %1877 = vmatpush.bf16.msra.mxu0 0
      %1878 = vmatpush.bf16.msra.mxu0 0
      %1879 = vmatpush.bf16.msra.mxu0 0
      %1880 = vmatpush.bf16.msra.mxu0 0
      %1881 = vmatpush.bf16.msra.mxu0 0
      %1882 = vmatpush.bf16.msra.mxu0 0
      %1883 = vmatpush.bf16.msra.mxu0 %v1855
      %1884 = vmatmul.bf16.gmra.mxu0 %v1849
      %v1885 = vpop.f32.mrf.mxu0
      %v1886 = vadd.f32 0.0, %v1885
      %v1887 = vpop.f32.mrf.mxu0
      %1888 = vdwg.mxu0
      %1889 = vmatpush.bf16.msra.mxu0 0
      %1890 = vmatpush.bf16.msra.mxu0 0
      %1891 = vmatpush.bf16.msra.mxu0 0
      %1892 = vmatpush.bf16.msra.mxu0 0
      %1893 = vmatpush.bf16.msra.mxu0 0
      %1894 = vmatpush.bf16.msra.mxu0 0
      %1895 = vmatpush.bf16.msra.mxu0 0
      %1896 = vmatpush.bf16.msra.mxu0 %v1858
      %1897 = vmatmul.bf16.gmra.mxu0 %v1849
      %v1898 = vpop.f32.mrf.mxu0
      %v1899 = vadd.f32 0.0, %v1898
      %v1900 = vpop.f32.mrf.mxu0
      %1901 = vdwg.mxu0
      %1902 = vmatpush.bf16.msra.mxu0 0
      %1903 = vmatpush.bf16.msra.mxu0 0
      %1904 = vmatpush.bf16.msra.mxu0 0
      %1905 = vmatpush.bf16.msra.mxu0 0
      %1906 = vmatpush.bf16.msra.mxu0 0
      %1907 = vmatpush.bf16.msra.mxu0 0
      %1908 = vmatpush.bf16.msra.mxu0 0
      %1909 = vmatpush.bf16.msra.mxu0 %v1861
      %1910 = vmatmul.bf16.gmra.mxu0 %v1849
      %v1911 = vpop.f32.mrf.mxu0
      %v1912 = vadd.f32 0.0, %v1911
      %v1913 = vpop.f32.mrf.mxu0
      %1914 = vdwg.mxu0
      %v1915 = vadd.f32 %v1811, %v1873
      %v1916 = vadd.f32 %v1812, %v1886
      %v1917 = vadd.f32 %v1813, %v1899
      %v1918 = vadd.f32 %v1814, %v1912
      %s1919 = scalar_lea.vmem %s7, 4
      %v1920 = vld [vmem:[%s1919] ss:$8 sm:$0xf]
      %v1922 = vperm.slane %v1920, 0
      %v1923 = vperm.slane %v1920, 1
      %v1924 = vperm.slane %v1920, 2
      %v1925 = vperm.slane %v1920, 3
      %v1930 = vmul.f32 %v1473, %v1922
      %v1931 = vmul.f32 %v1482, %v1923
      %v1932 = vmul.f32 %v1491, %v1924
      %v1933 = vmul.f32 %v1507, %v1925
      %v1934 = vpack.c.bf16 %v1930, %v1930
      %v1935 = vpack.c.bf16 %v1931, %v1931
      %v1936 = vpack.c.bf16 %v1932, %v1932
      %v1937 = vpack.c.bf16 %v1933, %v1933
      %s1938 = scalar_lea.vmem %s5, 8
      %v1939 = vld [vmem:[%s1938] sm:$0x3]
      %v1941 = vsel %vm1574, %v1939, 0
      %v1944 = vsel %vm1578, %v1934, 0
      %v1947 = vsel %vm1578, %v1935, 0
      %v1950 = vsel %vm1578, %v1936, 0
      %v1953 = vsel %vm1578, %v1937, 0
      %1955 = vmatpush.bf16.msra.mxu0 0
      %1956 = vmatpush.bf16.msra.mxu0 0
      %1957 = vmatpush.bf16.msra.mxu0 0
      %1958 = vmatpush.bf16.msra.mxu0 0
      %1959 = vmatpush.bf16.msra.mxu0 0
      %1960 = vmatpush.bf16.msra.mxu0 0
      %1961 = vmatpush.bf16.msra.mxu0 0
      %1962 = vmatpush.bf16.msra.mxu0 %v1944
      %1963 = vmatmul.bf16.gmra.mxu0 %v1941
      %v1964 = vpop.f32.mrf.mxu0
      %v1965 = vadd.f32 0.0, %v1964
      %v1966 = vpop.f32.mrf.mxu0
      %1967 = vdwg.mxu0
      %1968 = vmatpush.bf16.msra.mxu0 0
      %1969 = vmatpush.bf16.msra.mxu0 0
      %1970 = vmatpush.bf16.msra.mxu0 0
      %1971 = vmatpush.bf16.msra.mxu0 0
      %1972 = vmatpush.bf16.msra.mxu0 0
      %1973 = vmatpush.bf16.msra.mxu0 0
      %1974 = vmatpush.bf16.msra.mxu0 0
      %1975 = vmatpush.bf16.msra.mxu0 %v1947
      %1976 = vmatmul.bf16.gmra.mxu0 %v1941
      %v1977 = vpop.f32.mrf.mxu0
      %v1978 = vadd.f32 0.0, %v1977
      %v1979 = vpop.f32.mrf.mxu0
      %1980 = vdwg.mxu0
      %1981 = vmatpush.bf16.msra.mxu0 0
      %1982 = vmatpush.bf16.msra.mxu0 0
      %1983 = vmatpush.bf16.msra.mxu0 0
      %1984 = vmatpush.bf16.msra.mxu0 0
      %1985 = vmatpush.bf16.msra.mxu0 0
      %1986 = vmatpush.bf16.msra.mxu0 0
      %1987 = vmatpush.bf16.msra.mxu0 0
      %1988 = vmatpush.bf16.msra.mxu0 %v1950
      %1989 = vmatmul.bf16.gmra.mxu0 %v1941
      %v1990 = vpop.f32.mrf.mxu0
      %v1991 = vadd.f32 0.0, %v1990
      %v1992 = vpop.f32.mrf.mxu0
      %1993 = vdwg.mxu0
      %1994 = vmatpush.bf16.msra.mxu0 0
      %1995 = vmatpush.bf16.msra.mxu0 0
      %1996 = vmatpush.bf16.msra.mxu0 0
      %1997 = vmatpush.bf16.msra.mxu0 0
      %1998 = vmatpush.bf16.msra.mxu0 0
      %1999 = vmatpush.bf16.msra.mxu0 0
      %2000 = vmatpush.bf16.msra.mxu0 0
      %2001 = vmatpush.bf16.msra.mxu0 %v1953
      %2002 = vmatmul.bf16.gmra.mxu0 %v1941
      %v2003 = vpop.f32.mrf.mxu0
      %v2004 = vadd.f32 0.0, %v2003
      %v2005 = vpop.f32.mrf.mxu0
      %2006 = vdwg.mxu0
      %v2007 = vadd.f32 %v1915, %v1965
      %v2008 = vadd.f32 %v1916, %v1978
      %v2009 = vadd.f32 %v1917, %v1991
      %v2010 = vadd.f32 %v1918, %v2004
      %2011 = vrot.lane.b32.xlu0 %v1473, 127
      %v2012 = vpop.permute.xlu0 %2011
      %2013 = vrot.lane.b32.xlu0 %v1482, 127
      %v2014 = vpop.permute.xlu0 %2013
      %2015 = vrot.lane.b32.xlu0 %v1491, 127
      %v2016 = vpop.permute.xlu0 %2015
      %2017 = vrot.lane.b32.xlu0 %v1507, 127
      %v2018 = vpop.permute.xlu0 %2017
      %v2019 = vsel %vm649, %v2016, %v2018
      %v2020 = vsel %vm649, %v2014, %v2016
      %v2021 = vsel %vm649, %v2012, %v2014
      %v2022 = vsel %vm649, %v2018, %v2012
      %s2023 = scalar_lea.vmem %s7, 5
      %v2024 = vld [vmem:[%s2023] ss:$8 sm:$0xf]
      %v2026 = vperm.slane %v2024, 0
      %v2027 = vperm.slane %v2024, 1
      %v2028 = vperm.slane %v2024, 2
      %v2029 = vperm.slane %v2024, 3
      %v2034 = vmul.f32 %v2021, %v2026
      %v2035 = vmul.f32 %v2020, %v2027
      %v2036 = vmul.f32 %v2019, %v2028
      %v2037 = vmul.f32 %v2022, %v2029
      %v2038 = vpack.c.bf16 %v2034, %v2034
      %v2039 = vpack.c.bf16 %v2035, %v2035
      %v2040 = vpack.c.bf16 %v2036, %v2036
      %v2041 = vpack.c.bf16 %v2037, %v2037
      %s2042 = scalar_lea.vmem %s5, 10
      %v2043 = vld [vmem:[%s2042] sm:$0x3]
      %v2045 = vsel %vm1574, %v2043, 0
      %v2048 = vsel %vm1578, %v2038, 0
      %v2051 = vsel %vm1578, %v2039, 0
      %v2054 = vsel %vm1578, %v2040, 0
      %v2057 = vsel %vm1578, %v2041, 0
      %2059 = vmatpush.bf16.msra.mxu0 0
      %2060 = vmatpush.bf16.msra.mxu0 0
      %2061 = vmatpush.bf16.msra.mxu0 0
      %2062 = vmatpush.bf16.msra.mxu0 0
      %2063 = vmatpush.bf16.msra.mxu0 0
      %2064 = vmatpush.bf16.msra.mxu0 0
      %2065 = vmatpush.bf16.msra.mxu0 0
      %2066 = vmatpush.bf16.msra.mxu0 %v2048
      %2067 = vmatmul.bf16.gmra.mxu0 %v2045
      %v2068 = vpop.f32.mrf.mxu0
      %v2069 = vadd.f32 0.0, %v2068
      %v2070 = vpop.f32.mrf.mxu0
      %2071 = vdwg.mxu0
      %2072 = vmatpush.bf16.msra.mxu0 0
      %2073 = vmatpush.bf16.msra.mxu0 0
      %2074 = vmatpush.bf16.msra.mxu0 0
      %2075 = vmatpush.bf16.msra.mxu0 0
      %2076 = vmatpush.bf16.msra.mxu0 0
      %2077 = vmatpush.bf16.msra.mxu0 0
      %2078 = vmatpush.bf16.msra.mxu0 0
      %2079 = vmatpush.bf16.msra.mxu0 %v2051
      %2080 = vmatmul.bf16.gmra.mxu0 %v2045
      %v2081 = vpop.f32.mrf.mxu0
      %v2082 = vadd.f32 0.0, %v2081
      %v2083 = vpop.f32.mrf.mxu0
      %2084 = vdwg.mxu0
      %2085 = vmatpush.bf16.msra.mxu0 0
      %2086 = vmatpush.bf16.msra.mxu0 0
      %2087 = vmatpush.bf16.msra.mxu0 0
      %2088 = vmatpush.bf16.msra.mxu0 0
      %2089 = vmatpush.bf16.msra.mxu0 0
      %2090 = vmatpush.bf16.msra.mxu0 0
      %2091 = vmatpush.bf16.msra.mxu0 0
      %2092 = vmatpush.bf16.msra.mxu0 %v2054
      %2093 = vmatmul.bf16.gmra.mxu0 %v2045
      %v2094 = vpop.f32.mrf.mxu0
      %v2095 = vadd.f32 0.0, %v2094
      %v2096 = vpop.f32.mrf.mxu0
      %2097 = vdwg.mxu0
      %2098 = vmatpush.bf16.msra.mxu0 0
      %2099 = vmatpush.bf16.msra.mxu0 0
      %2100 = vmatpush.bf16.msra.mxu0 0
      %2101 = vmatpush.bf16.msra.mxu0 0
      %2102 = vmatpush.bf16.msra.mxu0 0
      %2103 = vmatpush.bf16.msra.mxu0 0
      %2104 = vmatpush.bf16.msra.mxu0 0
      %2105 = vmatpush.bf16.msra.mxu0 %v2057
      %2106 = vmatmul.bf16.gmra.mxu0 %v2045
      %v2107 = vpop.f32.mrf.mxu0
      %v2108 = vadd.f32 0.0, %v2107
      %v2109 = vpop.f32.mrf.mxu0
      %2110 = vdwg.mxu0
      %v2111 = vadd.f32 %v2007, %v2069
      %v2112 = vadd.f32 %v2008, %v2082
      %v2113 = vadd.f32 %v2009, %v2095
      %v2114 = vadd.f32 %v2010, %v2108
      %2115 = vrot.lane.b32.xlu0 %v1473, 105
      %v2116 = vpop.permute.xlu0 %2115
      %2117 = vrot.lane.b32.xlu0 %v1482, 105
      %v2118 = vpop.permute.xlu0 %2117
      %2119 = vrot.lane.b32.xlu0 %v1491, 105
      %v2120 = vpop.permute.xlu0 %2119
      %2121 = vrot.lane.b32.xlu0 %v1507, 105
      %v2122 = vpop.permute.xlu0 %2121
      %vm2123 = vcmp.lt.s32.totalorder %v374, 105
      %v2124 = vsel %vm2123, %v2120, %v2122
      %v2125 = vsel %vm2123, %v2118, %v2120
      %v2126 = vsel %vm2123, %v2116, %v2118
      %v2127 = vsel %vm2123, %v2122, %v2116
      %s2128 = scalar_lea.vmem %s7, 6
      %v2129 = vld [vmem:[%s2128] ss:$8 sm:$0xf]
      %v2131 = vperm.slane %v2129, 0
      %v2132 = vperm.slane %v2129, 1
      %v2133 = vperm.slane %v2129, 2
      %v2134 = vperm.slane %v2129, 3
      %v2139 = vmul.f32 %v2126, %v2131
      %v2140 = vmul.f32 %v2125, %v2132
      %v2141 = vmul.f32 %v2124, %v2133
      %v2142 = vmul.f32 %v2127, %v2134
      %v2143 = vpack.c.bf16 %v2139, %v2139
      %v2144 = vpack.c.bf16 %v2140, %v2140
      %v2145 = vpack.c.bf16 %v2141, %v2141
      %v2146 = vpack.c.bf16 %v2142, %v2142
      %s2147 = scalar_lea.vmem %s5, 12
      %v2148 = vld [vmem:[%s2147] sm:$0x3]
      %v2150 = vsel %vm1574, %v2148, 0
      %v2153 = vsel %vm1578, %v2143, 0
      %v2156 = vsel %vm1578, %v2144, 0
      %v2159 = vsel %vm1578, %v2145, 0
      %v2162 = vsel %vm1578, %v2146, 0
      %2164 = vmatpush.bf16.msra.mxu0 0
      %2165 = vmatpush.bf16.msra.mxu0 0
      %2166 = vmatpush.bf16.msra.mxu0 0
      %2167 = vmatpush.bf16.msra.mxu0 0
      %2168 = vmatpush.bf16.msra.mxu0 0
      %2169 = vmatpush.bf16.msra.mxu0 0
      %2170 = vmatpush.bf16.msra.mxu0 0
      %2171 = vmatpush.bf16.msra.mxu0 %v2153
      %2172 = vmatmul.bf16.gmra.mxu0 %v2150
      %v2173 = vpop.f32.mrf.mxu0
      %v2174 = vadd.f32 0.0, %v2173
      %v2175 = vpop.f32.mrf.mxu0
      %2176 = vdwg.mxu0
      %2177 = vmatpush.bf16.msra.mxu0 0
      %2178 = vmatpush.bf16.msra.mxu0 0
      %2179 = vmatpush.bf16.msra.mxu0 0
      %2180 = vmatpush.bf16.msra.mxu0 0
      %2181 = vmatpush.bf16.msra.mxu0 0
      %2182 = vmatpush.bf16.msra.mxu0 0
      %2183 = vmatpush.bf16.msra.mxu0 0
      %2184 = vmatpush.bf16.msra.mxu0 %v2156
      %2185 = vmatmul.bf16.gmra.mxu0 %v2150
      %v2186 = vpop.f32.mrf.mxu0
      %v2187 = vadd.f32 0.0, %v2186
      %v2188 = vpop.f32.mrf.mxu0
      %2189 = vdwg.mxu0
      %2190 = vmatpush.bf16.msra.mxu0 0
      %2191 = vmatpush.bf16.msra.mxu0 0
      %2192 = vmatpush.bf16.msra.mxu0 0
      %2193 = vmatpush.bf16.msra.mxu0 0
      %2194 = vmatpush.bf16.msra.mxu0 0
      %2195 = vmatpush.bf16.msra.mxu0 0
      %2196 = vmatpush.bf16.msra.mxu0 0
      %2197 = vmatpush.bf16.msra.mxu0 %v2159
      %2198 = vmatmul.bf16.gmra.mxu0 %v2150
      %v2199 = vpop.f32.mrf.mxu0
      %v2200 = vadd.f32 0.0, %v2199
      %v2201 = vpop.f32.mrf.mxu0
      %2202 = vdwg.mxu0
      %2203 = vmatpush.bf16.msra.mxu0 0
      %2204 = vmatpush.bf16.msra.mxu0 0
      %2205 = vmatpush.bf16.msra.mxu0 0
      %2206 = vmatpush.bf16.msra.mxu0 0
      %2207 = vmatpush.bf16.msra.mxu0 0
      %2208 = vmatpush.bf16.msra.mxu0 0
      %2209 = vmatpush.bf16.msra.mxu0 0
      %2210 = vmatpush.bf16.msra.mxu0 %v2162
      %2211 = vmatmul.bf16.gmra.mxu0 %v2150
      %v2212 = vpop.f32.mrf.mxu0
      %v2213 = vadd.f32 0.0, %v2212
      %v2214 = vpop.f32.mrf.mxu0
      %2215 = vdwg.mxu0
      %v2216 = vadd.f32 %v2111, %v2174
      %v2217 = vadd.f32 %v2112, %v2187
      %v2218 = vadd.f32 %v2113, %v2200
      %v2219 = vadd.f32 %v2114, %v2213
      %2220 = vrot.lane.b32.xlu0 %v1473, 104
      %v2221 = vpop.permute.xlu0 %2220
      %2222 = vrot.lane.b32.xlu0 %v1482, 104
      %v2223 = vpop.permute.xlu0 %2222
      %2224 = vrot.lane.b32.xlu0 %v1491, 104
      %v2225 = vpop.permute.xlu0 %2224
      %2226 = vrot.lane.b32.xlu0 %v1507, 104
      %v2227 = vpop.permute.xlu0 %2226
      %vm2228 = vcmp.lt.s32.totalorder %v374, 104
      %v2229 = vsel %vm2228, %v2225, %v2227
      %v2230 = vsel %vm2228, %v2223, %v2225
      %v2231 = vsel %vm2228, %v2221, %v2223
      %v2232 = vsel %vm2228, %v2227, %v2221
      %s2233 = scalar_lea.vmem %s7, 7
      %v2234 = vld [vmem:[%s2233] ss:$8 sm:$0xf]
      %v2236 = vperm.slane %v2234, 0
      %v2237 = vperm.slane %v2234, 1
      %v2238 = vperm.slane %v2234, 2
      %v2239 = vperm.slane %v2234, 3
      %v2244 = vmul.f32 %v2231, %v2236
      %v2245 = vmul.f32 %v2230, %v2237
      %v2246 = vmul.f32 %v2229, %v2238
      %v2247 = vmul.f32 %v2232, %v2239
      %v2248 = vpack.c.bf16 %v2244, %v2244
      %v2249 = vpack.c.bf16 %v2245, %v2245
      %v2250 = vpack.c.bf16 %v2246, %v2246
      %v2251 = vpack.c.bf16 %v2247, %v2247
      %s2252 = scalar_lea.vmem %s5, 14
      %v2253 = vld [vmem:[%s2252] sm:$0x3]
      %v2255 = vsel %vm1574, %v2253, 0
      %v2258 = vsel %vm1578, %v2248, 0
      %v2261 = vsel %vm1578, %v2249, 0
      %v2264 = vsel %vm1578, %v2250, 0
      %v2267 = vsel %vm1578, %v2251, 0
      %2269 = vmatpush.bf16.msra.mxu0 0
      %2270 = vmatpush.bf16.msra.mxu0 0
      %2271 = vmatpush.bf16.msra.mxu0 0
      %2272 = vmatpush.bf16.msra.mxu0 0
      %2273 = vmatpush.bf16.msra.mxu0 0
      %2274 = vmatpush.bf16.msra.mxu0 0
      %2275 = vmatpush.bf16.msra.mxu0 0
      %2276 = vmatpush.bf16.msra.mxu0 %v2258
      %2277 = vmatmul.bf16.gmra.mxu0 %v2255
      %v2278 = vpop.f32.mrf.mxu0
      %v2279 = vadd.f32 0.0, %v2278
      %v2280 = vpop.f32.mrf.mxu0
      %2281 = vdwg.mxu0
      %2282 = vmatpush.bf16.msra.mxu0 0
      %2283 = vmatpush.bf16.msra.mxu0 0
      %2284 = vmatpush.bf16.msra.mxu0 0
      %2285 = vmatpush.bf16.msra.mxu0 0
      %2286 = vmatpush.bf16.msra.mxu0 0
      %2287 = vmatpush.bf16.msra.mxu0 0
      %2288 = vmatpush.bf16.msra.mxu0 0
      %2289 = vmatpush.bf16.msra.mxu0 %v2261
      %2290 = vmatmul.bf16.gmra.mxu0 %v2255
      %v2291 = vpop.f32.mrf.mxu0
      %v2292 = vadd.f32 0.0, %v2291
      %v2293 = vpop.f32.mrf.mxu0
      %2294 = vdwg.mxu0
      %2295 = vmatpush.bf16.msra.mxu0 0
      %2296 = vmatpush.bf16.msra.mxu0 0
      %2297 = vmatpush.bf16.msra.mxu0 0
      %2298 = vmatpush.bf16.msra.mxu0 0
      %2299 = vmatpush.bf16.msra.mxu0 0
      %2300 = vmatpush.bf16.msra.mxu0 0
      %2301 = vmatpush.bf16.msra.mxu0 0
      %2302 = vmatpush.bf16.msra.mxu0 %v2264
      %2303 = vmatmul.bf16.gmra.mxu0 %v2255
      %v2304 = vpop.f32.mrf.mxu0
      %v2305 = vadd.f32 0.0, %v2304
      %v2306 = vpop.f32.mrf.mxu0
      %2307 = vdwg.mxu0
      %2308 = vmatpush.bf16.msra.mxu0 0
      %2309 = vmatpush.bf16.msra.mxu0 0
      %2310 = vmatpush.bf16.msra.mxu0 0
      %2311 = vmatpush.bf16.msra.mxu0 0
      %2312 = vmatpush.bf16.msra.mxu0 0
      %2313 = vmatpush.bf16.msra.mxu0 0
      %2314 = vmatpush.bf16.msra.mxu0 0
      %2315 = vmatpush.bf16.msra.mxu0 %v2267
      %2316 = vmatmul.bf16.gmra.mxu0 %v2255
      %v2317 = vpop.f32.mrf.mxu0
      %v2318 = vadd.f32 0.0, %v2317
      %v2319 = vpop.f32.mrf.mxu0
      %2320 = vdwg.mxu0
      %v2321 = vadd.f32 %v2216, %v2279
      %v2322 = vadd.f32 %v2217, %v2292
      %v2323 = vadd.f32 %v2218, %v2305
      %v2324 = vadd.f32 %v2219, %v2318
      %2325 = vrot.lane.b32.xlu0 %v1473, 103
      %v2326 = vpop.permute.xlu0 %2325
      %2327 = vrot.lane.b32.xlu0 %v1482, 103
      %v2328 = vpop.permute.xlu0 %2327
      %2329 = vrot.lane.b32.xlu0 %v1491, 103
      %v2330 = vpop.permute.xlu0 %2329
      %2331 = vrot.lane.b32.xlu0 %v1507, 103
      %v2332 = vpop.permute.xlu0 %2331
      %vm2333 = vcmp.lt.s32.totalorder %v374, 103
      %v2334 = vsel %vm2333, %v2330, %v2332
      %v2335 = vsel %vm2333, %v2328, %v2330
      %v2336 = vsel %vm2333, %v2326, %v2328
      %v2337 = vsel %vm2333, %v2332, %v2326
      %s2338 = scalar_lea.vmem %s7, 32
      %v2339 = vld [vmem:[%s2338] ss:$8 sm:$0xf]
      %v2341 = vperm.slane %v2339, 0
      %v2342 = vperm.slane %v2339, 1
      %v2343 = vperm.slane %v2339, 2
      %v2344 = vperm.slane %v2339, 3
      %v2349 = vmul.f32 %v2336, %v2341
      %v2350 = vmul.f32 %v2335, %v2342
      %v2351 = vmul.f32 %v2334, %v2343
      %v2352 = vmul.f32 %v2337, %v2344
      %v2353 = vpack.c.bf16 %v2349, %v2349
      %v2354 = vpack.c.bf16 %v2350, %v2350
      %v2355 = vpack.c.bf16 %v2351, %v2351
      %v2356 = vpack.c.bf16 %v2352, %v2352
      %s2357 = scalar_lea.vmem %s5, 16
      %v2358 = vld [vmem:[%s2357] sm:$0x3]
      %v2360 = vsel %vm1574, %v2358, 0
      %v2363 = vsel %vm1578, %v2353, 0
      %v2366 = vsel %vm1578, %v2354, 0
      %v2369 = vsel %vm1578, %v2355, 0
      %v2372 = vsel %vm1578, %v2356, 0
      %2374 = vmatpush.bf16.msra.mxu0 0
      %2375 = vmatpush.bf16.msra.mxu0 0
      %2376 = vmatpush.bf16.msra.mxu0 0
      %2377 = vmatpush.bf16.msra.mxu0 0
      %2378 = vmatpush.bf16.msra.mxu0 0
      %2379 = vmatpush.bf16.msra.mxu0 0
      %2380 = vmatpush.bf16.msra.mxu0 0
      %2381 = vmatpush.bf16.msra.mxu0 %v2363
      %2382 = vmatmul.bf16.gmra.mxu0 %v2360
      %v2383 = vpop.f32.mrf.mxu0
      %v2384 = vadd.f32 0.0, %v2383
      %v2385 = vpop.f32.mrf.mxu0
      %2386 = vdwg.mxu0
      %2387 = vmatpush.bf16.msra.mxu0 0
      %2388 = vmatpush.bf16.msra.mxu0 0
      %2389 = vmatpush.bf16.msra.mxu0 0
      %2390 = vmatpush.bf16.msra.mxu0 0
      %2391 = vmatpush.bf16.msra.mxu0 0
      %2392 = vmatpush.bf16.msra.mxu0 0
      %2393 = vmatpush.bf16.msra.mxu0 0
      %2394 = vmatpush.bf16.msra.mxu0 %v2366
      %2395 = vmatmul.bf16.gmra.mxu0 %v2360
      %v2396 = vpop.f32.mrf.mxu0
      %v2397 = vadd.f32 0.0, %v2396
      %v2398 = vpop.f32.mrf.mxu0
      %2399 = vdwg.mxu0
      %2400 = vmatpush.bf16.msra.mxu0 0
      %2401 = vmatpush.bf16.msra.mxu0 0
      %2402 = vmatpush.bf16.msra.mxu0 0
      %2403 = vmatpush.bf16.msra.mxu0 0
      %2404 = vmatpush.bf16.msra.mxu0 0
      %2405 = vmatpush.bf16.msra.mxu0 0
      %2406 = vmatpush.bf16.msra.mxu0 0
      %2407 = vmatpush.bf16.msra.mxu0 %v2369
      %2408 = vmatmul.bf16.gmra.mxu0 %v2360
      %v2409 = vpop.f32.mrf.mxu0
      %v2410 = vadd.f32 0.0, %v2409
      %v2411 = vpop.f32.mrf.mxu0
      %2412 = vdwg.mxu0
      %2413 = vmatpush.bf16.msra.mxu0 0
      %2414 = vmatpush.bf16.msra.mxu0 0
      %2415 = vmatpush.bf16.msra.mxu0 0
      %2416 = vmatpush.bf16.msra.mxu0 0
      %2417 = vmatpush.bf16.msra.mxu0 0
      %2418 = vmatpush.bf16.msra.mxu0 0
      %2419 = vmatpush.bf16.msra.mxu0 0
      %2420 = vmatpush.bf16.msra.mxu0 %v2372
      %2421 = vmatmul.bf16.gmra.mxu0 %v2360
      %v2422 = vpop.f32.mrf.mxu0
      %v2423 = vadd.f32 0.0, %v2422
      %v2424 = vpop.f32.mrf.mxu0
      %2425 = vdwg.mxu0
      %v2426 = vadd.f32 %v2321, %v2384
      %v2427 = vadd.f32 %v2322, %v2397
      %v2428 = vadd.f32 %v2323, %v2410
      %v2429 = vadd.f32 %v2324, %v2423
      %2431 = vset.pattern.permute.xlu0 0
      %2432 = vperm.xlu0 %2431, %v364
      %v2433 = vpop.permute.xlu0 %2432
      %v2435 = vadd.f32 %v2426, %v2433
      %v2436 = vadd.f32 %v2427, %v2433
      %v2437 = vadd.f32 %v2428, %v2433
      %v2438 = vadd.f32 %v2429, %v2433
      %v2439 = vmax.f32 %v2435, 0.0
      %v2440 = vmax.f32 %v2436, 0.0
      %v2441 = vmax.f32 %v2437, 0.0
      %v2442 = vmax.f32 %v2438, 0.0
      %v2443 = vpack.c.bf16 %v2439, %v2439
      %v2444 = vpack.c.bf16 %v2440, %v2440
      %v2445 = vpack.c.bf16 %v2441, %v2441
      %v2446 = vpack.c.bf16 %v2442, %v2442
      %2448 = vset.pattern.permute.xlu0 0
      %2449 = vperm.xlu0 %2448, %v366
      %v2450 = vpop.permute.xlu0 %2449
      %v2453 = vsel %vm1574, %v365, 0
      %v2456 = vsel %vm1578, %v2443, 0
      %v2459 = vsel %vm1578, %v2444, 0
      %v2462 = vsel %vm1578, %v2445, 0
      %v2465 = vsel %vm1578, %v2446, 0
      %2467 = vmatpush.bf16.msra.mxu0 0
      %2468 = vmatpush.bf16.msra.mxu0 0
      %2469 = vmatpush.bf16.msra.mxu0 0
      %2470 = vmatpush.bf16.msra.mxu0 0
      %2471 = vmatpush.bf16.msra.mxu0 0
      %2472 = vmatpush.bf16.msra.mxu0 0
      %2473 = vmatpush.bf16.msra.mxu0 0
      %2474 = vmatpush.bf16.msra.mxu0 %v2456
      %2475 = vmatmul.bf16.gmra.mxu0 %v2453
      %v2476 = vpop.f32.mrf.mxu0
      %v2477 = vadd.f32 %v2450, %v2476
      %v2478 = vpop.f32.mrf.mxu0
      %2479 = vdwg.mxu0
      %2480 = vmatpush.bf16.msra.mxu0 0
      %2481 = vmatpush.bf16.msra.mxu0 0
      %2482 = vmatpush.bf16.msra.mxu0 0
      %2483 = vmatpush.bf16.msra.mxu0 0
      %2484 = vmatpush.bf16.msra.mxu0 0
      %2485 = vmatpush.bf16.msra.mxu0 0
      %2486 = vmatpush.bf16.msra.mxu0 0
      %2487 = vmatpush.bf16.msra.mxu0 %v2459
      %2488 = vmatmul.bf16.gmra.mxu0 %v2453
      %v2489 = vpop.f32.mrf.mxu0
      %v2490 = vadd.f32 %v2450, %v2489
      %v2491 = vpop.f32.mrf.mxu0
      %2492 = vdwg.mxu0
      %2493 = vmatpush.bf16.msra.mxu0 0
      %2494 = vmatpush.bf16.msra.mxu0 0
      %2495 = vmatpush.bf16.msra.mxu0 0
      %2496 = vmatpush.bf16.msra.mxu0 0
      %2497 = vmatpush.bf16.msra.mxu0 0
      %2498 = vmatpush.bf16.msra.mxu0 0
      %2499 = vmatpush.bf16.msra.mxu0 0
      %2500 = vmatpush.bf16.msra.mxu0 %v2462
      %2501 = vmatmul.bf16.gmra.mxu0 %v2453
      %v2502 = vpop.f32.mrf.mxu0
      %v2503 = vadd.f32 %v2450, %v2502
      %v2504 = vpop.f32.mrf.mxu0
      %2505 = vdwg.mxu0
      %2506 = vmatpush.bf16.msra.mxu0 0
      %2507 = vmatpush.bf16.msra.mxu0 0
      %2508 = vmatpush.bf16.msra.mxu0 0
      %2509 = vmatpush.bf16.msra.mxu0 0
      %2510 = vmatpush.bf16.msra.mxu0 0
      %2511 = vmatpush.bf16.msra.mxu0 0
      %2512 = vmatpush.bf16.msra.mxu0 0
      %2513 = vmatpush.bf16.msra.mxu0 %v2465
      %2514 = vmatmul.bf16.gmra.mxu0 %v2453
      %v2515 = vpop.f32.mrf.mxu0
      %v2516 = vadd.f32 %v2450, %v2515
      %v2517 = vpop.f32.mrf.mxu0
      %2518 = vdwg.mxu0
      %2519 = vst [vmem:[%s359] sm:$0xff] %v2477
      %2520 = vst [vmem:[%s359 + $0x8] sm:$0xff] %v2490
      %2521 = vst [vmem:[%s359 + $0x10] sm:$0xff] %v2503
      %2522 = vst [vmem:[%s359 + $0x18] sm:$0xff] %v2516
      %p2523 = scmp.lt.s32.totalorder %s21, 1
      %s2524 = scalar_select %p2523, %s21, 1
      %s2525 = smul.addr %s2524, 4
      %s2526 = smul.addr %s2525, 8
      %s2527 = scalar_lea.vmem %s10, %s2526
      // Predicated region
      $region61: #{dpt_regression_processor_forward.1} parent=59 // pred_check
        %p2528 = pneg %p254
      $region62: #{dpt_regression_processor_forward.1} parent=59 // pred_check_branch
        %2530 = sbr.rel (%p2528) target = $region64
      $region63: #{dpt_regression_processor_forward.1} parent=59 // pred_region
        _
      $region64: #{dpt_regression_processor_forward.1} parent=59 // pred_fallthru
        _
    $region60: #{dpt_regression_processor_forward.1} parent=5 // pred_fallthru
      _
    %p2531 = scmp.le.s32.totalorder 2, %s16
    // Predicated region
    $region65: #{dpt_regression_processor_forward.1} parent=5 // pred_check
      %p2532 = pneg %p2531
    $region66: #{dpt_regression_processor_forward.1} parent=5 // pred_check_branch
      %2534 = sbr.rel (%p2532) target = $region68
    $region67: #{dpt_regression_processor_forward.1} parent=5 // pred_region
      %s2535 = ssub.s32 %s16, 2
      // Predicated region
      $region69: #{dpt_regression_processor_forward.1} parent=67 // pred_check
        %p2536 = pneg %p260
      $region70: #{dpt_regression_processor_forward.1} parent=67 // pred_check_branch
        %2538 = sbr.rel (%p2536) target = $region72
      $region71: #{dpt_regression_processor_forward.1} parent=67 // pred_region
        %p2539 = scmp.lt.s32.totalorder %s22, 1
        %s2540 = scalar_select %p2539, %s22, 1
        %s2541 = smul.addr %s2540, 4
        %s2542 = smul.addr %s2541, 8
        %s2543 = scalar_lea.vmem %s10, %s2542
      $region72: #{dpt_regression_processor_forward.1} parent=67 // pred_fallthru
        _
    $region68: #{dpt_regression_processor_forward.1} parent=5 // pred_fallthru
      _
  $region6: #{dpt_regression_processor_forward.1} parent=0 // loop_footer
    %s20 = sadd.s32 1, %s16
  $region7: #{dpt_regression_processor_forward.1} parent=0 // loop_footer_branch
    %15 = sbr.rel target = $region3
  $region8: #{dpt_regression_processor_forward.1} parent=0 // loop_exit
    _

</llo_original>
